<compile_context>
chip_gen: v7x
topology: tpu7x:2x2x1
jax: 0.10.0
libtpu: 0.0.40
codegen_flags: <defaults>
</compile_context>

<pallas_src>
import functools

import jax
import jax.numpy as jnp
from jax.experimental import pallas as pl
from jax.experimental.pallas import tpu as pltpu


# ----------------------------------------------------------------------------
# helpers
# ----------------------------------------------------------------------------
def _round_up(x, m):
    return (x + m - 1) // m * m


def _pad_gates_last(a, H, Hp):
    """Pad last axis from 3*H to 3*Hp, gate by gate (r, z, n order)."""
    if H == Hp:
        return a
    pad = [(0, 0)] * (a.ndim - 1) + [(0, Hp - H)]
    parts = [jnp.pad(a[..., g * H:(g + 1) * H], pad) for g in range(3)]
    return jnp.concatenate(parts, axis=-1)


def _vmem_budget():
    """(vmem_limit_bytes, per-call working-set budget) for the running chip."""
    try:
        phys = int(pltpu.get_tpu_info().vmem_capacity_bytes)
    except Exception:                       # be safe on any backend/version
        phys = 64 * 1024 * 1024             # v7x-safe fallback (64 MiB / TC)
    limit = min(phys * 3 // 4, 112 * 1024 * 1024)
    budget = limit * 7 // 10                # headroom for compiler scratch
    return int(limit), int(budget)


def _pick_time_chunk(S, B_blk, Ep, Hp, store_bytes, budget_bytes):
    """Largest time chunk whose pipelined slabs fit the VMEM budget."""
    per_t = 2 * B_blk * Ep * store_bytes          # x slab   (double-buffered)
    per_t += 2 * B_blk * Hp * store_bytes         # out slab (double-buffered)
    fixed = Ep * 3 * Hp * store_bytes             # W_ih^T   (single-buffered)
    fixed += Hp * 3 * Hp * store_bytes            # W_hh^T   (single-buffered)
    fixed += (3 * Hp + Hp) * 4 * 2                # biases (f32, tiny)
    fixed += B_blk * Hp * 4                       # carried h scratch (f32)
    fixed += 4 * B_blk * 3 * Hp * 4               # f32 gate temporaries
    avail = budget_bytes - fixed
    if avail <= per_t:
        return 1
    return int(max(1, min(S, 64, avail // per_t)))


# ----------------------------------------------------------------------------
# Pallas kernel: one GRU layer, fused input projection + recurrence over a
# chunk of T time steps.  PyTorch gate order (r, z, n):
#   gi = x W_ih^T + (b_ih + b_hh[r,z])            (computed per step, MXU)
#   r  = sigmoid(gi_r + h W_hr^T)
#   z  = sigmoid(gi_z + h W_hz^T)
#   n  = tanh  (gi_n + r * (h W_hn^T + b_hn))
#   h' = (1 - z) * n + z * h
# Storage (x, W, out) may be bf16; all gate math and the carried h are f32.
# ----------------------------------------------------------------------------
def _gru_kernel(x_ref, wih_ref, whh_ref, bfold_ref, bhn_ref, out_ref, h_scr,
                *, unroll):
    T, Bb, _ = x_ref.shape
    Hp = h_scr.shape[-1]

    @pl.when(pl.program_id(1) == 0)          # first time-chunk of this batch
    def _():
        h_scr[...] = jnp.zeros_like(h_scr)

    w_ih = wih_ref[...]
    w_hh = whh_ref[...]
    # Hoisted broadcasts (JAX does not CSE broadcast_in_dim inside the loop).
    b_fold = jnp.broadcast_to(bfold_ref[...], (Bb, 3 * Hp))
    b_hn = jnp.broadcast_to(bhn_ref[...], (Bb, Hp))

    def sigmoid(v):                          # exact, single EUP op (tanh)
        return 0.5 * jnp.tanh(0.5 * v) + 0.5

    def step(i, h):
        # Fused input projection: (Bb, Ep) @ (Ep, 3Hp) on the MXU, f32 accum.
        gi = jnp.dot(x_ref[i], w_ih,
                     preferred_element_type=jnp.float32) + b_fold
        gh = jnp.dot(h.astype(w_hh.dtype), w_hh,
                     preferred_element_type=jnp.float32)
        # Gate slices are 128-lane aligned (Hp % 128 == 0): pure VPU.
        r = sigmoid(gi[:, 0:Hp] + gh[:, 0:Hp])
        z = sigmoid(gi[:, Hp:2 * Hp] + gh[:, Hp:2 * Hp])
        n = jnp.tanh(gi[:, 2 * Hp:] + r * (gh[:, 2 * Hp:] + b_hn))
        h_new = (1.0 - z) * n + z * h
        out_ref[i] = h_new.astype(out_ref.dtype)
        return h_new

    h_scr[...] = jax.lax.fori_loop(0, T, step, h_scr[...], unroll=unroll)


# ----------------------------------------------------------------------------
# One GRU layer on pre-padded, time-major input.
#   x_p: (S, Bp, Ep_in)  with Bp % 8 == 0, Ep_in % 128 == 0, padded entries 0.
#   returns (S, Bp, Hp)  with padded lanes exactly 0 (fed to the next layer
#   without stripping — only sliced once at the very end).
# ----------------------------------------------------------------------------
def _gru_layer(x_p, w_ih_t, w_hh_t, b_ih, b_hh, *, storage_dtype=jnp.bfloat16):
    S, Bp, Ep = x_p.shape
    H = w_hh_t.shape[0]
    Hp = _round_up(H, 128)

    # -- pad weights/biases gate-by-gate (tiny, instead of padding gi in HBM) --
    wih_p = jnp.pad(_pad_gates_last(w_ih_t, H, Hp),
                    ((0, Ep - w_ih_t.shape[0]), (0, 0))).astype(storage_dtype)
    whh_p = jnp.pad(_pad_gates_last(w_hh_t, H, Hp),
                    ((0, Hp - H), (0, 0))).astype(storage_dtype)
    # Fold b_ih fully plus the r/z parts of b_hh; only b_hn stays inside r*(.)
    b_fold = b_ih + jnp.concatenate(
        [b_hh[:, :2 * H], jnp.zeros_like(b_hh[:, 2 * H:])], axis=-1)
    bfold_p = _pad_gates_last(b_fold, H, Hp).astype(jnp.float32)      # (1,3Hp)
    bhn_p = jnp.pad(b_hh[:, 2 * H:],
                    ((0, 0), (0, Hp - H))).astype(jnp.float32)        # (1, Hp)

    # -- batch split across TensorCores (v7x has 2; harmless elsewhere).
    #    bf16 sublane packing wants >=16 rows per block, so only split when
    #    Bp % 32 == 0. --
    nb = 2 if (Bp >= 32 and Bp % 32 == 0) else 1
    Bb = Bp // nb

    # -- VMEM-budgeted time chunk + explicit scoped-VMEM limit --
    store_bytes = jnp.dtype(storage_dtype).itemsize
    vmem_limit, budget = _vmem_budget()
    T = _pick_time_chunk(S, Bb, Ep, Hp, store_bytes, budget)
    Sp = _round_up(S, T)
    if Sp != S:                       # zero time-tail; sliced off below
        x_p = jnp.pad(x_p, ((0, Sp - S), (0, 0), (0, 0)))
    nt = Sp // T

    # Cap unroll so live (Bb, Hp) temporaries stay inside the 64-vreg file.
    tiles = (Bb // 8) * (Hp // 128)
    unroll = min(T, 8) if tiles <= 4 else 2

    kernel = functools.partial(_gru_kernel, unroll=unroll)

    out_p = pl.pallas_call(
        kernel,
        out_shape=jax.ShapeDtypeStruct((Sp, Bp, Hp), storage_dtype),
        grid_spec=pltpu.PrefetchScalarGridSpec(
            num_scalar_prefetch=0,
            grid=(nb, nt),
            in_specs=[
                # x chunk: (T, Bb, Ep), indexed by (time, batch-block)
                pl.BlockSpec((T, Bb, Ep), lambda b, t: (t, b, 0)),
                # time-invariant weights: single-buffered (constant index_map)
                pl.BlockSpec((Ep, 3 * Hp), lambda b, t: (0, 0),
                             pipeline_mode=pl.Buffered(1)),
                pl.BlockSpec((Hp, 3 * Hp), lambda b, t: (0, 0),
                             pipeline_mode=pl.Buffered(1)),
                pl.BlockSpec((1, 3 * Hp), lambda b, t: (0, 0)),
                pl.BlockSpec((1, Hp), lambda b, t: (0, 0)),
            ],
            out_specs=pl.BlockSpec((T, Bb, Hp), lambda b, t: (t, b, 0)),
            scratch_shapes=[pltpu.VMEM((Bb, Hp), jnp.float32)],   # carried h
        ),
        compiler_params=pltpu.CompilerParams(
            dimension_semantics=("parallel", "arbitrary"),  # batch ∥, time seq
            vmem_limit_bytes=vmem_limit),
    )(x_p.astype(storage_dtype), wih_p, whh_p, bfold_p, bhn_p)

    return out_p[:S]                                   # drop time padding only


# ----------------------------------------------------------------------------
# Encoder forward (Embedding + multi-layer GRU); glue in plain JAX.
# ----------------------------------------------------------------------------
@functools.partial(jax.jit, static_argnames=("storage_dtype",))
def encoder_forward(tokens, params, storage_dtype=jnp.bfloat16):
    # tokens: (batch, seq) int32
    emb = jnp.take(params["embedding"], tokens, axis=0)        # (B, S, E)
    x = jnp.transpose(emb, (1, 0, 2)).astype(jnp.float32)      # (S, B, E)
    S, B, E = x.shape
    Bp = _round_up(B, 8)
    Ep = _round_up(E, 128)
    # Pad once; the padded (S, Bp, *) layout is carried across all layers.
    x_p = jnp.pad(x, ((0, 0), (0, Bp - B), (0, Ep - E)))

    states = []
    for (w_ih_t, w_hh_t, b_ih, b_hh) in params["gru"]:
        x_p = _gru_layer(x_p, w_ih_t, w_hh_t, b_ih, b_hh,
                         storage_dtype=storage_dtype)          # (S, Bp, Hp)
        states.append(x_p[-1, :B, :w_hh_t.shape[0]])           # layer h_n
    H = params["gru"][-1][1].shape[0]
    output = x_p[:, :B, :H].astype(jnp.float32)                # (S, B, H)
    state = jnp.stack(states, axis=0).astype(jnp.float32)      # (L, B, H)
    return output, state


def init_params(key, vocab_size, embed_size, num_hiddens, num_layers):
    ks = jax.random.split(key, 1 + 4 * num_layers)
    scale = 0.1
    params = {
        "embedding": jax.random.uniform(
            ks[0], (vocab_size, embed_size), jnp.float32, -scale, scale),
        "gru": [],
    }
    in_size = embed_size
    for l in range(num_layers):
        k0, k1, k2, k3 = ks[1 + 4 * l: 5 + 4 * l]
        w_ih = jax.random.uniform(k0, (3 * num_hiddens, in_size),
                                  jnp.float32, -scale, scale)
        w_hh = jax.random.uniform(k1, (3 * num_hiddens, num_hiddens),
                                  jnp.float32, -scale, scale)
        b_ih = jax.random.uniform(k2, (1, 3 * num_hiddens),
                                  jnp.float32, -scale, scale)
        b_hh = jax.random.uniform(k3, (1, 3 * num_hiddens),
                                  jnp.float32, -scale, scale)
        # Pre-transpose weights so matmuls are x @ W^T as x @ w_t.
        params["gru"].append((w_ih.T, w_hh.T, b_ih, b_hh))
        in_size = num_hiddens
    return params


# Pure-JAX reference (same math, lax.scan, unfused biases) for correctness.
def _reference_forward(tokens, params):
    emb = jnp.take(params["embedding"], tokens, axis=0)
    x = jnp.transpose(emb, (1, 0, 2)).astype(jnp.float32)
    states = []
    for (w_ih_t, w_hh_t, b_ih, b_hh) in params["gru"]:
        H = w_hh_t.shape[0]
        B = x.shape[1]

        def step(h, x_t):
            gi = x_t @ w_ih_t + b_ih
            gh = h @ w_hh_t + b_hh
            r = jax.nn.sigmoid(gi[:, :H] + gh[:, :H])
            z = jax.nn.sigmoid(gi[:, H:2 * H] + gh[:, H:2 * H])
            n = jnp.tanh(gi[:, 2 * H:] + r * gh[:, 2 * H:])
            h_new = (1.0 - z) * n + z * h
            return h_new, h_new

        h0 = jnp.zeros((B, H), jnp.float32)
        h_n, out = jax.lax.scan(step, h0, x)
        states.append(h_n)
        x = out
    return x, jnp.stack(states, axis=0)


if __name__ == "__main__":
    vocab_size, embed_size, num_hiddens, num_layers = 32, 16, 32, 2
    batch, seq = 4, 8

    key = jax.random.PRNGKey(0)
    pkey, dkey = jax.random.split(key)
    params = init_params(pkey, vocab_size, embed_size, num_hiddens, num_layers)
    tokens = jax.random.randint(dkey, (batch, seq), 0, vocab_size, jnp.int32)

    ref_out, ref_state = _reference_forward(tokens, params)

    # f32 storage path: strict check.
    out32, st32 = encoder_forward(tokens, params, storage_dtype=jnp.float32)
    out32 = jax.block_until_ready(out32)
    st32 = jax.block_until_ready(st32)
    assert out32.shape == (seq, batch, num_hiddens)
    assert st32.shape == (num_layers, batch, num_hiddens)
    assert jnp.allclose(out32, ref_out, atol=1e-4, rtol=1e-4), (
        float(jnp.max(jnp.abs(out32 - ref_out))))
    assert jnp.allclose(st32, ref_state, atol=1e-4, rtol=1e-4), (
        float(jnp.max(jnp.abs(st32 - ref_state))))

    # bf16 storage path (the HBM/VMEM-optimized default): loosened tolerance.
    out16, st16 = encoder_forward(tokens, params, storage_dtype=jnp.bfloat16)
    out16 = jax.block_until_ready(out16)
    st16 = jax.block_until_ready(st16)
    assert out16.shape == (seq, batch, num_hiddens)
    assert st16.shape == (num_layers, batch, num_hiddens)
    assert jnp.allclose(out16, ref_out, atol=2e-2, rtol=2e-2), (
        float(jnp.max(jnp.abs(out16 - ref_out))))
    assert jnp.allclose(st16, ref_state, atol=2e-2, rtol=2e-2), (
        float(jnp.max(jnp.abs(st16 - ref_state))))

    print("KERNEL_OK")
</pallas_src>

<mosaic_0001>
module attributes {stable_mosaic.version = 11 : i64} {
  func.func @_gru_kernel(%arg0: i32, %arg1: i32, %arg2: memref<8x8x128xf32, #tpu.memory_space<vmem>>, %arg3: memref<128x384xf32, #tpu.memory_space<vmem>>, %arg4: memref<128x384xf32, #tpu.memory_space<vmem>>, %arg5: memref<1x384xf32, #tpu.memory_space<vmem>>, %arg6: memref<1x128xf32, #tpu.memory_space<vmem>>, %arg7: memref<8x8x128xf32, #tpu.memory_space<vmem>>, %arg8: memref<8x128xf32, #tpu.memory_space<vmem>>) attributes {dimension_semantics = [#tpu.dimension_semantics<parallel>, #tpu.dimension_semantics<arbitrary>], iteration_bounds = array<i64: 1, 1>, scalar_prefetch = 0 : i64, scratch_operands = 1 : i64, tpu.core_type = #tpu.core_type<tc>, window_params = [{transform_indices = @transform_0, window_bounds = array<i64: 8, 8, 128>}, {pipeline_mode = #tpu.pipeline_mode<synchronous>, transform_indices = @transform_1, window_bounds = array<i64: 128, 384>}, {pipeline_mode = #tpu.pipeline_mode<synchronous>, transform_indices = @transform_2, window_bounds = array<i64: 128, 384>}, {pipeline_mode = #tpu.pipeline_mode<synchronous>, transform_indices = @transform_3, window_bounds = array<i64: 1, 384>}, {pipeline_mode = #tpu.pipeline_mode<synchronous>, transform_indices = @transform_4, window_bounds = array<i64: 1, 128>}, {transform_indices = @transform_5, window_bounds = array<i64: 8, 8, 128>}]} {
    %c0_i32 = arith.constant 0 : i32
    %0 = arith.cmpi eq, %arg1, %c0_i32 : i32
    %1 = arith.extui %0 : i1 to i32
    %c0_i32_0 = arith.constant 0 : i32
    %2 = arith.cmpi ne, %1, %c0_i32_0 : i32
    scf.if %2 {
      %cst_116 = arith.constant 0.000000e+00 : f32
      %341 = vector.broadcast %cst_116 : f32 to vector<8x128xf32>
      %c0_117 = arith.constant 0 : index
      %c0_118 = arith.constant 0 : index
      %342 = vector.load %arg8[%c0_117, %c0_118] : memref<8x128xf32, #tpu.memory_space<vmem>>, vector<8x128xf32>
      tpu.vector_store %arg8[%c0_117, %c0_118], %341 {strides = array<i32>} : memref<8x128xf32, #tpu.memory_space<vmem>>, vector<8x128xf32>,
    } else {
    }
    %c0 = arith.constant 0 : index
    %c0_1 = arith.constant 0 : index
    %3 = vector.load %arg3[%c0, %c0_1] : memref<128x384xf32, #tpu.memory_space<vmem>>, vector<128x384xf32>
    %c0_2 = arith.constant 0 : index
    %c0_3 = arith.constant 0 : index
    %4 = vector.load %arg4[%c0_2, %c0_3] : memref<128x384xf32, #tpu.memory_space<vmem>>, vector<128x384xf32>
    %c0_4 = arith.constant 0 : index
    %c0_5 = arith.constant 0 : index
    %5 = vector.load %arg5[%c0_4, %c0_5] : memref<1x384xf32, #tpu.memory_space<vmem>>, vector<1x384xf32>
    %6 = vector.shape_cast %5 : vector<1x384xf32> to vector<1x384xf32>
    %7 = vector.broadcast %6 : vector<1x384xf32> to vector<8x384xf32>
    %c0_6 = arith.constant 0 : index
    %c0_7 = arith.constant 0 : index
    %8 = vector.load %arg6[%c0_6, %c0_7] : memref<1x128xf32, #tpu.memory_space<vmem>>, vector<1x128xf32>
    %9 = vector.shape_cast %8 : vector<1x128xf32> to vector<1x128xf32>
    %10 = vector.broadcast %9 : vector<1x128xf32> to vector<8x128xf32>
    %c0_8 = arith.constant 0 : index
    %c0_9 = arith.constant 0 : index
    %11 = vector.load %arg8[%c0_8, %c0_9] : memref<8x128xf32, #tpu.memory_space<vmem>>, vector<8x128xf32>
    %c0_i32_10 = arith.constant 0 : i32
    %12 = arith.index_cast %c0_i32_10 : i32 to index
    %c0_11 = arith.constant 0 : index
    %c0_12 = arith.constant 0 : index
    %13 = vector.load %arg2[%12, %c0_11, %c0_12] : memref<8x8x128xf32, #tpu.memory_space<vmem>>, vector<1x8x128xf32>
    %14 = vector.shape_cast %13 : vector<1x8x128xf32> to vector<8x128xf32>
    %cst = arith.constant dense<0.000000e+00> : vector<8x384xf32>
    %15 = tpu.matmul %14, %3, %cst {dimension_numbers = #tpu.dot_dimension_numbers<[1], [0], [0], [1], [0, 0, 1, 1], [], []>} : vector<8x128xf32>, vector<128x384xf32>, vector<8x384xf32> -> vector<8x384xf32>
    %16 = arith.addf %15, %7 : vector<8x384xf32>
    %cst_13 = arith.constant dense<0.000000e+00> : vector<8x384xf32>
    %17 = tpu.matmul %11, %4, %cst_13 {dimension_numbers = #tpu.dot_dimension_numbers<[1], [0], [0], [1], [0, 0, 1, 1], [], []>} : vector<8x128xf32>, vector<128x384xf32>, vector<8x384xf32> -> vector<8x384xf32>
    %18 = vector.extract_strided_slice %16 {offsets = [0, 0], sizes = [8, 128], strides = [1, 1]} : vector<8x384xf32> to vector<8x128xf32>
    %19 = vector.extract_strided_slice %17 {offsets = [0, 0], sizes = [8, 128], strides = [1, 1]} : vector<8x384xf32> to vector<8x128xf32>
    %20 = arith.addf %18, %19 : vector<8x128xf32>
    %cst_14 = arith.constant 5.000000e-01 : f32
    %21 = vector.broadcast %cst_14 : f32 to vector<8x128xf32>
    %22 = arith.mulf %21, %20 : vector<8x128xf32>
    %23 = math.tanh %22 : vector<8x128xf32>
    %cst_15 = arith.constant 5.000000e-01 : f32
    %24 = vector.broadcast %cst_15 : f32 to vector<8x128xf32>
    %25 = arith.mulf %24, %23 : vector<8x128xf32>
    %cst_16 = arith.constant 5.000000e-01 : f32
    %26 = vector.broadcast %cst_16 : f32 to vector<8x128xf32>
    %27 = arith.addf %25, %26 : vector<8x128xf32>
    %28 = vector.extract_strided_slice %16 {offsets = [0, 128], sizes = [8, 128], strides = [1, 1]} : vector<8x384xf32> to vector<8x128xf32>
    %29 = vector.extract_strided_slice %17 {offsets = [0, 128], sizes = [8, 128], strides = [1, 1]} : vector<8x384xf32> to vector<8x128xf32>
    %30 = arith.addf %28, %29 : vector<8x128xf32>
    %cst_17 = arith.constant 5.000000e-01 : f32
    %31 = vector.broadcast %cst_17 : f32 to vector<8x128xf32>
    %32 = arith.mulf %31, %30 : vector<8x128xf32>
    %33 = math.tanh %32 : vector<8x128xf32>
    %cst_18 = arith.constant 5.000000e-01 : f32
    %34 = vector.broadcast %cst_18 : f32 to vector<8x128xf32>
    %35 = arith.mulf %34, %33 : vector<8x128xf32>
    %cst_19 = arith.constant 5.000000e-01 : f32
    %36 = vector.broadcast %cst_19 : f32 to vector<8x128xf32>
    %37 = arith.addf %35, %36 : vector<8x128xf32>
    %38 = vector.extract_strided_slice %16 {offsets = [0, 256], sizes = [8, 128], strides = [1, 1]} : vector<8x384xf32> to vector<8x128xf32>
    %39 = vector.extract_strided_slice %17 {offsets = [0, 256], sizes = [8, 128], strides = [1, 1]} : vector<8x384xf32> to vector<8x128xf32>
    %40 = arith.addf %39, %10 : vector<8x128xf32>
    %41 = arith.mulf %27, %40 : vector<8x128xf32>
    %42 = arith.addf %38, %41 : vector<8x128xf32>
    %43 = math.tanh %42 : vector<8x128xf32>
    %cst_20 = arith.constant 1.000000e+00 : f32
    %44 = vector.broadcast %cst_20 : f32 to vector<8x128xf32>
    %45 = arith.subf %44, %37 : vector<8x128xf32>
    %46 = arith.mulf %45, %43 : vector<8x128xf32>
    %47 = arith.mulf %37, %11 : vector<8x128xf32>
    %48 = arith.addf %46, %47 : vector<8x128xf32>
    %49 = arith.index_cast %c0_i32_10 : i32 to index
    %c0_21 = arith.constant 0 : index
    %c0_22 = arith.constant 0 : index
    %50 = vector.load %arg7[%49, %c0_21, %c0_22] : memref<8x8x128xf32, #tpu.memory_space<vmem>>, vector<1x8x128xf32>
    %51 = vector.shape_cast %50 : vector<1x8x128xf32> to vector<8x128xf32>
    %52 = vector.shape_cast %48 : vector<8x128xf32> to vector<1x8x128xf32>
    tpu.vector_store %arg7[%49, %c0_21, %c0_22], %52 {strides = array<i32>} : memref<8x8x128xf32, #tpu.memory_space<vmem>>, vector<1x8x128xf32>,
    %c1_i32 = arith.constant 1 : i32
    %53 = arith.index_cast %c1_i32 : i32 to index
    %c0_23 = arith.constant 0 : index
    %c0_24 = arith.constant 0 : index
    %54 = vector.load %arg2[%53, %c0_23, %c0_24] : memref<8x8x128xf32, #tpu.memory_space<vmem>>, vector<1x8x128xf32>
    %55 = vector.shape_cast %54 : vector<1x8x128xf32> to vector<8x128xf32>
    %cst_25 = arith.constant dense<0.000000e+00> : vector<8x384xf32>
    %56 = tpu.matmul %55, %3, %cst_25 {dimension_numbers = #tpu.dot_dimension_numbers<[1], [0], [0], [1], [0, 0, 1, 1], [], []>} : vector<8x128xf32>, vector<128x384xf32>, vector<8x384xf32> -> vector<8x384xf32>
    %57 = arith.addf %56, %7 : vector<8x384xf32>
    %cst_26 = arith.constant dense<0.000000e+00> : vector<8x384xf32>
    %58 = tpu.matmul %48, %4, %cst_26 {dimension_numbers = #tpu.dot_dimension_numbers<[1], [0], [0], [1], [0, 0, 1, 1], [], []>} : vector<8x128xf32>, vector<128x384xf32>, vector<8x384xf32> -> vector<8x384xf32>
    %59 = vector.extract_strided_slice %57 {offsets = [0, 0], sizes = [8, 128], strides = [1, 1]} : vector<8x384xf32> to vector<8x128xf32>
    %60 = vector.extract_strided_slice %58 {offsets = [0, 0], sizes = [8, 128], strides = [1, 1]} : vector<8x384xf32> to vector<8x128xf32>
    %61 = arith.addf %59, %60 : vector<8x128xf32>
    %cst_27 = arith.constant 5.000000e-01 : f32
    %62 = vector.broadcast %cst_27 : f32 to vector<8x128xf32>
    %63 = arith.mulf %62, %61 : vector<8x128xf32>
    %64 = math.tanh %63 : vector<8x128xf32>
    %cst_28 = arith.constant 5.000000e-01 : f32
    %65 = vector.broadcast %cst_28 : f32 to vector<8x128xf32>
    %66 = arith.mulf %65, %64 : vector<8x128xf32>
    %cst_29 = arith.constant 5.000000e-01 : f32
    %67 = vector.broadcast %cst_29 : f32 to vector<8x128xf32>
    %68 = arith.addf %66, %67 : vector<8x128xf32>
    %69 = vector.extract_strided_slice %57 {offsets = [0, 128], sizes = [8, 128], strides = [1, 1]} : vector<8x384xf32> to vector<8x128xf32>
    %70 = vector.extract_strided_slice %58 {offsets = [0, 128], sizes = [8, 128], strides = [1, 1]} : vector<8x384xf32> to vector<8x128xf32>
    %71 = arith.addf %69, %70 : vector<8x128xf32>
    %cst_30 = arith.constant 5.000000e-01 : f32
    %72 = vector.broadcast %cst_30 : f32 to vector<8x128xf32>
    %73 = arith.mulf %72, %71 : vector<8x128xf32>
    %74 = math.tanh %73 : vector<8x128xf32>
    %cst_31 = arith.constant 5.000000e-01 : f32
    %75 = vector.broadcast %cst_31 : f32 to vector<8x128xf32>
    %76 = arith.mulf %75, %74 : vector<8x128xf32>
    %cst_32 = arith.constant 5.000000e-01 : f32
    %77 = vector.broadcast %cst_32 : f32 to vector<8x128xf32>
    %78 = arith.addf %76, %77 : vector<8x128xf32>
    %79 = vector.extract_strided_slice %57 {offsets = [0, 256], sizes = [8, 128], strides = [1, 1]} : vector<8x384xf32> to vector<8x128xf32>
    %80 = vector.extract_strided_slice %58 {offsets = [0, 256], sizes = [8, 128], strides = [1, 1]} : vector<8x384xf32> to vector<8x128xf32>
    %81 = arith.addf %80, %10 : vector<8x128xf32>
    %82 = arith.mulf %68, %81 : vector<8x128xf32>
    %83 = arith.addf %79, %82 : vector<8x128xf32>
    %84 = math.tanh %83 : vector<8x128xf32>
    %cst_33 = arith.constant 1.000000e+00 : f32
    %85 = vector.broadcast %cst_33 : f32 to vector<8x128xf32>
    %86 = arith.subf %85, %78 : vector<8x128xf32>
    %87 = arith.mulf %86, %84 : vector<8x128xf32>
    %88 = arith.mulf %78, %48 : vector<8x128xf32>
    %89 = arith.addf %87, %88 : vector<8x128xf32>
    %90 = arith.index_cast %c1_i32 : i32 to index
    %c0_34 = arith.constant 0 : index
    %c0_35 = arith.constant 0 : index
    %91 = vector.load %arg7[%90, %c0_34, %c0_35] : memref<8x8x128xf32, #tpu.memory_space<vmem>>, vector<1x8x128xf32>
    %92 = vector.shape_cast %91 : vector<1x8x128xf32> to vector<8x128xf32>
    %93 = vector.shape_cast %89 : vector<8x128xf32> to vector<1x8x128xf32>
    tpu.vector_store %arg7[%90, %c0_34, %c0_35], %93 {strides = array<i32>} : memref<8x8x128xf32, #tpu.memory_space<vmem>>, vector<1x8x128xf32>,
    %c2_i32 = arith.constant 2 : i32
    %94 = arith.index_cast %c2_i32 : i32 to index
    %c0_36 = arith.constant 0 : index
    %c0_37 = arith.constant 0 : index
    %95 = vector.load %arg2[%94, %c0_36, %c0_37] : memref<8x8x128xf32, #tpu.memory_space<vmem>>, vector<1x8x128xf32>
    %96 = vector.shape_cast %95 : vector<1x8x128xf32> to vector<8x128xf32>
    %cst_38 = arith.constant dense<0.000000e+00> : vector<8x384xf32>
    %97 = tpu.matmul %96, %3, %cst_38 {dimension_numbers = #tpu.dot_dimension_numbers<[1], [0], [0], [1], [0, 0, 1, 1], [], []>} : vector<8x128xf32>, vector<128x384xf32>, vector<8x384xf32> -> vector<8x384xf32>
    %98 = arith.addf %97, %7 : vector<8x384xf32>
    %cst_39 = arith.constant dense<0.000000e+00> : vector<8x384xf32>
    %99 = tpu.matmul %89, %4, %cst_39 {dimension_numbers = #tpu.dot_dimension_numbers<[1], [0], [0], [1], [0, 0, 1, 1], [], []>} : vector<8x128xf32>, vector<128x384xf32>, vector<8x384xf32> -> vector<8x384xf32>
    %100 = vector.extract_strided_slice %98 {offsets = [0, 0], sizes = [8, 128], strides = [1, 1]} : vector<8x384xf32> to vector<8x128xf32>
    %101 = vector.extract_strided_slice %99 {offsets = [0, 0], sizes = [8, 128], strides = [1, 1]} : vector<8x384xf32> to vector<8x128xf32>
    %102 = arith.addf %100, %101 : vector<8x128xf32>
    %cst_40 = arith.constant 5.000000e-01 : f32
    %103 = vector.broadcast %cst_40 : f32 to vector<8x128xf32>
    %104 = arith.mulf %103, %102 : vector<8x128xf32>
    %105 = math.tanh %104 : vector<8x128xf32>
    %cst_41 = arith.constant 5.000000e-01 : f32
    %106 = vector.broadcast %cst_41 : f32 to vector<8x128xf32>
    %107 = arith.mulf %106, %105 : vector<8x128xf32>
    %cst_42 = arith.constant 5.000000e-01 : f32
    %108 = vector.broadcast %cst_42 : f32 to vector<8x128xf32>
    %109 = arith.addf %107, %108 : vector<8x128xf32>
    %110 = vector.extract_strided_slice %98 {offsets = [0, 128], sizes = [8, 128], strides = [1, 1]} : vector<8x384xf32> to vector<8x128xf32>
    %111 = vector.extract_strided_slice %99 {offsets = [0, 128], sizes = [8, 128], strides = [1, 1]} : vector<8x384xf32> to vector<8x128xf32>
    %112 = arith.addf %110, %111 : vector<8x128xf32>
    %cst_43 = arith.constant 5.000000e-01 : f32
    %113 = vector.broadcast %cst_43 : f32 to vector<8x128xf32>
    %114 = arith.mulf %113, %112 : vector<8x128xf32>
    %115 = math.tanh %114 : vector<8x128xf32>
    %cst_44 = arith.constant 5.000000e-01 : f32
    %116 = vector.broadcast %cst_44 : f32 to vector<8x128xf32>
    %117 = arith.mulf %116, %115 : vector<8x128xf32>
    %cst_45 = arith.constant 5.000000e-01 : f32
    %118 = vector.broadcast %cst_45 : f32 to vector<8x128xf32>
    %119 = arith.addf %117, %118 : vector<8x128xf32>
    %120 = vector.extract_strided_slice %98 {offsets = [0, 256], sizes = [8, 128], strides = [1, 1]} : vector<8x384xf32> to vector<8x128xf32>
    %121 = vector.extract_strided_slice %99 {offsets = [0, 256], sizes = [8, 128], strides = [1, 1]} : vector<8x384xf32> to vector<8x128xf32>
    %122 = arith.addf %121, %10 : vector<8x128xf32>
    %123 = arith.mulf %109, %122 : vector<8x128xf32>
    %124 = arith.addf %120, %123 : vector<8x128xf32>
    %125 = math.tanh %124 : vector<8x128xf32>
    %cst_46 = arith.constant 1.000000e+00 : f32
    %126 = vector.broadcast %cst_46 : f32 to vector<8x128xf32>
    %127 = arith.subf %126, %119 : vector<8x128xf32>
    %128 = arith.mulf %127, %125 : vector<8x128xf32>
    %129 = arith.mulf %119, %89 : vector<8x128xf32>
    %130 = arith.addf %128, %129 : vector<8x128xf32>
    %131 = arith.index_cast %c2_i32 : i32 to index
    %c0_47 = arith.constant 0 : index
    %c0_48 = arith.constant 0 : index
    %132 = vector.load %arg7[%131, %c0_47, %c0_48] : memref<8x8x128xf32, #tpu.memory_space<vmem>>, vector<1x8x128xf32>
    %133 = vector.shape_cast %132 : vector<1x8x128xf32> to vector<8x128xf32>
    %134 = vector.shape_cast %130 : vector<8x128xf32> to vector<1x8x128xf32>
    tpu.vector_store %arg7[%131, %c0_47, %c0_48], %134 {strides = array<i32>} : memref<8x8x128xf32, #tpu.memory_space<vmem>>, vector<1x8x128xf32>,
    %c3_i32 = arith.constant 3 : i32
    %135 = arith.index_cast %c3_i32 : i32 to index
    %c0_49 = arith.constant 0 : index
    %c0_50 = arith.constant 0 : index
    %136 = vector.load %arg2[%135, %c0_49, %c0_50] : memref<8x8x128xf32, #tpu.memory_space<vmem>>, vector<1x8x128xf32>
    %137 = vector.shape_cast %136 : vector<1x8x128xf32> to vector<8x128xf32>
    %cst_51 = arith.constant dense<0.000000e+00> : vector<8x384xf32>
    %138 = tpu.matmul %137, %3, %cst_51 {dimension_numbers = #tpu.dot_dimension_numbers<[1], [0], [0], [1], [0, 0, 1, 1], [], []>} : vector<8x128xf32>, vector<128x384xf32>, vector<8x384xf32> -> vector<8x384xf32>
    %139 = arith.addf %138, %7 : vector<8x384xf32>
    %cst_52 = arith.constant dense<0.000000e+00> : vector<8x384xf32>
    %140 = tpu.matmul %130, %4, %cst_52 {dimension_numbers = #tpu.dot_dimension_numbers<[1], [0], [0], [1], [0, 0, 1, 1], [], []>} : vector<8x128xf32>, vector<128x384xf32>, vector<8x384xf32> -> vector<8x384xf32>
    %141 = vector.extract_strided_slice %139 {offsets = [0, 0], sizes = [8, 128], strides = [1, 1]} : vector<8x384xf32> to vector<8x128xf32>
    %142 = vector.extract_strided_slice %140 {offsets = [0, 0], sizes = [8, 128], strides = [1, 1]} : vector<8x384xf32> to vector<8x128xf32>
    %143 = arith.addf %141, %142 : vector<8x128xf32>
    %cst_53 = arith.constant 5.000000e-01 : f32
    %144 = vector.broadcast %cst_53 : f32 to vector<8x128xf32>
    %145 = arith.mulf %144, %143 : vector<8x128xf32>
    %146 = math.tanh %145 : vector<8x128xf32>
    %cst_54 = arith.constant 5.000000e-01 : f32
    %147 = vector.broadcast %cst_54 : f32 to vector<8x128xf32>
    %148 = arith.mulf %147, %146 : vector<8x128xf32>
    %cst_55 = arith.constant 5.000000e-01 : f32
    %149 = vector.broadcast %cst_55 : f32 to vector<8x128xf32>
    %150 = arith.addf %148, %149 : vector<8x128xf32>
    %151 = vector.extract_strided_slice %139 {offsets = [0, 128], sizes = [8, 128], strides = [1, 1]} : vector<8x384xf32> to vector<8x128xf32>
    %152 = vector.extract_strided_slice %140 {offsets = [0, 128], sizes = [8, 128], strides = [1, 1]} : vector<8x384xf32> to vector<8x128xf32>
    %153 = arith.addf %151, %152 : vector<8x128xf32>
    %cst_56 = arith.constant 5.000000e-01 : f32
    %154 = vector.broadcast %cst_56 : f32 to vector<8x128xf32>
    %155 = arith.mulf %154, %153 : vector<8x128xf32>
    %156 = math.tanh %155 : vector<8x128xf32>
    %cst_57 = arith.constant 5.000000e-01 : f32
    %157 = vector.broadcast %cst_57 : f32 to vector<8x128xf32>
    %158 = arith.mulf %157, %156 : vector<8x128xf32>
    %cst_58 = arith.constant 5.000000e-01 : f32
    %159 = vector.broadcast %cst_58 : f32 to vector<8x128xf32>
    %160 = arith.addf %158, %159 : vector<8x128xf32>
    %161 = vector.extract_strided_slice %139 {offsets = [0, 256], sizes = [8, 128], strides = [1, 1]} : vector<8x384xf32> to vector<8x128xf32>
    %162 = vector.extract_strided_slice %140 {offsets = [0, 256], sizes = [8, 128], strides = [1, 1]} : vector<8x384xf32> to vector<8x128xf32>
    %163 = arith.addf %162, %10 : vector<8x128xf32>
    %164 = arith.mulf %150, %163 : vector<8x128xf32>
    %165 = arith.addf %161, %164 : vector<8x128xf32>
    %166 = math.tanh %165 : vector<8x128xf32>
    %cst_59 = arith.constant 1.000000e+00 : f32
    %167 = vector.broadcast %cst_59 : f32 to vector<8x128xf32>
    %168 = arith.subf %167, %160 : vector<8x128xf32>
    %169 = arith.mulf %168, %166 : vector<8x128xf32>
    %170 = arith.mulf %160, %130 : vector<8x128xf32>
    %171 = arith.addf %169, %170 : vector<8x128xf32>
    %172 = arith.index_cast %c3_i32 : i32 to index
    %c0_60 = arith.constant 0 : index
    %c0_61 = arith.constant 0 : index
    %173 = vector.load %arg7[%172, %c0_60, %c0_61] : memref<8x8x128xf32, #tpu.memory_space<vmem>>, vector<1x8x128xf32>
    %174 = vector.shape_cast %173 : vector<1x8x128xf32> to vector<8x128xf32>
    %175 = vector.shape_cast %171 : vector<8x128xf32> to vector<1x8x128xf32>
    tpu.vector_store %arg7[%172, %c0_60, %c0_61], %175 {strides = array<i32>} : memref<8x8x128xf32, #tpu.memory_space<vmem>>, vector<1x8x128xf32>,
    %c4_i32 = arith.constant 4 : i32
    %176 = arith.index_cast %c4_i32 : i32 to index
    %c0_62 = arith.constant 0 : index
    %c0_63 = arith.constant 0 : index
    %177 = vector.load %arg2[%176, %c0_62, %c0_63] : memref<8x8x128xf32, #tpu.memory_space<vmem>>, vector<1x8x128xf32>
    %178 = vector.shape_cast %177 : vector<1x8x128xf32> to vector<8x128xf32>
    %cst_64 = arith.constant dense<0.000000e+00> : vector<8x384xf32>
    %179 = tpu.matmul %178, %3, %cst_64 {dimension_numbers = #tpu.dot_dimension_numbers<[1], [0], [0], [1], [0, 0, 1, 1], [], []>} : vector<8x128xf32>, vector<128x384xf32>, vector<8x384xf32> -> vector<8x384xf32>
    %180 = arith.addf %179, %7 : vector<8x384xf32>
    %cst_65 = arith.constant dense<0.000000e+00> : vector<8x384xf32>
    %181 = tpu.matmul %171, %4, %cst_65 {dimension_numbers = #tpu.dot_dimension_numbers<[1], [0], [0], [1], [0, 0, 1, 1], [], []>} : vector<8x128xf32>, vector<128x384xf32>, vector<8x384xf32> -> vector<8x384xf32>
    %182 = vector.extract_strided_slice %180 {offsets = [0, 0], sizes = [8, 128], strides = [1, 1]} : vector<8x384xf32> to vector<8x128xf32>
    %183 = vector.extract_strided_slice %181 {offsets = [0, 0], sizes = [8, 128], strides = [1, 1]} : vector<8x384xf32> to vector<8x128xf32>
    %184 = arith.addf %182, %183 : vector<8x128xf32>
    %cst_66 = arith.constant 5.000000e-01 : f32
    %185 = vector.broadcast %cst_66 : f32 to vector<8x128xf32>
    %186 = arith.mulf %185, %184 : vector<8x128xf32>
    %187 = math.tanh %186 : vector<8x128xf32>
    %cst_67 = arith.constant 5.000000e-01 : f32
    %188 = vector.broadcast %cst_67 : f32 to vector<8x128xf32>
    %189 = arith.mulf %188, %187 : vector<8x128xf32>
    %cst_68 = arith.constant 5.000000e-01 : f32
    %190 = vector.broadcast %cst_68 : f32 to vector<8x128xf32>
    %191 = arith.addf %189, %190 : vector<8x128xf32>
    %192 = vector.extract_strided_slice %180 {offsets = [0, 128], sizes = [8, 128], strides = [1, 1]} : vector<8x384xf32> to vector<8x128xf32>
    %193 = vector.extract_strided_slice %181 {offsets = [0, 128], sizes = [8, 128], strides = [1, 1]} : vector<8x384xf32> to vector<8x128xf32>
    %194 = arith.addf %192, %193 : vector<8x128xf32>
    %cst_69 = arith.constant 5.000000e-01 : f32
    %195 = vector.broadcast %cst_69 : f32 to vector<8x128xf32>
    %196 = arith.mulf %195, %194 : vector<8x128xf32>
    %197 = math.tanh %196 : vector<8x128xf32>
    %cst_70 = arith.constant 5.000000e-01 : f32
    %198 = vector.broadcast %cst_70 : f32 to vector<8x128xf32>
    %199 = arith.mulf %198, %197 : vector<8x128xf32>
    %cst_71 = arith.constant 5.000000e-01 : f32
    %200 = vector.broadcast %cst_71 : f32 to vector<8x128xf32>
    %201 = arith.addf %199, %200 : vector<8x128xf32>
    %202 = vector.extract_strided_slice %180 {offsets = [0, 256], sizes = [8, 128], strides = [1, 1]} : vector<8x384xf32> to vector<8x128xf32>
    %203 = vector.extract_strided_slice %181 {offsets = [0, 256], sizes = [8, 128], strides = [1, 1]} : vector<8x384xf32> to vector<8x128xf32>
    %204 = arith.addf %203, %10 : vector<8x128xf32>
    %205 = arith.mulf %191, %204 : vector<8x128xf32>
    %206 = arith.addf %202, %205 : vector<8x128xf32>
    %207 = math.tanh %206 : vector<8x128xf32>
    %cst_72 = arith.constant 1.000000e+00 : f32
    %208 = vector.broadcast %cst_72 : f32 to vector<8x128xf32>
    %209 = arith.subf %208, %201 : vector<8x128xf32>
    %210 = arith.mulf %209, %207 : vector<8x128xf32>
    %211 = arith.mulf %201, %171 : vector<8x128xf32>
    %212 = arith.addf %210, %211 : vector<8x128xf32>
    %213 = arith.index_cast %c4_i32 : i32 to index
    %c0_73 = arith.constant 0 : index
    %c0_74 = arith.constant 0 : index
    %214 = vector.load %arg7[%213, %c0_73, %c0_74] : memref<8x8x128xf32, #tpu.memory_space<vmem>>, vector<1x8x128xf32>
    %215 = vector.shape_cast %214 : vector<1x8x128xf32> to vector<8x128xf32>
    %216 = vector.shape_cast %212 : vector<8x128xf32> to vector<1x8x128xf32>
    tpu.vector_store %arg7[%213, %c0_73, %c0_74], %216 {strides = array<i32>} : memref<8x8x128xf32, #tpu.memory_space<vmem>>, vector<1x8x128xf32>,
    %c5_i32 = arith.constant 5 : i32
    %217 = arith.index_cast %c5_i32 : i32 to index
    %c0_75 = arith.constant 0 : index
    %c0_76 = arith.constant 0 : index
    %218 = vector.load %arg2[%217, %c0_75, %c0_76] : memref<8x8x128xf32, #tpu.memory_space<vmem>>, vector<1x8x128xf32>
    %219 = vector.shape_cast %218 : vector<1x8x128xf32> to vector<8x128xf32>
    %cst_77 = arith.constant dense<0.000000e+00> : vector<8x384xf32>
    %220 = tpu.matmul %219, %3, %cst_77 {dimension_numbers = #tpu.dot_dimension_numbers<[1], [0], [0], [1], [0, 0, 1, 1], [], []>} : vector<8x128xf32>, vector<128x384xf32>, vector<8x384xf32> -> vector<8x384xf32>
    %221 = arith.addf %220, %7 : vector<8x384xf32>
    %cst_78 = arith.constant dense<0.000000e+00> : vector<8x384xf32>
    %222 = tpu.matmul %212, %4, %cst_78 {dimension_numbers = #tpu.dot_dimension_numbers<[1], [0], [0], [1], [0, 0, 1, 1], [], []>} : vector<8x128xf32>, vector<128x384xf32>, vector<8x384xf32> -> vector<8x384xf32>
    %223 = vector.extract_strided_slice %221 {offsets = [0, 0], sizes = [8, 128], strides = [1, 1]} : vector<8x384xf32> to vector<8x128xf32>
    %224 = vector.extract_strided_slice %222 {offsets = [0, 0], sizes = [8, 128], strides = [1, 1]} : vector<8x384xf32> to vector<8x128xf32>
    %225 = arith.addf %223, %224 : vector<8x128xf32>
    %cst_79 = arith.constant 5.000000e-01 : f32
    %226 = vector.broadcast %cst_79 : f32 to vector<8x128xf32>
    %227 = arith.mulf %226, %225 : vector<8x128xf32>
    %228 = math.tanh %227 : vector<8x128xf32>
    %cst_80 = arith.constant 5.000000e-01 : f32
    %229 = vector.broadcast %cst_80 : f32 to vector<8x128xf32>
    %230 = arith.mulf %229, %228 : vector<8x128xf32>
    %cst_81 = arith.constant 5.000000e-01 : f32
    %231 = vector.broadcast %cst_81 : f32 to vector<8x128xf32>
    %232 = arith.addf %230, %231 : vector<8x128xf32>
    %233 = vector.extract_strided_slice %221 {offsets = [0, 128], sizes = [8, 128], strides = [1, 1]} : vector<8x384xf32> to vector<8x128xf32>
    %234 = vector.extract_strided_slice %222 {offsets = [0, 128], sizes = [8, 128], strides = [1, 1]} : vector<8x384xf32> to vector<8x128xf32>
    %235 = arith.addf %233, %234 : vector<8x128xf32>
    %cst_82 = arith.constant 5.000000e-01 : f32
    %236 = vector.broadcast %cst_82 : f32 to vector<8x128xf32>
    %237 = arith.mulf %236, %235 : vector<8x128xf32>
    %238 = math.tanh %237 : vector<8x128xf32>
    %cst_83 = arith.constant 5.000000e-01 : f32
    %239 = vector.broadcast %cst_83 : f32 to vector<8x128xf32>
    %240 = arith.mulf %239, %238 : vector<8x128xf32>
    %cst_84 = arith.constant 5.000000e-01 : f32
    %241 = vector.broadcast %cst_84 : f32 to vector<8x128xf32>
    %242 = arith.addf %240, %241 : vector<8x128xf32>
    %243 = vector.extract_strided_slice %221 {offsets = [0, 256], sizes = [8, 128], strides = [1, 1]} : vector<8x384xf32> to vector<8x128xf32>
    %244 = vector.extract_strided_slice %222 {offsets = [0, 256], sizes = [8, 128], strides = [1, 1]} : vector<8x384xf32> to vector<8x128xf32>
    %245 = arith.addf %244, %10 : vector<8x128xf32>
    %246 = arith.mulf %232, %245 : vector<8x128xf32>
    %247 = arith.addf %243, %246 : vector<8x128xf32>
    %248 = math.tanh %247 : vector<8x128xf32>
    %cst_85 = arith.constant 1.000000e+00 : f32
    %249 = vector.broadcast %cst_85 : f32 to vector<8x128xf32>
    %250 = arith.subf %249, %242 : vector<8x128xf32>
    %251 = arith.mulf %250, %248 : vector<8x128xf32>
    %252 = arith.mulf %242, %212 : vector<8x128xf32>
    %253 = arith.addf %251, %252 : vector<8x128xf32>
    %254 = arith.index_cast %c5_i32 : i32 to index
    %c0_86 = arith.constant 0 : index
    %c0_87 = arith.constant 0 : index
    %255 = vector.load %arg7[%254, %c0_86, %c0_87] : memref<8x8x128xf32, #tpu.memory_space<vmem>>, vector<1x8x128xf32>
    %256 = vector.shape_cast %255 : vector<1x8x128xf32> to vector<8x128xf32>
    %257 = vector.shape_cast %253 : vector<8x128xf32> to vector<1x8x128xf32>
    tpu.vector_store %arg7[%254, %c0_86, %c0_87], %257 {strides = array<i32>} : memref<8x8x128xf32, #tpu.memory_space<vmem>>, vector<1x8x128xf32>,
    %c6_i32 = arith.constant 6 : i32
    %258 = arith.index_cast %c6_i32 : i32 to index
    %c0_88 = arith.constant 0 : index
    %c0_89 = arith.constant 0 : index
    %259 = vector.load %arg2[%258, %c0_88, %c0_89] : memref<8x8x128xf32, #tpu.memory_space<vmem>>, vector<1x8x128xf32>
    %260 = vector.shape_cast %259 : vector<1x8x128xf32> to vector<8x128xf32>
    %cst_90 = arith.constant dense<0.000000e+00> : vector<8x384xf32>
    %261 = tpu.matmul %260, %3, %cst_90 {dimension_numbers = #tpu.dot_dimension_numbers<[1], [0], [0], [1], [0, 0, 1, 1], [], []>} : vector<8x128xf32>, vector<128x384xf32>, vector<8x384xf32> -> vector<8x384xf32>
    %262 = arith.addf %261, %7 : vector<8x384xf32>
    %cst_91 = arith.constant dense<0.000000e+00> : vector<8x384xf32>
    %263 = tpu.matmul %253, %4, %cst_91 {dimension_numbers = #tpu.dot_dimension_numbers<[1], [0], [0], [1], [0, 0, 1, 1], [], []>} : vector<8x128xf32>, vector<128x384xf32>, vector<8x384xf32> -> vector<8x384xf32>
    %264 = vector.extract_strided_slice %262 {offsets = [0, 0], sizes = [8, 128], strides = [1, 1]} : vector<8x384xf32> to vector<8x128xf32>
    %265 = vector.extract_strided_slice %263 {offsets = [0, 0], sizes = [8, 128], strides = [1, 1]} : vector<8x384xf32> to vector<8x128xf32>
    %266 = arith.addf %264, %265 : vector<8x128xf32>
    %cst_92 = arith.constant 5.000000e-01 : f32
    %267 = vector.broadcast %cst_92 : f32 to vector<8x128xf32>
    %268 = arith.mulf %267, %266 : vector<8x128xf32>
    %269 = math.tanh %268 : vector<8x128xf32>
    %cst_93 = arith.constant 5.000000e-01 : f32
    %270 = vector.broadcast %cst_93 : f32 to vector<8x128xf32>
    %271 = arith.mulf %270, %269 : vector<8x128xf32>
    %cst_94 = arith.constant 5.000000e-01 : f32
    %272 = vector.broadcast %cst_94 : f32 to vector<8x128xf32>
    %273 = arith.addf %271, %272 : vector<8x128xf32>
    %274 = vector.extract_strided_slice %262 {offsets = [0, 128], sizes = [8, 128], strides = [1, 1]} : vector<8x384xf32> to vector<8x128xf32>
    %275 = vector.extract_strided_slice %263 {offsets = [0, 128], sizes = [8, 128], strides = [1, 1]} : vector<8x384xf32> to vector<8x128xf32>
    %276 = arith.addf %274, %275 : vector<8x128xf32>
    %cst_95 = arith.constant 5.000000e-01 : f32
    %277 = vector.broadcast %cst_95 : f32 to vector<8x128xf32>
    %278 = arith.mulf %277, %276 : vector<8x128xf32>
    %279 = math.tanh %278 : vector<8x128xf32>
    %cst_96 = arith.constant 5.000000e-01 : f32
    %280 = vector.broadcast %cst_96 : f32 to vector<8x128xf32>
    %281 = arith.mulf %280, %279 : vector<8x128xf32>
    %cst_97 = arith.constant 5.000000e-01 : f32
    %282 = vector.broadcast %cst_97 : f32 to vector<8x128xf32>
    %283 = arith.addf %281, %282 : vector<8x128xf32>
    %284 = vector.extract_strided_slice %262 {offsets = [0, 256], sizes = [8, 128], strides = [1, 1]} : vector<8x384xf32> to vector<8x128xf32>
    %285 = vector.extract_strided_slice %263 {offsets = [0, 256], sizes = [8, 128], strides = [1, 1]} : vector<8x384xf32> to vector<8x128xf32>
    %286 = arith.addf %285, %10 : vector<8x128xf32>
    %287 = arith.mulf %273, %286 : vector<8x128xf32>
    %288 = arith.addf %284, %287 : vector<8x128xf32>
    %289 = math.tanh %288 : vector<8x128xf32>
    %cst_98 = arith.constant 1.000000e+00 : f32
    %290 = vector.broadcast %cst_98 : f32 to vector<8x128xf32>
    %291 = arith.subf %290, %283 : vector<8x128xf32>
    %292 = arith.mulf %291, %289 : vector<8x128xf32>
    %293 = arith.mulf %283, %253 : vector<8x128xf32>
    %294 = arith.addf %292, %293 : vector<8x128xf32>
    %295 = arith.index_cast %c6_i32 : i32 to index
    %c0_99 = arith.constant 0 : index
    %c0_100 = arith.constant 0 : index
    %296 = vector.load %arg7[%295, %c0_99, %c0_100] : memref<8x8x128xf32, #tpu.memory_space<vmem>>, vector<1x8x128xf32>
    %297 = vector.shape_cast %296 : vector<1x8x128xf32> to vector<8x128xf32>
    %298 = vector.shape_cast %294 : vector<8x128xf32> to vector<1x8x128xf32>
    tpu.vector_store %arg7[%295, %c0_99, %c0_100], %298 {strides = array<i32>} : memref<8x8x128xf32, #tpu.memory_space<vmem>>, vector<1x8x128xf32>,
    %c7_i32 = arith.constant 7 : i32
    %299 = arith.index_cast %c7_i32 : i32 to index
    %c0_101 = arith.constant 0 : index
    %c0_102 = arith.constant 0 : index
    %300 = vector.load %arg2[%299, %c0_101, %c0_102] : memref<8x8x128xf32, #tpu.memory_space<vmem>>, vector<1x8x128xf32>
    %301 = vector.shape_cast %300 : vector<1x8x128xf32> to vector<8x128xf32>
    %cst_103 = arith.constant dense<0.000000e+00> : vector<8x384xf32>
    %302 = tpu.matmul %301, %3, %cst_103 {dimension_numbers = #tpu.dot_dimension_numbers<[1], [0], [0], [1], [0, 0, 1, 1], [], []>} : vector<8x128xf32>, vector<128x384xf32>, vector<8x384xf32> -> vector<8x384xf32>
    %303 = arith.addf %302, %7 : vector<8x384xf32>
    %cst_104 = arith.constant dense<0.000000e+00> : vector<8x384xf32>
    %304 = tpu.matmul %294, %4, %cst_104 {dimension_numbers = #tpu.dot_dimension_numbers<[1], [0], [0], [1], [0, 0, 1, 1], [], []>} : vector<8x128xf32>, vector<128x384xf32>, vector<8x384xf32> -> vector<8x384xf32>
    %305 = vector.extract_strided_slice %303 {offsets = [0, 0], sizes = [8, 128], strides = [1, 1]} : vector<8x384xf32> to vector<8x128xf32>
    %306 = vector.extract_strided_slice %304 {offsets = [0, 0], sizes = [8, 128], strides = [1, 1]} : vector<8x384xf32> to vector<8x128xf32>
    %307 = arith.addf %305, %306 : vector<8x128xf32>
    %cst_105 = arith.constant 5.000000e-01 : f32
    %308 = vector.broadcast %cst_105 : f32 to vector<8x128xf32>
    %309 = arith.mulf %308, %307 : vector<8x128xf32>
    %310 = math.tanh %309 : vector<8x128xf32>
    %cst_106 = arith.constant 5.000000e-01 : f32
    %311 = vector.broadcast %cst_106 : f32 to vector<8x128xf32>
    %312 = arith.mulf %311, %310 : vector<8x128xf32>
    %cst_107 = arith.constant 5.000000e-01 : f32
    %313 = vector.broadcast %cst_107 : f32 to vector<8x128xf32>
    %314 = arith.addf %312, %313 : vector<8x128xf32>
    %315 = vector.extract_strided_slice %303 {offsets = [0, 128], sizes = [8, 128], strides = [1, 1]} : vector<8x384xf32> to vector<8x128xf32>
    %316 = vector.extract_strided_slice %304 {offsets = [0, 128], sizes = [8, 128], strides = [1, 1]} : vector<8x384xf32> to vector<8x128xf32>
    %317 = arith.addf %315, %316 : vector<8x128xf32>
    %cst_108 = arith.constant 5.000000e-01 : f32
    %318 = vector.broadcast %cst_108 : f32 to vector<8x128xf32>
    %319 = arith.mulf %318, %317 : vector<8x128xf32>
    %320 = math.tanh %319 : vector<8x128xf32>
    %cst_109 = arith.constant 5.000000e-01 : f32
    %321 = vector.broadcast %cst_109 : f32 to vector<8x128xf32>
    %322 = arith.mulf %321, %320 : vector<8x128xf32>
    %cst_110 = arith.constant 5.000000e-01 : f32
    %323 = vector.broadcast %cst_110 : f32 to vector<8x128xf32>
    %324 = arith.addf %322, %323 : vector<8x128xf32>
    %325 = vector.extract_strided_slice %303 {offsets = [0, 256], sizes = [8, 128], strides = [1, 1]} : vector<8x384xf32> to vector<8x128xf32>
    %326 = vector.extract_strided_slice %304 {offsets = [0, 256], sizes = [8, 128], strides = [1, 1]} : vector<8x384xf32> to vector<8x128xf32>
    %327 = arith.addf %326, %10 : vector<8x128xf32>
    %328 = arith.mulf %314, %327 : vector<8x128xf32>
    %329 = arith.addf %325, %328 : vector<8x128xf32>
    %330 = math.tanh %329 : vector<8x128xf32>
    %cst_111 = arith.constant 1.000000e+00 : f32
    %331 = vector.broadcast %cst_111 : f32 to vector<8x128xf32>
    %332 = arith.subf %331, %324 : vector<8x128xf32>
    %333 = arith.mulf %332, %330 : vector<8x128xf32>
    %334 = arith.mulf %324, %294 : vector<8x128xf32>
    %335 = arith.addf %333, %334 : vector<8x128xf32>
    %336 = arith.index_cast %c7_i32 : i32 to index
    %c0_112 = arith.constant 0 : index
    %c0_113 = arith.constant 0 : index
    %337 = vector.load %arg7[%336, %c0_112, %c0_113] : memref<8x8x128xf32, #tpu.memory_space<vmem>>, vector<1x8x128xf32>
    %338 = vector.shape_cast %337 : vector<1x8x128xf32> to vector<8x128xf32>
    %339 = vector.shape_cast %335 : vector<8x128xf32> to vector<1x8x128xf32>
    tpu.vector_store %arg7[%336, %c0_112, %c0_113], %339 {strides = array<i32>} : memref<8x8x128xf32, #tpu.memory_space<vmem>>, vector<1x8x128xf32>,
    %c8_i32 = arith.constant 8 : i32
    %c0_114 = arith.constant 0 : index
    %c0_115 = arith.constant 0 : index
    %340 = vector.load %arg8[%c0_114, %c0_115] : memref<8x128xf32, #tpu.memory_space<vmem>>, vector<8x128xf32>
    tpu.vector_store %arg8[%c0_114, %c0_115], %335 {strides = array<i32>} : memref<8x128xf32, #tpu.memory_space<vmem>>, vector<8x128xf32>,
    return
  }
  func.func @transform_0(%arg0: i32, %arg1: i32) -> (i32, i32, i32) {
    %c0_i32 = arith.constant 0 : i32
    %c0_i32_0 = arith.constant 0 : i32
    return %arg1, %arg0, %c0_i32 : i32, i32, i32
  }
  func.func @transform_1(%arg0: i32, %arg1: i32) -> (i32, i32) {
    %c0_i32 = arith.constant 0 : i32
    %c0_i32_0 = arith.constant 0 : i32
    %c0_i32_1 = arith.constant 0 : i32
    return %c0_i32, %c0_i32_0 : i32, i32
  }
  func.func @transform_2(%arg0: i32, %arg1: i32) -> (i32, i32) {
    %c0_i32 = arith.constant 0 : i32
    %c0_i32_0 = arith.constant 0 : i32
    %c0_i32_1 = arith.constant 0 : i32
    return %c0_i32, %c0_i32_0 : i32, i32
  }
  func.func @transform_3(%arg0: i32, %arg1: i32) -> (i32, i32) {
    %c0_i32 = arith.constant 0 : i32
    %c0_i32_0 = arith.constant 0 : i32
    %c0_i32_1 = arith.constant 0 : i32
    return %c0_i32, %c0_i32_0 : i32, i32
  }
  func.func @transform_4(%arg0: i32, %arg1: i32) -> (i32, i32) {
    %c0_i32 = arith.constant 0 : i32
    %c0_i32_0 = arith.constant 0 : i32
    %c0_i32_1 = arith.constant 0 : i32
    return %c0_i32, %c0_i32_0 : i32, i32
  }
  func.func @transform_5(%arg0: i32, %arg1: i32) -> (i32, i32, i32) {
    %c0_i32 = arith.constant 0 : i32
    %c0_i32_0 = arith.constant 0 : i32
    return %arg1, %arg0, %c0_i32 : i32, i32, i32
  }
}

</mosaic_0001>

<llo_original>
// kernel: encoder_forward.2
$region0: #{encoder_forward.2}
  #allocation0 [shape = 'u32[]', space=smem, size = 0x4, offset = 0x4, fixed_abs, tag = 'smem constant byte address 0x4 - core index']
  #allocation1 [shape = 'u32[144,128]{1,0:T(1,128)}', space=vmem, size = 0x12000, scoped, tag = 'internal scratch']
  #allocation2 [shape = 'f32[8,128]{1,0:T(8,128)}', space=vmem, size = 0x1000, scoped, tag = 'scratch operand']
  %s0 = inlined_call_operand.vmem [shape: f32[8,8,128], index: 0, kind: input, shape index: {}]
  %s1 = inlined_call_operand.vmem [shape: f32[128,384], index: 1, kind: input, shape index: {}]
  %s2 = inlined_call_operand.vmem [shape: f32[128,384], index: 2, kind: input, shape index: {}]
  %s3 = inlined_call_operand.vmem [shape: f32[1,384], index: 3, kind: input, shape index: {}]
  %s4 = inlined_call_operand.vmem [shape: f32[1,128], index: 4, kind: input, shape index: {}]
  %s5 = inlined_call_operand.vmem [shape: f32[8,8,128], index: 5, kind: output, shape index: {}]
  %s6 = sld [smem:[#allocation0]]
  $region34: #{encoder_forward.2} parent=0
    _
  %s8 = ssub.s32 1, %s6
  %s9 = scalar_select 0, %s8, %s6
  // Predicated region
  $region2: #{encoder_forward.2} parent=0 // pred_check
    _
  $region3: #{encoder_forward.2} parent=0 // pred_check_branch
    %11 = sbr.rel (0) target = $region5
  $region4: #{encoder_forward.2} parent=0 // pred_region
    _
  $region5: #{encoder_forward.2} parent=0 // pred_fallthru
    _
  // Predicated region
  $region6: #{encoder_forward.2} parent=0 // pred_check
    _
  $region7: #{encoder_forward.2} parent=0 // pred_check_branch
    %13 = sbr.rel (0) target = $region9
  $region8: #{encoder_forward.2} parent=0 // pred_region
    _
  $region9: #{encoder_forward.2} parent=0 // pred_fallthru
    _
  // Predicated region
  $region10: #{encoder_forward.2} parent=0 // pred_check
    _
  $region11: #{encoder_forward.2} parent=0 // pred_check_branch
    %15 = sbr.rel (0) target = $region13
  $region12: #{encoder_forward.2} parent=0 // pred_region
    _
  $region13: #{encoder_forward.2} parent=0 // pred_fallthru
    _
  // Predicated region
  $region14: #{encoder_forward.2} parent=0 // pred_check
    _
  $region15: #{encoder_forward.2} parent=0 // pred_check_branch
    %17 = sbr.rel (0) target = $region17
  $region16: #{encoder_forward.2} parent=0 // pred_region
    _
  $region17: #{encoder_forward.2} parent=0 // pred_fallthru
    _
  // Predicated region
  $region18: #{encoder_forward.2} parent=0 // pred_check
    _
  $region19: #{encoder_forward.2} parent=0 // pred_check_branch
    %19 = sbr.rel (0) target = $region21
  $region20: #{encoder_forward.2} parent=0 // pred_region
    _
  $region21: #{encoder_forward.2} parent=0 // pred_fallthru
    _
  %p20 = scmp.eq.s32.totalorder 0, 0
  // Predicated region
  $region22: #{encoder_forward.2} parent=0 // pred_check
    %p21 = pneg %p20
  $region23: #{encoder_forward.2} parent=0 // pred_check_branch
    %23 = sbr.rel (%p21) target = $region25
  $region24: #{encoder_forward.2} parent=0 // pred_region
    %24 = vst [vmem:[#allocation2] sm:$0xff] 0.0
  $region25: #{encoder_forward.2} parent=0 // pred_fallthru
    _
  %v25 = vld [vmem:[%s1] sm:$0xff]
  %v26 = vld [vmem:[%s1 + $0x8] sm:$0xff]
  %v27 = vld [vmem:[%s1 + $0x10] sm:$0xff]
  %v28 = vld [vmem:[%s1 + $0x18] sm:$0xff]
  %v29 = vld [vmem:[%s1 + $0x20] sm:$0xff]
  %v30 = vld [vmem:[%s1 + $0x28] sm:$0xff]
  %v31 = vld [vmem:[%s1 + $0x30] sm:$0xff]
  %v32 = vld [vmem:[%s1 + $0x38] sm:$0xff]
  %v33 = vld [vmem:[%s1 + $0x40] sm:$0xff]
  %v34 = vld [vmem:[%s1 + $0x48] sm:$0xff]
  %v35 = vld [vmem:[%s1 + $0x50] sm:$0xff]
  %v36 = vld [vmem:[%s1 + $0x58] sm:$0xff]
  %v37 = vld [vmem:[%s1 + $0x60] sm:$0xff]
  %v38 = vld [vmem:[%s1 + $0x68] sm:$0xff]
  %v39 = vld [vmem:[%s1 + $0x70] sm:$0xff]
  %v40 = vld [vmem:[%s1 + $0x78] sm:$0xff]
  %v41 = vld [vmem:[%s1 + $0x80] sm:$0xff]
  %v42 = vld [vmem:[%s1 + $0x88] sm:$0xff]
  %v43 = vld [vmem:[%s1 + $0x90] sm:$0xff]
  %v44 = vld [vmem:[%s1 + $0x98] sm:$0xff]
  %v45 = vld [vmem:[%s1 + $0xa0] sm:$0xff]
  %v46 = vld [vmem:[%s1 + $0xa8] sm:$0xff]
  %v47 = vld [vmem:[%s1 + $0xb0] sm:$0xff]
  %v48 = vld [vmem:[%s1 + $0xb8] sm:$0xff]
  %v49 = vld [vmem:[%s1 + $0xc0] sm:$0xff]
  %v50 = vld [vmem:[%s1 + $0xc8] sm:$0xff]
  %v51 = vld [vmem:[%s1 + $0xd0] sm:$0xff]
  %v52 = vld [vmem:[%s1 + $0xd8] sm:$0xff]
  %v53 = vld [vmem:[%s1 + $0xe0] sm:$0xff]
  %v54 = vld [vmem:[%s1 + $0xe8] sm:$0xff]
  %v55 = vld [vmem:[%s1 + $0xf0] sm:$0xff]
  %v56 = vld [vmem:[%s1 + $0xf8] sm:$0xff]
  %v57 = vld [vmem:[%s1 + $0x100] sm:$0xff]
  %v58 = vld [vmem:[%s1 + $0x108] sm:$0xff]
  %v59 = vld [vmem:[%s1 + $0x110] sm:$0xff]
  %v60 = vld [vmem:[%s1 + $0x118] sm:$0xff]
  %v61 = vld [vmem:[%s1 + $0x120] sm:$0xff]
  %v62 = vld [vmem:[%s1 + $0x128] sm:$0xff]
  %v63 = vld [vmem:[%s1 + $0x130] sm:$0xff]
  %v64 = vld [vmem:[%s1 + $0x138] sm:$0xff]
  %v65 = vld [vmem:[%s1 + $0x140] sm:$0xff]
  %v66 = vld [vmem:[%s1 + $0x148] sm:$0xff]
  %v67 = vld [vmem:[%s1 + $0x150] sm:$0xff]
  %v68 = vld [vmem:[%s1 + $0x158] sm:$0xff]
  %v69 = vld [vmem:[%s1 + $0x160] sm:$0xff]
  %v70 = vld [vmem:[%s1 + $0x168] sm:$0xff]
  %v71 = vld [vmem:[%s1 + $0x170] sm:$0xff]
  %v72 = vld [vmem:[%s1 + $0x178] sm:$0xff]
  %v73 = vld [vmem:[%s2] sm:$0xff]
  %v74 = vld [vmem:[%s2 + $0x8] sm:$0xff]
  %v75 = vld [vmem:[%s2 + $0x10] sm:$0xff]
  %v76 = vld [vmem:[%s2 + $0x18] sm:$0xff]
  %v77 = vld [vmem:[%s2 + $0x20] sm:$0xff]
  %v78 = vld [vmem:[%s2 + $0x28] sm:$0xff]
  %v79 = vld [vmem:[%s2 + $0x30] sm:$0xff]
  %v80 = vld [vmem:[%s2 + $0x38] sm:$0xff]
  %v81 = vld [vmem:[%s2 + $0x40] sm:$0xff]
  %v82 = vld [vmem:[%s2 + $0x48] sm:$0xff]
  %v83 = vld [vmem:[%s2 + $0x50] sm:$0xff]
  %v84 = vld [vmem:[%s2 + $0x58] sm:$0xff]
  %v85 = vld [vmem:[%s2 + $0x60] sm:$0xff]
  %v86 = vld [vmem:[%s2 + $0x68] sm:$0xff]
  %v87 = vld [vmem:[%s2 + $0x70] sm:$0xff]
  %v88 = vld [vmem:[%s2 + $0x78] sm:$0xff]
  %v89 = vld [vmem:[%s2 + $0x80] sm:$0xff]
  %v90 = vld [vmem:[%s2 + $0x88] sm:$0xff]
  %v91 = vld [vmem:[%s2 + $0x90] sm:$0xff]
  %v92 = vld [vmem:[%s2 + $0x98] sm:$0xff]
  %v93 = vld [vmem:[%s2 + $0xa0] sm:$0xff]
  %v94 = vld [vmem:[%s2 + $0xa8] sm:$0xff]
  %v95 = vld [vmem:[%s2 + $0xb0] sm:$0xff]
  %v96 = vld [vmem:[%s2 + $0xb8] sm:$0xff]
  %v97 = vld [vmem:[%s2 + $0xc0] sm:$0xff]
  %v98 = vld [vmem:[%s2 + $0xc8] sm:$0xff]
  %v99 = vld [vmem:[%s2 + $0xd0] sm:$0xff]
  %v100 = vld [vmem:[%s2 + $0xd8] sm:$0xff]
  %v101 = vld [vmem:[%s2 + $0xe0] sm:$0xff]
  %v102 = vld [vmem:[%s2 + $0xe8] sm:$0xff]
  %v103 = vld [vmem:[%s2 + $0xf0] sm:$0xff]
  %v104 = vld [vmem:[%s2 + $0xf8] sm:$0xff]
  %v105 = vld [vmem:[%s2 + $0x100] sm:$0xff]
  %v106 = vld [vmem:[%s2 + $0x108] sm:$0xff]
  %v107 = vld [vmem:[%s2 + $0x110] sm:$0xff]
  %v108 = vld [vmem:[%s2 + $0x118] sm:$0xff]
  %v109 = vld [vmem:[%s2 + $0x120] sm:$0xff]
  %v110 = vld [vmem:[%s2 + $0x128] sm:$0xff]
  %v111 = vld [vmem:[%s2 + $0x130] sm:$0xff]
  %v112 = vld [vmem:[%s2 + $0x138] sm:$0xff]
  %v113 = vld [vmem:[%s2 + $0x140] sm:$0xff]
  %v114 = vld [vmem:[%s2 + $0x148] sm:$0xff]
  %v115 = vld [vmem:[%s2 + $0x150] sm:$0xff]
  %v116 = vld [vmem:[%s2 + $0x158] sm:$0xff]
  %v117 = vld [vmem:[%s2 + $0x160] sm:$0xff]
  %v118 = vld [vmem:[%s2 + $0x168] sm:$0xff]
  %v119 = vld [vmem:[%s2 + $0x170] sm:$0xff]
  %v120 = vld [vmem:[%s2 + $0x178] sm:$0xff]
  %v121 = vld [vmem:[%s3] sm:$0x7]
  %v123 = vlaneseq
  %v124 = vshrl.u32 %v123, 7
  %v125 = vsub.s32 0, %v124
  %v126 = vrot.slane %v121, %v125
  %v127 = vlaneseq
  %v128 = vshrl.u32 %v127, 7
  %v129 = vsub.s32 1, %v128
  %v130 = vrot.slane %v121, %v129
  %v131 = vlaneseq
  %v132 = vshrl.u32 %v131, 7
  %v133 = vsub.s32 2, %v132
  %v134 = vrot.slane %v121, %v133
  %v138 = vld [vmem:[%s4] sm:$0x1]
  %v140 = vlaneseq
  %v141 = vshrl.u32 %v140, 7
  %v142 = vsub.s32 0, %v141
  %v143 = vrot.slane %v138, %v142
  %v145 = vld [vmem:[#allocation2] sm:$0xff]
  %v146 = vld [vmem:[%s0] sm:$0xff]
  %147 = vmatprep.subr.mxu0 %v26
  %148 = vmatpush1.msra.mxu0 %v25
  %149 = vmatprep.subr.mxu0 %v29
  %150 = vmatpush1.msra.mxu0 %v28
  %151 = vmatprep.subr.mxu0 %v32
  %152 = vmatpush1.msra.mxu0 %v31
  %153 = vmatprep.subr.mxu0 %v35
  %154 = vmatpush1.msra.mxu0 %v34
  %155 = vmatprep.subr.mxu0 %v38
  %156 = vmatpush1.msra.mxu0 %v37
  %157 = vmatprep.subr.mxu0 %v41
  %158 = vmatpush1.msra.mxu0 %v40
  %159 = vmatprep.subr.mxu0 %v44
  %160 = vmatpush1.msra.mxu0 %v43
  %161 = vmatprep.subr.mxu0 %v47
  %162 = vmatpush1.msra.mxu0 %v46
  %163 = vmatprep.subr.mxu0 %v50
  %164 = vmatpush1.msra.mxu0 %v49
  %165 = vmatprep.subr.mxu0 %v53
  %166 = vmatpush1.msra.mxu0 %v52
  %167 = vmatprep.subr.mxu0 %v56
  %168 = vmatpush1.msra.mxu0 %v55
  %169 = vmatprep.subr.mxu0 %v59
  %170 = vmatpush1.msra.mxu0 %v58
  %171 = vmatprep.subr.mxu0 %v62
  %172 = vmatpush1.msra.mxu0 %v61
  %173 = vmatprep.subr.mxu0 %v65
  %174 = vmatpush1.msra.mxu0 %v64
  %175 = vmatprep.subr.mxu0 %v68
  %176 = vmatpush1.msra.mxu0 %v67
  %177 = vmatprep.subr.mxu0 %v71
  %178 = vmatpush1.msra.mxu0 %v70
  %179 = vmatprep.subr.mxu0 0.0
  %180 = vmatpush1.msra.mxu0 0.0
  %181 = vmatprep.subr.mxu0 0.0
  %182 = vmatpush1.msra.mxu0 0.0
  %183 = vmatprep.subr.mxu0 0.0
  %184 = vmatpush1.msra.mxu0 0.0
  %185 = vmatprep.subr.mxu0 0.0
  %186 = vmatpush1.msra.mxu0 0.0
  %187 = vmatprep.subr.mxu0 0.0
  %188 = vmatpush1.msra.mxu0 0.0
  %189 = vmatprep.subr.mxu0 0.0
  %190 = vmatpush1.msra.mxu0 0.0
  %191 = vmatprep.subr.mxu0 0.0
  %192 = vmatpush1.msra.mxu0 0.0
  %193 = vmatprep.subr.mxu0 0.0
  %194 = vmatpush1.msra.mxu0 0.0
  %195 = vmatprep.subr.mxu0 0.0
  %196 = vmatpush1.msra.mxu0 0.0
  %197 = vmatprep.subr.mxu0 0.0
  %198 = vmatpush1.msra.mxu0 0.0
  %199 = vmatprep.subr.mxu0 0.0
  %200 = vmatpush1.msra.mxu0 0.0
  %201 = vmatprep.subr.mxu0 0.0
  %202 = vmatpush1.msra.mxu0 0.0
  %203 = vmatprep.subr.mxu0 0.0
  %204 = vmatpush1.msra.mxu0 0.0
  %205 = vmatprep.subr.mxu0 0.0
  %206 = vmatpush1.msra.mxu0 0.0
  %207 = vmatprep.subr.mxu0 0.0
  %208 = vmatpush1.msra.mxu0 0.0
  %209 = vmatprep.subr.mxu0 0.0
  %210 = vmatpush1.msra.mxu0 0.0
  %211 = vmatprep.mubr.f32.mxu0 0.0
  %212 = vmatmul.mubr.f32.gmra.mrb[0].mxu0 %v146
  %v213 = vpop.f32.mrb[0].mxu0
  %v214 = vadd.f32 %v126, %v213
  %v215 = vpop.f32.mrb[0].mxu0
  %v216 = vadd.f32 %v130, %v215
  %217 = vdwg.mxu0
  %218 = vmatprep.subr.mxu0 0.0
  %219 = vmatpush1.msra.mxu0 %v27
  %220 = vmatprep.subr.mxu0 0.0
  %221 = vmatpush1.msra.mxu0 %v30
  %222 = vmatprep.subr.mxu0 0.0
  %223 = vmatpush1.msra.mxu0 %v33
  %224 = vmatprep.subr.mxu0 0.0
  %225 = vmatpush1.msra.mxu0 %v36
  %226 = vmatprep.subr.mxu0 0.0
  %227 = vmatpush1.msra.mxu0 %v39
  %228 = vmatprep.subr.mxu0 0.0
  %229 = vmatpush1.msra.mxu0 %v42
  %230 = vmatprep.subr.mxu0 0.0
  %231 = vmatpush1.msra.mxu0 %v45
  %232 = vmatprep.subr.mxu0 0.0
  %233 = vmatpush1.msra.mxu0 %v48
  %234 = vmatprep.subr.mxu0 0.0
  %235 = vmatpush1.msra.mxu0 %v51
  %236 = vmatprep.subr.mxu0 0.0
  %237 = vmatpush1.msra.mxu0 %v54
  %238 = vmatprep.subr.mxu0 0.0
  %239 = vmatpush1.msra.mxu0 %v57
  %240 = vmatprep.subr.mxu0 0.0
  %241 = vmatpush1.msra.mxu0 %v60
  %242 = vmatprep.subr.mxu0 0.0
  %243 = vmatpush1.msra.mxu0 %v63
  %244 = vmatprep.subr.mxu0 0.0
  %245 = vmatpush1.msra.mxu0 %v66
  %246 = vmatprep.subr.mxu0 0.0
  %247 = vmatpush1.msra.mxu0 %v69
  %248 = vmatprep.subr.mxu0 0.0
  %249 = vmatpush1.msra.mxu0 %v72
  %250 = vmatprep.subr.mxu0 0.0
  %251 = vmatpush1.msra.mxu0 0.0
  %252 = vmatprep.subr.mxu0 0.0
  %253 = vmatpush1.msra.mxu0 0.0
  %254 = vmatprep.subr.mxu0 0.0
  %255 = vmatpush1.msra.mxu0 0.0
  %256 = vmatprep.subr.mxu0 0.0
  %257 = vmatpush1.msra.mxu0 0.0
  %258 = vmatprep.subr.mxu0 0.0
  %259 = vmatpush1.msra.mxu0 0.0
  %260 = vmatprep.subr.mxu0 0.0
  %261 = vmatpush1.msra.mxu0 0.0
  %262 = vmatprep.subr.mxu0 0.0
  %263 = vmatpush1.msra.mxu0 0.0
  %264 = vmatprep.subr.mxu0 0.0
  %265 = vmatpush1.msra.mxu0 0.0
  %266 = vmatprep.subr.mxu0 0.0
  %267 = vmatpush1.msra.mxu0 0.0
  %268 = vmatprep.subr.mxu0 0.0
  %269 = vmatpush1.msra.mxu0 0.0
  %270 = vmatprep.subr.mxu0 0.0
  %271 = vmatpush1.msra.mxu0 0.0
  %272 = vmatprep.subr.mxu0 0.0
  %273 = vmatpush1.msra.mxu0 0.0
  %274 = vmatprep.subr.mxu0 0.0
  %275 = vmatpush1.msra.mxu0 0.0
  %276 = vmatprep.subr.mxu0 0.0
  %277 = vmatpush1.msra.mxu0 0.0
  %278 = vmatprep.subr.mxu0 0.0
  %279 = vmatpush1.msra.mxu0 0.0
  %280 = vmatprep.subr.mxu0 0.0
  %281 = vmatpush1.msra.mxu0 0.0
  %282 = vmatprep.mubr.f32.mxu0 0.0
  %283 = vmatmul.mubr.f32.gmra.mrb[0].mxu0 %v146
  %v284 = vpop.f32.mrb[0].mxu0
  %v285 = vadd.f32 %v134, %v284
  %v286 = vpop.f32.mrb[0].mxu0
  %287 = vdwg.mxu0
  %288 = vmatprep.subr.mxu0 %v74
  %289 = vmatpush1.msra.mxu0 %v73
  %290 = vmatprep.subr.mxu0 %v77
  %291 = vmatpush1.msra.mxu0 %v76
  %292 = vmatprep.subr.mxu0 %v80
  %293 = vmatpush1.msra.mxu0 %v79
  %294 = vmatprep.subr.mxu0 %v83
  %295 = vmatpush1.msra.mxu0 %v82
  %296 = vmatprep.subr.mxu0 %v86
  %297 = vmatpush1.msra.mxu0 %v85
  %298 = vmatprep.subr.mxu0 %v89
  %299 = vmatpush1.msra.mxu0 %v88
  %300 = vmatprep.subr.mxu0 %v92
  %301 = vmatpush1.msra.mxu0 %v91
  %302 = vmatprep.subr.mxu0 %v95
  %303 = vmatpush1.msra.mxu0 %v94
  %304 = vmatprep.subr.mxu0 %v98
  %305 = vmatpush1.msra.mxu0 %v97
  %306 = vmatprep.subr.mxu0 %v101
  %307 = vmatpush1.msra.mxu0 %v100
  %308 = vmatprep.subr.mxu0 %v104
  %309 = vmatpush1.msra.mxu0 %v103
  %310 = vmatprep.subr.mxu0 %v107
  %311 = vmatpush1.msra.mxu0 %v106
  %312 = vmatprep.subr.mxu0 %v110
  %313 = vmatpush1.msra.mxu0 %v109
  %314 = vmatprep.subr.mxu0 %v113
  %315 = vmatpush1.msra.mxu0 %v112
  %316 = vmatprep.subr.mxu0 %v116
  %317 = vmatpush1.msra.mxu0 %v115
  %318 = vmatprep.subr.mxu0 %v119
  %319 = vmatpush1.msra.mxu0 %v118
  %320 = vmatprep.subr.mxu0 0.0
  %321 = vmatpush1.msra.mxu0 0.0
  %322 = vmatprep.subr.mxu0 0.0
  %323 = vmatpush1.msra.mxu0 0.0
  %324 = vmatprep.subr.mxu0 0.0
  %325 = vmatpush1.msra.mxu0 0.0
  %326 = vmatprep.subr.mxu0 0.0
  %327 = vmatpush1.msra.mxu0 0.0
  %328 = vmatprep.subr.mxu0 0.0
  %329 = vmatpush1.msra.mxu0 0.0
  %330 = vmatprep.subr.mxu0 0.0
  %331 = vmatpush1.msra.mxu0 0.0
  %332 = vmatprep.subr.mxu0 0.0
  %333 = vmatpush1.msra.mxu0 0.0
  %334 = vmatprep.subr.mxu0 0.0
  %335 = vmatpush1.msra.mxu0 0.0
  %336 = vmatprep.subr.mxu0 0.0
  %337 = vmatpush1.msra.mxu0 0.0
  %338 = vmatprep.subr.mxu0 0.0
  %339 = vmatpush1.msra.mxu0 0.0
  %340 = vmatprep.subr.mxu0 0.0
  %341 = vmatpush1.msra.mxu0 0.0
  %342 = vmatprep.subr.mxu0 0.0
  %343 = vmatpush1.msra.mxu0 0.0
  %344 = vmatprep.subr.mxu0 0.0
  %345 = vmatpush1.msra.mxu0 0.0
  %346 = vmatprep.subr.mxu0 0.0
  %347 = vmatpush1.msra.mxu0 0.0
  %348 = vmatprep.subr.mxu0 0.0
  %349 = vmatpush1.msra.mxu0 0.0
  %350 = vmatprep.subr.mxu0 0.0
  %351 = vmatpush1.msra.mxu0 0.0
  %352 = vmatprep.mubr.f32.mxu0 0.0
  %353 = vmatmul.mubr.f32.gmra.mrb[0].mxu0 %v145
  %v354 = vpop.f32.mrb[0].mxu0
  %v355 = vadd.f32 0.0, %v354
  %v356 = vpop.f32.mrb[0].mxu0
  %v357 = vadd.f32 0.0, %v356
  %358 = vdwg.mxu0
  %359 = vmatprep.subr.mxu0 0.0
  %360 = vmatpush1.msra.mxu0 %v75
  %361 = vmatprep.subr.mxu0 0.0
  %362 = vmatpush1.msra.mxu0 %v78
  %363 = vmatprep.subr.mxu0 0.0
  %364 = vmatpush1.msra.mxu0 %v81
  %365 = vmatprep.subr.mxu0 0.0
  %366 = vmatpush1.msra.mxu0 %v84
  %367 = vmatprep.subr.mxu0 0.0
  %368 = vmatpush1.msra.mxu0 %v87
  %369 = vmatprep.subr.mxu0 0.0
  %370 = vmatpush1.msra.mxu0 %v90
  %371 = vmatprep.subr.mxu0 0.0
  %372 = vmatpush1.msra.mxu0 %v93
  %373 = vmatprep.subr.mxu0 0.0
  %374 = vmatpush1.msra.mxu0 %v96
  %375 = vmatprep.subr.mxu0 0.0
  %376 = vmatpush1.msra.mxu0 %v99
  %377 = vmatprep.subr.mxu0 0.0
  %378 = vmatpush1.msra.mxu0 %v102
  %379 = vmatprep.subr.mxu0 0.0
  %380 = vmatpush1.msra.mxu0 %v105
  %381 = vmatprep.subr.mxu0 0.0
  %382 = vmatpush1.msra.mxu0 %v108
  %383 = vmatprep.subr.mxu0 0.0
  %384 = vmatpush1.msra.mxu0 %v111
  %385 = vmatprep.subr.mxu0 0.0
  %386 = vmatpush1.msra.mxu0 %v114
  %387 = vmatprep.subr.mxu0 0.0
  %388 = vmatpush1.msra.mxu0 %v117
  %389 = vmatprep.subr.mxu0 0.0
  %390 = vmatpush1.msra.mxu0 %v120
  %391 = vmatprep.subr.mxu0 0.0
  %392 = vmatpush1.msra.mxu0 0.0
  %393 = vmatprep.subr.mxu0 0.0
  %394 = vmatpush1.msra.mxu0 0.0
  %395 = vmatprep.subr.mxu0 0.0
  %396 = vmatpush1.msra.mxu0 0.0
  %397 = vmatprep.subr.mxu0 0.0
  %398 = vmatpush1.msra.mxu0 0.0
  %399 = vmatprep.subr.mxu0 0.0
  %400 = vmatpush1.msra.mxu0 0.0
  %401 = vmatprep.subr.mxu0 0.0
  %402 = vmatpush1.msra.mxu0 0.0
  %403 = vmatprep.subr.mxu0 0.0
  %404 = vmatpush1.msra.mxu0 0.0
  %405 = vmatprep.subr.mxu0 0.0
  %406 = vmatpush1.msra.mxu0 0.0
  %407 = vmatprep.subr.mxu0 0.0
  %408 = vmatpush1.msra.mxu0 0.0
  %409 = vmatprep.subr.mxu0 0.0
  %410 = vmatpush1.msra.mxu0 0.0
  %411 = vmatprep.subr.mxu0 0.0
  %412 = vmatpush1.msra.mxu0 0.0
  %413 = vmatprep.subr.mxu0 0.0
  %414 = vmatpush1.msra.mxu0 0.0
  %415 = vmatprep.subr.mxu0 0.0
  %416 = vmatpush1.msra.mxu0 0.0
  %417 = vmatprep.subr.mxu0 0.0
  %418 = vmatpush1.msra.mxu0 0.0
  %419 = vmatprep.subr.mxu0 0.0
  %420 = vmatpush1.msra.mxu0 0.0
  %421 = vmatprep.subr.mxu0 0.0
  %422 = vmatpush1.msra.mxu0 0.0
  %423 = vmatprep.mubr.f32.mxu0 0.0
  %424 = vmatmul.mubr.f32.gmra.mrb[0].mxu0 %v145
  %v425 = vpop.f32.mrb[0].mxu0
  %v426 = vadd.f32 0.0, %v425
  %v427 = vpop.f32.mrb[0].mxu0
  %428 = vdwg.mxu0
  %v429 = vadd.f32 %v214, %v355
  %v430 = vmul.f32 %v429, 0.5
  %v431 = vtanh.pop %v430
  %v432 = vmul.f32 %v431, 0.5
  %v433 = vadd.f32 %v432, 0.5
  %v434 = vadd.f32 %v216, %v357
  %v435 = vmul.f32 %v434, 0.5
  %v436 = vtanh.pop %v435
  %v437 = vmul.f32 %v436, 0.5
  %v438 = vadd.f32 %v437, 0.5
  %v439 = vadd.f32 %v426, %v143
  %v440 = vmul.f32 %v433, %v439
  %v441 = vadd.f32 %v285, %v440
  %v442 = vtanh.pop %v441
  %v443 = vsub.f32 1.0, %v438
  %v444 = vmul.f32 %v443, %v442
  %v445 = vmul.f32 %v438, %v145
  %v446 = vadd.f32 %v444, %v445
  %447 = vst [vmem:[%s5] sm:$0xff] %v446
  %s448 = scalar_lea.vmem %s0, 8
  %v449 = vld [vmem:[%s448] sm:$0xff]
  %450 = vmatprep.subr.mxu0 %v26
  %451 = vmatpush1.msra.mxu0 %v25
  %452 = vmatprep.subr.mxu0 %v29
  %453 = vmatpush1.msra.mxu0 %v28
  %454 = vmatprep.subr.mxu0 %v32
  %455 = vmatpush1.msra.mxu0 %v31
  %456 = vmatprep.subr.mxu0 %v35
  %457 = vmatpush1.msra.mxu0 %v34
  %458 = vmatprep.subr.mxu0 %v38
  %459 = vmatpush1.msra.mxu0 %v37
  %460 = vmatprep.subr.mxu0 %v41
  %461 = vmatpush1.msra.mxu0 %v40
  %462 = vmatprep.subr.mxu0 %v44
  %463 = vmatpush1.msra.mxu0 %v43
  %464 = vmatprep.subr.mxu0 %v47
  %465 = vmatpush1.msra.mxu0 %v46
  %466 = vmatprep.subr.mxu0 %v50
  %467 = vmatpush1.msra.mxu0 %v49
  %468 = vmatprep.subr.mxu0 %v53
  %469 = vmatpush1.msra.mxu0 %v52
  %470 = vmatprep.subr.mxu0 %v56
  %471 = vmatpush1.msra.mxu0 %v55
  %472 = vmatprep.subr.mxu0 %v59
  %473 = vmatpush1.msra.mxu0 %v58
  %474 = vmatprep.subr.mxu0 %v62
  %475 = vmatpush1.msra.mxu0 %v61
  %476 = vmatprep.subr.mxu0 %v65
  %477 = vmatpush1.msra.mxu0 %v64
  %478 = vmatprep.subr.mxu0 %v68
  %479 = vmatpush1.msra.mxu0 %v67
  %480 = vmatprep.subr.mxu0 %v71
  %481 = vmatpush1.msra.mxu0 %v70
  %482 = vmatprep.subr.mxu0 0.0
  %483 = vmatpush1.msra.mxu0 0.0
  %484 = vmatprep.subr.mxu0 0.0
  %485 = vmatpush1.msra.mxu0 0.0
  %486 = vmatprep.subr.mxu0 0.0
  %487 = vmatpush1.msra.mxu0 0.0
  %488 = vmatprep.subr.mxu0 0.0
  %489 = vmatpush1.msra.mxu0 0.0
  %490 = vmatprep.subr.mxu0 0.0
  %491 = vmatpush1.msra.mxu0 0.0
  %492 = vmatprep.subr.mxu0 0.0
  %493 = vmatpush1.msra.mxu0 0.0
  %494 = vmatprep.subr.mxu0 0.0
  %495 = vmatpush1.msra.mxu0 0.0
  %496 = vmatprep.subr.mxu0 0.0
  %497 = vmatpush1.msra.mxu0 0.0
  %498 = vmatprep.subr.mxu0 0.0
  %499 = vmatpush1.msra.mxu0 0.0
  %500 = vmatprep.subr.mxu0 0.0
  %501 = vmatpush1.msra.mxu0 0.0
  %502 = vmatprep.subr.mxu0 0.0
  %503 = vmatpush1.msra.mxu0 0.0
  %504 = vmatprep.subr.mxu0 0.0
  %505 = vmatpush1.msra.mxu0 0.0
  %506 = vmatprep.subr.mxu0 0.0
  %507 = vmatpush1.msra.mxu0 0.0
  %508 = vmatprep.subr.mxu0 0.0
  %509 = vmatpush1.msra.mxu0 0.0
  %510 = vmatprep.subr.mxu0 0.0
  %511 = vmatpush1.msra.mxu0 0.0
  %512 = vmatprep.subr.mxu0 0.0
  %513 = vmatpush1.msra.mxu0 0.0
  %514 = vmatprep.mubr.f32.mxu0 0.0
  %515 = vmatmul.mubr.f32.gmra.mrb[0].mxu0 %v449
  %v516 = vpop.f32.mrb[0].mxu0
  %v517 = vadd.f32 %v126, %v516
  %v518 = vpop.f32.mrb[0].mxu0
  %v519 = vadd.f32 %v130, %v518
  %520 = vdwg.mxu0
  %521 = vmatprep.subr.mxu0 0.0
  %522 = vmatpush1.msra.mxu0 %v27
  %523 = vmatprep.subr.mxu0 0.0
  %524 = vmatpush1.msra.mxu0 %v30
  %525 = vmatprep.subr.mxu0 0.0
  %526 = vmatpush1.msra.mxu0 %v33
  %527 = vmatprep.subr.mxu0 0.0
  %528 = vmatpush1.msra.mxu0 %v36
  %529 = vmatprep.subr.mxu0 0.0
  %530 = vmatpush1.msra.mxu0 %v39
  %531 = vmatprep.subr.mxu0 0.0
  %532 = vmatpush1.msra.mxu0 %v42
  %533 = vmatprep.subr.mxu0 0.0
  %534 = vmatpush1.msra.mxu0 %v45
  %535 = vmatprep.subr.mxu0 0.0
  %536 = vmatpush1.msra.mxu0 %v48
  %537 = vmatprep.subr.mxu0 0.0
  %538 = vmatpush1.msra.mxu0 %v51
  %539 = vmatprep.subr.mxu0 0.0
  %540 = vmatpush1.msra.mxu0 %v54
  %541 = vmatprep.subr.mxu0 0.0
  %542 = vmatpush1.msra.mxu0 %v57
  %543 = vmatprep.subr.mxu0 0.0
  %544 = vmatpush1.msra.mxu0 %v60
  %545 = vmatprep.subr.mxu0 0.0
  %546 = vmatpush1.msra.mxu0 %v63
  %547 = vmatprep.subr.mxu0 0.0
  %548 = vmatpush1.msra.mxu0 %v66
  %549 = vmatprep.subr.mxu0 0.0
  %550 = vmatpush1.msra.mxu0 %v69
  %551 = vmatprep.subr.mxu0 0.0
  %552 = vmatpush1.msra.mxu0 %v72
  %553 = vmatprep.subr.mxu0 0.0
  %554 = vmatpush1.msra.mxu0 0.0
  %555 = vmatprep.subr.mxu0 0.0
  %556 = vmatpush1.msra.mxu0 0.0
  %557 = vmatprep.subr.mxu0 0.0
  %558 = vmatpush1.msra.mxu0 0.0
  %559 = vmatprep.subr.mxu0 0.0
  %560 = vmatpush1.msra.mxu0 0.0
  %561 = vmatprep.subr.mxu0 0.0
  %562 = vmatpush1.msra.mxu0 0.0
  %563 = vmatprep.subr.mxu0 0.0
  %564 = vmatpush1.msra.mxu0 0.0
  %565 = vmatprep.subr.mxu0 0.0
  %566 = vmatpush1.msra.mxu0 0.0
  %567 = vmatprep.subr.mxu0 0.0
  %568 = vmatpush1.msra.mxu0 0.0
  %569 = vmatprep.subr.mxu0 0.0
  %570 = vmatpush1.msra.mxu0 0.0
  %571 = vmatprep.subr.mxu0 0.0
  %572 = vmatpush1.msra.mxu0 0.0
  %573 = vmatprep.subr.mxu0 0.0
  %574 = vmatpush1.msra.mxu0 0.0
  %575 = vmatprep.subr.mxu0 0.0
  %576 = vmatpush1.msra.mxu0 0.0
  %577 = vmatprep.subr.mxu0 0.0
  %578 = vmatpush1.msra.mxu0 0.0
  %579 = vmatprep.subr.mxu0 0.0
  %580 = vmatpush1.msra.mxu0 0.0
  %581 = vmatprep.subr.mxu0 0.0
  %582 = vmatpush1.msra.mxu0 0.0
  %583 = vmatprep.subr.mxu0 0.0
  %584 = vmatpush1.msra.mxu0 0.0
  %585 = vmatprep.mubr.f32.mxu0 0.0
  %586 = vmatmul.mubr.f32.gmra.mrb[0].mxu0 %v449
  %v587 = vpop.f32.mrb[0].mxu0
  %v588 = vadd.f32 %v134, %v587
  %v589 = vpop.f32.mrb[0].mxu0
  %590 = vdwg.mxu0
  %591 = vmatprep.subr.mxu0 %v74
  %592 = vmatpush1.msra.mxu0 %v73
  %593 = vmatprep.subr.mxu0 %v77
  %594 = vmatpush1.msra.mxu0 %v76
  %595 = vmatprep.subr.mxu0 %v80
  %596 = vmatpush1.msra.mxu0 %v79
  %597 = vmatprep.subr.mxu0 %v83
  %598 = vmatpush1.msra.mxu0 %v82
  %599 = vmatprep.subr.mxu0 %v86
  %600 = vmatpush1.msra.mxu0 %v85
  %601 = vmatprep.subr.mxu0 %v89
  %602 = vmatpush1.msra.mxu0 %v88
  %603 = vmatprep.subr.mxu0 %v92
  %604 = vmatpush1.msra.mxu0 %v91
  %605 = vmatprep.subr.mxu0 %v95
  %606 = vmatpush1.msra.mxu0 %v94
  %607 = vmatprep.subr.mxu0 %v98
  %608 = vmatpush1.msra.mxu0 %v97
  %609 = vmatprep.subr.mxu0 %v101
  %610 = vmatpush1.msra.mxu0 %v100
  %611 = vmatprep.subr.mxu0 %v104
  %612 = vmatpush1.msra.mxu0 %v103
  %613 = vmatprep.subr.mxu0 %v107
  %614 = vmatpush1.msra.mxu0 %v106
  %615 = vmatprep.subr.mxu0 %v110
  %616 = vmatpush1.msra.mxu0 %v109
  %617 = vmatprep.subr.mxu0 %v113
  %618 = vmatpush1.msra.mxu0 %v112
  %619 = vmatprep.subr.mxu0 %v116
  %620 = vmatpush1.msra.mxu0 %v115
  %621 = vmatprep.subr.mxu0 %v119
  %622 = vmatpush1.msra.mxu0 %v118
  %623 = vmatprep.subr.mxu0 0.0
  %624 = vmatpush1.msra.mxu0 0.0
  %625 = vmatprep.subr.mxu0 0.0
  %626 = vmatpush1.msra.mxu0 0.0
  %627 = vmatprep.subr.mxu0 0.0
  %628 = vmatpush1.msra.mxu0 0.0
  %629 = vmatprep.subr.mxu0 0.0
  %630 = vmatpush1.msra.mxu0 0.0
  %631 = vmatprep.subr.mxu0 0.0
  %632 = vmatpush1.msra.mxu0 0.0
  %633 = vmatprep.subr.mxu0 0.0
  %634 = vmatpush1.msra.mxu0 0.0
  %635 = vmatprep.subr.mxu0 0.0
  %636 = vmatpush1.msra.mxu0 0.0
  %637 = vmatprep.subr.mxu0 0.0
  %638 = vmatpush1.msra.mxu0 0.0
  %639 = vmatprep.subr.mxu0 0.0
  %640 = vmatpush1.msra.mxu0 0.0
  %641 = vmatprep.subr.mxu0 0.0
  %642 = vmatpush1.msra.mxu0 0.0
  %643 = vmatprep.subr.mxu0 0.0
  %644 = vmatpush1.msra.mxu0 0.0
  %645 = vmatprep.subr.mxu0 0.0
  %646 = vmatpush1.msra.mxu0 0.0
  %647 = vmatprep.subr.mxu0 0.0
  %648 = vmatpush1.msra.mxu0 0.0
  %649 = vmatprep.subr.mxu0 0.0
  %650 = vmatpush1.msra.mxu0 0.0
  %651 = vmatprep.subr.mxu0 0.0
  %652 = vmatpush1.msra.mxu0 0.0
  %653 = vmatprep.subr.mxu0 0.0
  %654 = vmatpush1.msra.mxu0 0.0
  %655 = vmatprep.mubr.f32.mxu0 0.0
  %656 = vmatmul.mubr.f32.gmra.mrb[0].mxu0 %v446
  %v657 = vpop.f32.mrb[0].mxu0
  %v658 = vadd.f32 0.0, %v657
  %v659 = vpop.f32.mrb[0].mxu0
  %v660 = vadd.f32 0.0, %v659
  %661 = vdwg.mxu0
  %662 = vmatprep.subr.mxu0 0.0
  %663 = vmatpush1.msra.mxu0 %v75
  %664 = vmatprep.subr.mxu0 0.0
  %665 = vmatpush1.msra.mxu0 %v78
  %666 = vmatprep.subr.mxu0 0.0
  %667 = vmatpush1.msra.mxu0 %v81
  %668 = vmatprep.subr.mxu0 0.0
  %669 = vmatpush1.msra.mxu0 %v84
  %670 = vmatprep.subr.mxu0 0.0
  %671 = vmatpush1.msra.mxu0 %v87
  %672 = vmatprep.subr.mxu0 0.0
  %673 = vmatpush1.msra.mxu0 %v90
  %674 = vmatprep.subr.mxu0 0.0
  %675 = vmatpush1.msra.mxu0 %v93
  %676 = vmatprep.subr.mxu0 0.0
  %677 = vmatpush1.msra.mxu0 %v96
  %678 = vmatprep.subr.mxu0 0.0
  %679 = vmatpush1.msra.mxu0 %v99
  %680 = vmatprep.subr.mxu0 0.0
  %681 = vmatpush1.msra.mxu0 %v102
  %682 = vmatprep.subr.mxu0 0.0
  %683 = vmatpush1.msra.mxu0 %v105
  %684 = vmatprep.subr.mxu0 0.0
  %685 = vmatpush1.msra.mxu0 %v108
  %686 = vmatprep.subr.mxu0 0.0
  %687 = vmatpush1.msra.mxu0 %v111
  %688 = vmatprep.subr.mxu0 0.0
  %689 = vmatpush1.msra.mxu0 %v114
  %690 = vmatprep.subr.mxu0 0.0
  %691 = vmatpush1.msra.mxu0 %v117
  %692 = vmatprep.subr.mxu0 0.0
  %693 = vmatpush1.msra.mxu0 %v120
  %694 = vmatprep.subr.mxu0 0.0
  %695 = vmatpush1.msra.mxu0 0.0
  %696 = vmatprep.subr.mxu0 0.0
  %697 = vmatpush1.msra.mxu0 0.0
  %698 = vmatprep.subr.mxu0 0.0
  %699 = vmatpush1.msra.mxu0 0.0
  %700 = vmatprep.subr.mxu0 0.0
  %701 = vmatpush1.msra.mxu0 0.0
  %702 = vmatprep.subr.mxu0 0.0
  %703 = vmatpush1.msra.mxu0 0.0
  %704 = vmatprep.subr.mxu0 0.0
  %705 = vmatpush1.msra.mxu0 0.0
  %706 = vmatprep.subr.mxu0 0.0
  %707 = vmatpush1.msra.mxu0 0.0
  %708 = vmatprep.subr.mxu0 0.0
  %709 = vmatpush1.msra.mxu0 0.0
  %710 = vmatprep.subr.mxu0 0.0
  %711 = vmatpush1.msra.mxu0 0.0
  %712 = vmatprep.subr.mxu0 0.0
  %713 = vmatpush1.msra.mxu0 0.0
  %714 = vmatprep.subr.mxu0 0.0
  %715 = vmatpush1.msra.mxu0 0.0
  %716 = vmatprep.subr.mxu0 0.0
  %717 = vmatpush1.msra.mxu0 0.0
  %718 = vmatprep.subr.mxu0 0.0
  %719 = vmatpush1.msra.mxu0 0.0
  %720 = vmatprep.subr.mxu0 0.0
  %721 = vmatpush1.msra.mxu0 0.0
  %722 = vmatprep.subr.mxu0 0.0
  %723 = vmatpush1.msra.mxu0 0.0
  %724 = vmatprep.subr.mxu0 0.0
  %725 = vmatpush1.msra.mxu0 0.0
  %726 = vmatprep.mubr.f32.mxu0 0.0
  %727 = vmatmul.mubr.f32.gmra.mrb[0].mxu0 %v446
  %v728 = vpop.f32.mrb[0].mxu0
  %v729 = vadd.f32 0.0, %v728
  %v730 = vpop.f32.mrb[0].mxu0
  %731 = vdwg.mxu0
  %v732 = vadd.f32 %v517, %v658
  %v733 = vmul.f32 %v732, 0.5
  %v734 = vtanh.pop %v733
  %v735 = vmul.f32 %v734, 0.5
  %v736 = vadd.f32 %v735, 0.5
  %v737 = vadd.f32 %v519, %v660
  %v738 = vmul.f32 %v737, 0.5
  %v739 = vtanh.pop %v738
  %v740 = vmul.f32 %v739, 0.5
  %v741 = vadd.f32 %v740, 0.5
  %v742 = vadd.f32 %v729, %v143
  %v743 = vmul.f32 %v736, %v742
  %v744 = vadd.f32 %v588, %v743
  %v745 = vtanh.pop %v744
  %v746 = vsub.f32 1.0, %v741
  %v747 = vmul.f32 %v746, %v745
  %v748 = vmul.f32 %v741, %v446
  %v749 = vadd.f32 %v747, %v748
  %s750 = scalar_lea.vmem %s5, 8
  %751 = vst [vmem:[%s750] sm:$0xff] %v749
  %s752 = scalar_lea.vmem %s0, 16
  %v753 = vld [vmem:[%s752] sm:$0xff]
  %754 = vmatprep.subr.mxu0 %v26
  %755 = vmatpush1.msra.mxu0 %v25
  %756 = vmatprep.subr.mxu0 %v29
  %757 = vmatpush1.msra.mxu0 %v28
  %758 = vmatprep.subr.mxu0 %v32
  %759 = vmatpush1.msra.mxu0 %v31
  %760 = vmatprep.subr.mxu0 %v35
  %761 = vmatpush1.msra.mxu0 %v34
  %762 = vmatprep.subr.mxu0 %v38
  %763 = vmatpush1.msra.mxu0 %v37
  %764 = vmatprep.subr.mxu0 %v41
  %765 = vmatpush1.msra.mxu0 %v40
  %766 = vmatprep.subr.mxu0 %v44
  %767 = vmatpush1.msra.mxu0 %v43
  %768 = vmatprep.subr.mxu0 %v47
  %769 = vmatpush1.msra.mxu0 %v46
  %770 = vmatprep.subr.mxu0 %v50
  %771 = vmatpush1.msra.mxu0 %v49
  %772 = vmatprep.subr.mxu0 %v53
  %773 = vmatpush1.msra.mxu0 %v52
  %774 = vmatprep.subr.mxu0 %v56
  %775 = vmatpush1.msra.mxu0 %v55
  %776 = vmatprep.subr.mxu0 %v59
  %777 = vmatpush1.msra.mxu0 %v58
  %778 = vmatprep.subr.mxu0 %v62
  %779 = vmatpush1.msra.mxu0 %v61
  %780 = vmatprep.subr.mxu0 %v65
  %781 = vmatpush1.msra.mxu0 %v64
  %782 = vmatprep.subr.mxu0 %v68
  %783 = vmatpush1.msra.mxu0 %v67
  %784 = vmatprep.subr.mxu0 %v71
  %785 = vmatpush1.msra.mxu0 %v70
  %786 = vmatprep.subr.mxu0 0.0
  %787 = vmatpush1.msra.mxu0 0.0
  %788 = vmatprep.subr.mxu0 0.0
  %789 = vmatpush1.msra.mxu0 0.0
  %790 = vmatprep.subr.mxu0 0.0
  %791 = vmatpush1.msra.mxu0 0.0
  %792 = vmatprep.subr.mxu0 0.0
  %793 = vmatpush1.msra.mxu0 0.0
  %794 = vmatprep.subr.mxu0 0.0
  %795 = vmatpush1.msra.mxu0 0.0
  %796 = vmatprep.subr.mxu0 0.0
  %797 = vmatpush1.msra.mxu0 0.0
  %798 = vmatprep.subr.mxu0 0.0
  %799 = vmatpush1.msra.mxu0 0.0
  %800 = vmatprep.subr.mxu0 0.0
  %801 = vmatpush1.msra.mxu0 0.0
  %802 = vmatprep.subr.mxu0 0.0
  %803 = vmatpush1.msra.mxu0 0.0
  %804 = vmatprep.subr.mxu0 0.0
  %805 = vmatpush1.msra.mxu0 0.0
  %806 = vmatprep.subr.mxu0 0.0
  %807 = vmatpush1.msra.mxu0 0.0
  %808 = vmatprep.subr.mxu0 0.0
  %809 = vmatpush1.msra.mxu0 0.0
  %810 = vmatprep.subr.mxu0 0.0
  %811 = vmatpush1.msra.mxu0 0.0
  %812 = vmatprep.subr.mxu0 0.0
  %813 = vmatpush1.msra.mxu0 0.0
  %814 = vmatprep.subr.mxu0 0.0
  %815 = vmatpush1.msra.mxu0 0.0
  %816 = vmatprep.subr.mxu0 0.0
  %817 = vmatpush1.msra.mxu0 0.0
  %818 = vmatprep.mubr.f32.mxu0 0.0
  %819 = vmatmul.mubr.f32.gmra.mrb[0].mxu0 %v753
  %v820 = vpop.f32.mrb[0].mxu0
  %v821 = vadd.f32 %v126, %v820
  %v822 = vpop.f32.mrb[0].mxu0
  %v823 = vadd.f32 %v130, %v822
  %824 = vdwg.mxu0
  %825 = vmatprep.subr.mxu0 0.0
  %826 = vmatpush1.msra.mxu0 %v27
  %827 = vmatprep.subr.mxu0 0.0
  %828 = vmatpush1.msra.mxu0 %v30
  %829 = vmatprep.subr.mxu0 0.0
  %830 = vmatpush1.msra.mxu0 %v33
  %831 = vmatprep.subr.mxu0 0.0
  %832 = vmatpush1.msra.mxu0 %v36
  %833 = vmatprep.subr.mxu0 0.0
  %834 = vmatpush1.msra.mxu0 %v39
  %835 = vmatprep.subr.mxu0 0.0
  %836 = vmatpush1.msra.mxu0 %v42
  %837 = vmatprep.subr.mxu0 0.0
  %838 = vmatpush1.msra.mxu0 %v45
  %839 = vmatprep.subr.mxu0 0.0
  %840 = vmatpush1.msra.mxu0 %v48
  %841 = vmatprep.subr.mxu0 0.0
  %842 = vmatpush1.msra.mxu0 %v51
  %843 = vmatprep.subr.mxu0 0.0
  %844 = vmatpush1.msra.mxu0 %v54
  %845 = vmatprep.subr.mxu0 0.0
  %846 = vmatpush1.msra.mxu0 %v57
  %847 = vmatprep.subr.mxu0 0.0
  %848 = vmatpush1.msra.mxu0 %v60
  %849 = vmatprep.subr.mxu0 0.0
  %850 = vmatpush1.msra.mxu0 %v63
  %851 = vmatprep.subr.mxu0 0.0
  %852 = vmatpush1.msra.mxu0 %v66
  %853 = vmatprep.subr.mxu0 0.0
  %854 = vmatpush1.msra.mxu0 %v69
  %855 = vmatprep.subr.mxu0 0.0
  %856 = vmatpush1.msra.mxu0 %v72
  %857 = vmatprep.subr.mxu0 0.0
  %858 = vmatpush1.msra.mxu0 0.0
  %859 = vmatprep.subr.mxu0 0.0
  %860 = vmatpush1.msra.mxu0 0.0
  %861 = vmatprep.subr.mxu0 0.0
  %862 = vmatpush1.msra.mxu0 0.0
  %863 = vmatprep.subr.mxu0 0.0
  %864 = vmatpush1.msra.mxu0 0.0
  %865 = vmatprep.subr.mxu0 0.0
  %866 = vmatpush1.msra.mxu0 0.0
  %867 = vmatprep.subr.mxu0 0.0
  %868 = vmatpush1.msra.mxu0 0.0
  %869 = vmatprep.subr.mxu0 0.0
  %870 = vmatpush1.msra.mxu0 0.0
  %871 = vmatprep.subr.mxu0 0.0
  %872 = vmatpush1.msra.mxu0 0.0
  %873 = vmatprep.subr.mxu0 0.0
  %874 = vmatpush1.msra.mxu0 0.0
  %875 = vmatprep.subr.mxu0 0.0
  %876 = vmatpush1.msra.mxu0 0.0
  %877 = vmatprep.subr.mxu0 0.0
  %878 = vmatpush1.msra.mxu0 0.0
  %879 = vmatprep.subr.mxu0 0.0
  %880 = vmatpush1.msra.mxu0 0.0
  %881 = vmatprep.subr.mxu0 0.0
  %882 = vmatpush1.msra.mxu0 0.0
  %883 = vmatprep.subr.mxu0 0.0
  %884 = vmatpush1.msra.mxu0 0.0
  %885 = vmatprep.subr.mxu0 0.0
  %886 = vmatpush1.msra.mxu0 0.0
  %887 = vmatprep.subr.mxu0 0.0
  %888 = vmatpush1.msra.mxu0 0.0
  %889 = vmatprep.mubr.f32.mxu0 0.0
  %890 = vmatmul.mubr.f32.gmra.mrb[0].mxu0 %v753
  %v891 = vpop.f32.mrb[0].mxu0
  %v892 = vadd.f32 %v134, %v891
  %v893 = vpop.f32.mrb[0].mxu0
  %894 = vdwg.mxu0
  %895 = vmatprep.subr.mxu0 %v74
  %896 = vmatpush1.msra.mxu0 %v73
  %897 = vmatprep.subr.mxu0 %v77
  %898 = vmatpush1.msra.mxu0 %v76
  %899 = vmatprep.subr.mxu0 %v80
  %900 = vmatpush1.msra.mxu0 %v79
  %901 = vmatprep.subr.mxu0 %v83
  %902 = vmatpush1.msra.mxu0 %v82
  %903 = vmatprep.subr.mxu0 %v86
  %904 = vmatpush1.msra.mxu0 %v85
  %905 = vmatprep.subr.mxu0 %v89
  %906 = vmatpush1.msra.mxu0 %v88
  %907 = vmatprep.subr.mxu0 %v92
  %908 = vmatpush1.msra.mxu0 %v91
  %909 = vmatprep.subr.mxu0 %v95
  %910 = vmatpush1.msra.mxu0 %v94
  %911 = vmatprep.subr.mxu0 %v98
  %912 = vmatpush1.msra.mxu0 %v97
  %913 = vmatprep.subr.mxu0 %v101
  %914 = vmatpush1.msra.mxu0 %v100
  %915 = vmatprep.subr.mxu0 %v104
  %916 = vmatpush1.msra.mxu0 %v103
  %917 = vmatprep.subr.mxu0 %v107
  %918 = vmatpush1.msra.mxu0 %v106
  %919 = vmatprep.subr.mxu0 %v110
  %920 = vmatpush1.msra.mxu0 %v109
  %921 = vmatprep.subr.mxu0 %v113
  %922 = vmatpush1.msra.mxu0 %v112
  %923 = vmatprep.subr.mxu0 %v116
  %924 = vmatpush1.msra.mxu0 %v115
  %925 = vmatprep.subr.mxu0 %v119
  %926 = vmatpush1.msra.mxu0 %v118
  %927 = vmatprep.subr.mxu0 0.0
  %928 = vmatpush1.msra.mxu0 0.0
  %929 = vmatprep.subr.mxu0 0.0
  %930 = vmatpush1.msra.mxu0 0.0
  %931 = vmatprep.subr.mxu0 0.0
  %932 = vmatpush1.msra.mxu0 0.0
  %933 = vmatprep.subr.mxu0 0.0
  %934 = vmatpush1.msra.mxu0 0.0
  %935 = vmatprep.subr.mxu0 0.0
  %936 = vmatpush1.msra.mxu0 0.0
  %937 = vmatprep.subr.mxu0 0.0
  %938 = vmatpush1.msra.mxu0 0.0
  %939 = vmatprep.subr.mxu0 0.0
  %940 = vmatpush1.msra.mxu0 0.0
  %941 = vmatprep.subr.mxu0 0.0
  %942 = vmatpush1.msra.mxu0 0.0
  %943 = vmatprep.subr.mxu0 0.0
  %944 = vmatpush1.msra.mxu0 0.0
  %945 = vmatprep.subr.mxu0 0.0
  %946 = vmatpush1.msra.mxu0 0.0
  %947 = vmatprep.subr.mxu0 0.0
  %948 = vmatpush1.msra.mxu0 0.0
  %949 = vmatprep.subr.mxu0 0.0
  %950 = vmatpush1.msra.mxu0 0.0
  %951 = vmatprep.subr.mxu0 0.0
  %952 = vmatpush1.msra.mxu0 0.0
  %953 = vmatprep.subr.mxu0 0.0
  %954 = vmatpush1.msra.mxu0 0.0
  %955 = vmatprep.subr.mxu0 0.0
  %956 = vmatpush1.msra.mxu0 0.0
  %957 = vmatprep.subr.mxu0 0.0
  %958 = vmatpush1.msra.mxu0 0.0
  %959 = vmatprep.mubr.f32.mxu0 0.0
  %960 = vmatmul.mubr.f32.gmra.mrb[0].mxu0 %v749
  %v961 = vpop.f32.mrb[0].mxu0
  %v962 = vadd.f32 0.0, %v961
  %v963 = vpop.f32.mrb[0].mxu0
  %v964 = vadd.f32 0.0, %v963
  %965 = vdwg.mxu0
  %966 = vmatprep.subr.mxu0 0.0
  %967 = vmatpush1.msra.mxu0 %v75
  %968 = vmatprep.subr.mxu0 0.0
  %969 = vmatpush1.msra.mxu0 %v78
  %970 = vmatprep.subr.mxu0 0.0
  %971 = vmatpush1.msra.mxu0 %v81
  %972 = vmatprep.subr.mxu0 0.0
  %973 = vmatpush1.msra.mxu0 %v84
  %974 = vmatprep.subr.mxu0 0.0
  %975 = vmatpush1.msra.mxu0 %v87
  %976 = vmatprep.subr.mxu0 0.0
  %977 = vmatpush1.msra.mxu0 %v90
  %978 = vmatprep.subr.mxu0 0.0
  %979 = vmatpush1.msra.mxu0 %v93
  %980 = vmatprep.subr.mxu0 0.0
  %981 = vmatpush1.msra.mxu0 %v96
  %982 = vmatprep.subr.mxu0 0.0
  %983 = vmatpush1.msra.mxu0 %v99
  %984 = vmatprep.subr.mxu0 0.0
  %985 = vmatpush1.msra.mxu0 %v102
  %986 = vmatprep.subr.mxu0 0.0
  %987 = vmatpush1.msra.mxu0 %v105
  %988 = vmatprep.subr.mxu0 0.0
  %989 = vmatpush1.msra.mxu0 %v108
  %990 = vmatprep.subr.mxu0 0.0
  %991 = vmatpush1.msra.mxu0 %v111
  %992 = vmatprep.subr.mxu0 0.0
  %993 = vmatpush1.msra.mxu0 %v114
  %994 = vmatprep.subr.mxu0 0.0
  %995 = vmatpush1.msra.mxu0 %v117
  %996 = vmatprep.subr.mxu0 0.0
  %997 = vmatpush1.msra.mxu0 %v120
  %998 = vmatprep.subr.mxu0 0.0
  %999 = vmatpush1.msra.mxu0 0.0
  %1000 = vmatprep.subr.mxu0 0.0
  %1001 = vmatpush1.msra.mxu0 0.0
  %1002 = vmatprep.subr.mxu0 0.0
  %1003 = vmatpush1.msra.mxu0 0.0
  %1004 = vmatprep.subr.mxu0 0.0
  %1005 = vmatpush1.msra.mxu0 0.0
  %1006 = vmatprep.subr.mxu0 0.0
  %1007 = vmatpush1.msra.mxu0 0.0
  %1008 = vmatprep.subr.mxu0 0.0
  %1009 = vmatpush1.msra.mxu0 0.0
  %1010 = vmatprep.subr.mxu0 0.0
  %1011 = vmatpush1.msra.mxu0 0.0
  %1012 = vmatprep.subr.mxu0 0.0
  %1013 = vmatpush1.msra.mxu0 0.0
  %1014 = vmatprep.subr.mxu0 0.0
  %1015 = vmatpush1.msra.mxu0 0.0
  %1016 = vmatprep.subr.mxu0 0.0
  %1017 = vmatpush1.msra.mxu0 0.0
  %1018 = vmatprep.subr.mxu0 0.0
  %1019 = vmatpush1.msra.mxu0 0.0
  %1020 = vmatprep.subr.mxu0 0.0
  %1021 = vmatpush1.msra.mxu0 0.0
  %1022 = vmatprep.subr.mxu0 0.0
  %1023 = vmatpush1.msra.mxu0 0.0
  %1024 = vmatprep.subr.mxu0 0.0
  %1025 = vmatpush1.msra.mxu0 0.0
  %1026 = vmatprep.subr.mxu0 0.0
  %1027 = vmatpush1.msra.mxu0 0.0
  %1028 = vmatprep.subr.mxu0 0.0
  %1029 = vmatpush1.msra.mxu0 0.0
  %1030 = vmatprep.mubr.f32.mxu0 0.0
  %1031 = vmatmul.mubr.f32.gmra.mrb[0].mxu0 %v749
  %v1032 = vpop.f32.mrb[0].mxu0
  %v1033 = vadd.f32 0.0, %v1032
  %v1034 = vpop.f32.mrb[0].mxu0
  %1035 = vdwg.mxu0
  %v1036 = vadd.f32 %v821, %v962
  %v1037 = vmul.f32 %v1036, 0.5
  %v1038 = vtanh.pop %v1037
  %v1039 = vmul.f32 %v1038, 0.5
  %v1040 = vadd.f32 %v1039, 0.5
  %v1041 = vadd.f32 %v823, %v964
  %v1042 = vmul.f32 %v1041, 0.5
  %v1043 = vtanh.pop %v1042
  %v1044 = vmul.f32 %v1043, 0.5
  %v1045 = vadd.f32 %v1044, 0.5
  %v1046 = vadd.f32 %v1033, %v143
  %v1047 = vmul.f32 %v1040, %v1046
  %v1048 = vadd.f32 %v892, %v1047
  %v1049 = vtanh.pop %v1048
  %v1050 = vsub.f32 1.0, %v1045
  %v1051 = vmul.f32 %v1050, %v1049
  %v1052 = vmul.f32 %v1045, %v749
  %v1053 = vadd.f32 %v1051, %v1052
  %s1054 = scalar_lea.vmem %s5, 16
  %1055 = vst [vmem:[%s1054] sm:$0xff] %v1053
  %s1056 = scalar_lea.vmem %s0, 24
  %v1057 = vld [vmem:[%s1056] sm:$0xff]
  %1058 = vmatprep.subr.mxu0 %v26
  %1059 = vmatpush1.msra.mxu0 %v25
  %1060 = vmatprep.subr.mxu0 %v29
  %1061 = vmatpush1.msra.mxu0 %v28
  %1062 = vmatprep.subr.mxu0 %v32
  %1063 = vmatpush1.msra.mxu0 %v31
  %1064 = vmatprep.subr.mxu0 %v35
  %1065 = vmatpush1.msra.mxu0 %v34
  %1066 = vmatprep.subr.mxu0 %v38
  %1067 = vmatpush1.msra.mxu0 %v37
  %1068 = vmatprep.subr.mxu0 %v41
  %1069 = vmatpush1.msra.mxu0 %v40
  %1070 = vmatprep.subr.mxu0 %v44
  %1071 = vmatpush1.msra.mxu0 %v43
  %1072 = vmatprep.subr.mxu0 %v47
  %1073 = vmatpush1.msra.mxu0 %v46
  %1074 = vmatprep.subr.mxu0 %v50
  %1075 = vmatpush1.msra.mxu0 %v49
  %1076 = vmatprep.subr.mxu0 %v53
  %1077 = vmatpush1.msra.mxu0 %v52
  %1078 = vmatprep.subr.mxu0 %v56
  %1079 = vmatpush1.msra.mxu0 %v55
  %1080 = vmatprep.subr.mxu0 %v59
  %1081 = vmatpush1.msra.mxu0 %v58
  %1082 = vmatprep.subr.mxu0 %v62
  %1083 = vmatpush1.msra.mxu0 %v61
  %1084 = vmatprep.subr.mxu0 %v65
  %1085 = vmatpush1.msra.mxu0 %v64
  %1086 = vmatprep.subr.mxu0 %v68
  %1087 = vmatpush1.msra.mxu0 %v67
  %1088 = vmatprep.subr.mxu0 %v71
  %1089 = vmatpush1.msra.mxu0 %v70
  %1090 = vmatprep.subr.mxu0 0.0
  %1091 = vmatpush1.msra.mxu0 0.0
  %1092 = vmatprep.subr.mxu0 0.0
  %1093 = vmatpush1.msra.mxu0 0.0
  %1094 = vmatprep.subr.mxu0 0.0
  %1095 = vmatpush1.msra.mxu0 0.0
  %1096 = vmatprep.subr.mxu0 0.0
  %1097 = vmatpush1.msra.mxu0 0.0
  %1098 = vmatprep.subr.mxu0 0.0
  %1099 = vmatpush1.msra.mxu0 0.0
  %1100 = vmatprep.subr.mxu0 0.0
  %1101 = vmatpush1.msra.mxu0 0.0
  %1102 = vmatprep.subr.mxu0 0.0
  %1103 = vmatpush1.msra.mxu0 0.0
  %1104 = vmatprep.subr.mxu0 0.0
  %1105 = vmatpush1.msra.mxu0 0.0
  %1106 = vmatprep.subr.mxu0 0.0
  %1107 = vmatpush1.msra.mxu0 0.0
  %1108 = vmatprep.subr.mxu0 0.0
  %1109 = vmatpush1.msra.mxu0 0.0
  %1110 = vmatprep.subr.mxu0 0.0
  %1111 = vmatpush1.msra.mxu0 0.0
  %1112 = vmatprep.subr.mxu0 0.0
  %1113 = vmatpush1.msra.mxu0 0.0
  %1114 = vmatprep.subr.mxu0 0.0
  %1115 = vmatpush1.msra.mxu0 0.0
  %1116 = vmatprep.subr.mxu0 0.0
  %1117 = vmatpush1.msra.mxu0 0.0
  %1118 = vmatprep.subr.mxu0 0.0
  %1119 = vmatpush1.msra.mxu0 0.0
  %1120 = vmatprep.subr.mxu0 0.0
  %1121 = vmatpush1.msra.mxu0 0.0
  %1122 = vmatprep.mubr.f32.mxu0 0.0
  %1123 = vmatmul.mubr.f32.gmra.mrb[0].mxu0 %v1057
  %v1124 = vpop.f32.mrb[0].mxu0
  %v1125 = vadd.f32 %v126, %v1124
  %v1126 = vpop.f32.mrb[0].mxu0
  %v1127 = vadd.f32 %v130, %v1126
  %1128 = vdwg.mxu0
  %1129 = vmatprep.subr.mxu0 0.0
  %1130 = vmatpush1.msra.mxu0 %v27
  %1131 = vmatprep.subr.mxu0 0.0
  %1132 = vmatpush1.msra.mxu0 %v30
  %1133 = vmatprep.subr.mxu0 0.0
  %1134 = vmatpush1.msra.mxu0 %v33
  %1135 = vmatprep.subr.mxu0 0.0
  %1136 = vmatpush1.msra.mxu0 %v36
  %1137 = vmatprep.subr.mxu0 0.0
  %1138 = vmatpush1.msra.mxu0 %v39
  %1139 = vmatprep.subr.mxu0 0.0
  %1140 = vmatpush1.msra.mxu0 %v42
  %1141 = vmatprep.subr.mxu0 0.0
  %1142 = vmatpush1.msra.mxu0 %v45
  %1143 = vmatprep.subr.mxu0 0.0
  %1144 = vmatpush1.msra.mxu0 %v48
  %1145 = vmatprep.subr.mxu0 0.0
  %1146 = vmatpush1.msra.mxu0 %v51
  %1147 = vmatprep.subr.mxu0 0.0
  %1148 = vmatpush1.msra.mxu0 %v54
  %1149 = vmatprep.subr.mxu0 0.0
  %1150 = vmatpush1.msra.mxu0 %v57
  %1151 = vmatprep.subr.mxu0 0.0
  %1152 = vmatpush1.msra.mxu0 %v60
  %1153 = vmatprep.subr.mxu0 0.0
  %1154 = vmatpush1.msra.mxu0 %v63
  %1155 = vmatprep.subr.mxu0 0.0
  %1156 = vmatpush1.msra.mxu0 %v66
  %1157 = vmatprep.subr.mxu0 0.0
  %1158 = vmatpush1.msra.mxu0 %v69
  %1159 = vmatprep.subr.mxu0 0.0
  %1160 = vmatpush1.msra.mxu0 %v72
  %1161 = vmatprep.subr.mxu0 0.0
  %1162 = vmatpush1.msra.mxu0 0.0
  %1163 = vmatprep.subr.mxu0 0.0
  %1164 = vmatpush1.msra.mxu0 0.0
  %1165 = vmatprep.subr.mxu0 0.0
  %1166 = vmatpush1.msra.mxu0 0.0
  %1167 = vmatprep.subr.mxu0 0.0
  %1168 = vmatpush1.msra.mxu0 0.0
  %1169 = vmatprep.subr.mxu0 0.0
  %1170 = vmatpush1.msra.mxu0 0.0
  %1171 = vmatprep.subr.mxu0 0.0
  %1172 = vmatpush1.msra.mxu0 0.0
  %1173 = vmatprep.subr.mxu0 0.0
  %1174 = vmatpush1.msra.mxu0 0.0
  %1175 = vmatprep.subr.mxu0 0.0
  %1176 = vmatpush1.msra.mxu0 0.0
  %1177 = vmatprep.subr.mxu0 0.0
  %1178 = vmatpush1.msra.mxu0 0.0
  %1179 = vmatprep.subr.mxu0 0.0
  %1180 = vmatpush1.msra.mxu0 0.0
  %1181 = vmatprep.subr.mxu0 0.0
  %1182 = vmatpush1.msra.mxu0 0.0
  %1183 = vmatprep.subr.mxu0 0.0
  %1184 = vmatpush1.msra.mxu0 0.0
  %1185 = vmatprep.subr.mxu0 0.0
  %1186 = vmatpush1.msra.mxu0 0.0
  %1187 = vmatprep.subr.mxu0 0.0
  %1188 = vmatpush1.msra.mxu0 0.0
  %1189 = vmatprep.subr.mxu0 0.0
  %1190 = vmatpush1.msra.mxu0 0.0
  %1191 = vmatprep.subr.mxu0 0.0
  %1192 = vmatpush1.msra.mxu0 0.0
  %1193 = vmatprep.mubr.f32.mxu0 0.0
  %1194 = vmatmul.mubr.f32.gmra.mrb[0].mxu0 %v1057
  %v1195 = vpop.f32.mrb[0].mxu0
  %v1196 = vadd.f32 %v134, %v1195
  %v1197 = vpop.f32.mrb[0].mxu0
  %1198 = vdwg.mxu0
  %1199 = vmatprep.subr.mxu0 %v74
  %1200 = vmatpush1.msra.mxu0 %v73
  %1201 = vmatprep.subr.mxu0 %v77
  %1202 = vmatpush1.msra.mxu0 %v76
  %1203 = vmatprep.subr.mxu0 %v80
  %1204 = vmatpush1.msra.mxu0 %v79
  %1205 = vmatprep.subr.mxu0 %v83
  %1206 = vmatpush1.msra.mxu0 %v82
  %1207 = vmatprep.subr.mxu0 %v86
  %1208 = vmatpush1.msra.mxu0 %v85
  %1209 = vmatprep.subr.mxu0 %v89
  %1210 = vmatpush1.msra.mxu0 %v88
  %1211 = vmatprep.subr.mxu0 %v92
  %1212 = vmatpush1.msra.mxu0 %v91
  %1213 = vmatprep.subr.mxu0 %v95
  %1214 = vmatpush1.msra.mxu0 %v94
  %1215 = vmatprep.subr.mxu0 %v98
  %1216 = vmatpush1.msra.mxu0 %v97
  %1217 = vmatprep.subr.mxu0 %v101
  %1218 = vmatpush1.msra.mxu0 %v100
  %1219 = vmatprep.subr.mxu0 %v104
  %1220 = vmatpush1.msra.mxu0 %v103
  %1221 = vmatprep.subr.mxu0 %v107
  %1222 = vmatpush1.msra.mxu0 %v106
  %1223 = vmatprep.subr.mxu0 %v110
  %1224 = vmatpush1.msra.mxu0 %v109
  %1225 = vmatprep.subr.mxu0 %v113
  %1226 = vmatpush1.msra.mxu0 %v112
  %1227 = vmatprep.subr.mxu0 %v116
  %1228 = vmatpush1.msra.mxu0 %v115
  %1229 = vmatprep.subr.mxu0 %v119
  %1230 = vmatpush1.msra.mxu0 %v118
  %1231 = vmatprep.subr.mxu0 0.0
  %1232 = vmatpush1.msra.mxu0 0.0
  %1233 = vmatprep.subr.mxu0 0.0
  %1234 = vmatpush1.msra.mxu0 0.0
  %1235 = vmatprep.subr.mxu0 0.0
  %1236 = vmatpush1.msra.mxu0 0.0
  %1237 = vmatprep.subr.mxu0 0.0
  %1238 = vmatpush1.msra.mxu0 0.0
  %1239 = vmatprep.subr.mxu0 0.0
  %1240 = vmatpush1.msra.mxu0 0.0
  %1241 = vmatprep.subr.mxu0 0.0
  %1242 = vmatpush1.msra.mxu0 0.0
  %1243 = vmatprep.subr.mxu0 0.0
  %1244 = vmatpush1.msra.mxu0 0.0
  %1245 = vmatprep.subr.mxu0 0.0
  %1246 = vmatpush1.msra.mxu0 0.0
  %1247 = vmatprep.subr.mxu0 0.0
  %1248 = vmatpush1.msra.mxu0 0.0
  %1249 = vmatprep.subr.mxu0 0.0
  %1250 = vmatpush1.msra.mxu0 0.0
  %1251 = vmatprep.subr.mxu0 0.0
  %1252 = vmatpush1.msra.mxu0 0.0
  %1253 = vmatprep.subr.mxu0 0.0
  %1254 = vmatpush1.msra.mxu0 0.0
  %1255 = vmatprep.subr.mxu0 0.0
  %1256 = vmatpush1.msra.mxu0 0.0
  %1257 = vmatprep.subr.mxu0 0.0
  %1258 = vmatpush1.msra.mxu0 0.0
  %1259 = vmatprep.subr.mxu0 0.0
  %1260 = vmatpush1.msra.mxu0 0.0
  %1261 = vmatprep.subr.mxu0 0.0
  %1262 = vmatpush1.msra.mxu0 0.0
  %1263 = vmatprep.mubr.f32.mxu0 0.0
  %1264 = vmatmul.mubr.f32.gmra.mrb[0].mxu0 %v1053
  %v1265 = vpop.f32.mrb[0].mxu0
  %v1266 = vadd.f32 0.0, %v1265
  %v1267 = vpop.f32.mrb[0].mxu0
  %v1268 = vadd.f32 0.0, %v1267
  %1269 = vdwg.mxu0
  %1270 = vmatprep.subr.mxu0 0.0
  %1271 = vmatpush1.msra.mxu0 %v75
  %1272 = vmatprep.subr.mxu0 0.0
  %1273 = vmatpush1.msra.mxu0 %v78
  %1274 = vmatprep.subr.mxu0 0.0
  %1275 = vmatpush1.msra.mxu0 %v81
  %1276 = vmatprep.subr.mxu0 0.0
  %1277 = vmatpush1.msra.mxu0 %v84
  %1278 = vmatprep.subr.mxu0 0.0
  %1279 = vmatpush1.msra.mxu0 %v87
  %1280 = vmatprep.subr.mxu0 0.0
  %1281 = vmatpush1.msra.mxu0 %v90
  %1282 = vmatprep.subr.mxu0 0.0
  %1283 = vmatpush1.msra.mxu0 %v93
  %1284 = vmatprep.subr.mxu0 0.0
  %1285 = vmatpush1.msra.mxu0 %v96
  %1286 = vmatprep.subr.mxu0 0.0
  %1287 = vmatpush1.msra.mxu0 %v99
  %1288 = vmatprep.subr.mxu0 0.0
  %1289 = vmatpush1.msra.mxu0 %v102
  %1290 = vmatprep.subr.mxu0 0.0
  %1291 = vmatpush1.msra.mxu0 %v105
  %1292 = vmatprep.subr.mxu0 0.0
  %1293 = vmatpush1.msra.mxu0 %v108
  %1294 = vmatprep.subr.mxu0 0.0
  %1295 = vmatpush1.msra.mxu0 %v111
  %1296 = vmatprep.subr.mxu0 0.0
  %1297 = vmatpush1.msra.mxu0 %v114
  %1298 = vmatprep.subr.mxu0 0.0
  %1299 = vmatpush1.msra.mxu0 %v117
  %1300 = vmatprep.subr.mxu0 0.0
  %1301 = vmatpush1.msra.mxu0 %v120
  %1302 = vmatprep.subr.mxu0 0.0
  %1303 = vmatpush1.msra.mxu0 0.0
  %1304 = vmatprep.subr.mxu0 0.0
  %1305 = vmatpush1.msra.mxu0 0.0
  %1306 = vmatprep.subr.mxu0 0.0
  %1307 = vmatpush1.msra.mxu0 0.0
  %1308 = vmatprep.subr.mxu0 0.0
  %1309 = vmatpush1.msra.mxu0 0.0
  %1310 = vmatprep.subr.mxu0 0.0
  %1311 = vmatpush1.msra.mxu0 0.0
  %1312 = vmatprep.subr.mxu0 0.0
  %1313 = vmatpush1.msra.mxu0 0.0
  %1314 = vmatprep.subr.mxu0 0.0
  %1315 = vmatpush1.msra.mxu0 0.0
  %1316 = vmatprep.subr.mxu0 0.0
  %1317 = vmatpush1.msra.mxu0 0.0
  %1318 = vmatprep.subr.mxu0 0.0
  %1319 = vmatpush1.msra.mxu0 0.0
  %1320 = vmatprep.subr.mxu0 0.0
  %1321 = vmatpush1.msra.mxu0 0.0
  %1322 = vmatprep.subr.mxu0 0.0
  %1323 = vmatpush1.msra.mxu0 0.0
  %1324 = vmatprep.subr.mxu0 0.0
  %1325 = vmatpush1.msra.mxu0 0.0
  %1326 = vmatprep.subr.mxu0 0.0
  %1327 = vmatpush1.msra.mxu0 0.0
  %1328 = vmatprep.subr.mxu0 0.0
  %1329 = vmatpush1.msra.mxu0 0.0
  %1330 = vmatprep.subr.mxu0 0.0
  %1331 = vmatpush1.msra.mxu0 0.0
  %1332 = vmatprep.subr.mxu0 0.0
  %1333 = vmatpush1.msra.mxu0 0.0
  %1334 = vmatprep.mubr.f32.mxu0 0.0
  %1335 = vmatmul.mubr.f32.gmra.mrb[0].mxu0 %v1053
  %v1336 = vpop.f32.mrb[0].mxu0
  %v1337 = vadd.f32 0.0, %v1336
  %v1338 = vpop.f32.mrb[0].mxu0
  %1339 = vdwg.mxu0
  %v1340 = vadd.f32 %v1125, %v1266
  %v1341 = vmul.f32 %v1340, 0.5
  %v1342 = vtanh.pop %v1341
  %v1343 = vmul.f32 %v1342, 0.5
  %v1344 = vadd.f32 %v1343, 0.5
  %v1345 = vadd.f32 %v1127, %v1268
  %v1346 = vmul.f32 %v1345, 0.5
  %v1347 = vtanh.pop %v1346
  %v1348 = vmul.f32 %v1347, 0.5
  %v1349 = vadd.f32 %v1348, 0.5
  %v1350 = vadd.f32 %v1337, %v143
  %v1351 = vmul.f32 %v1344, %v1350
  %v1352 = vadd.f32 %v1196, %v1351
  %v1353 = vtanh.pop %v1352
  %v1354 = vsub.f32 1.0, %v1349
  %v1355 = vmul.f32 %v1354, %v1353
  %v1356 = vmul.f32 %v1349, %v1053
  %v1357 = vadd.f32 %v1355, %v1356
  %s1358 = scalar_lea.vmem %s5, 24
  %1359 = vst [vmem:[%s1358] sm:$0xff] %v1357
  %s1360 = scalar_lea.vmem %s0, 32
  %v1361 = vld [vmem:[%s1360] sm:$0xff]
  %1362 = vmatprep.subr.mxu0 %v26
  %1363 = vmatpush1.msra.mxu0 %v25
  %1364 = vmatprep.subr.mxu0 %v29
  %1365 = vmatpush1.msra.mxu0 %v28
  %1366 = vmatprep.subr.mxu0 %v32
  %1367 = vmatpush1.msra.mxu0 %v31
  %1368 = vmatprep.subr.mxu0 %v35
  %1369 = vmatpush1.msra.mxu0 %v34
  %1370 = vmatprep.subr.mxu0 %v38
  %1371 = vmatpush1.msra.mxu0 %v37
  %1372 = vmatprep.subr.mxu0 %v41
  %1373 = vmatpush1.msra.mxu0 %v40
  %1374 = vmatprep.subr.mxu0 %v44
  %1375 = vmatpush1.msra.mxu0 %v43
  %1376 = vmatprep.subr.mxu0 %v47
  %1377 = vmatpush1.msra.mxu0 %v46
  %1378 = vmatprep.subr.mxu0 %v50
  %1379 = vmatpush1.msra.mxu0 %v49
  %1380 = vmatprep.subr.mxu0 %v53
  %1381 = vmatpush1.msra.mxu0 %v52
  %1382 = vmatprep.subr.mxu0 %v56
  %1383 = vmatpush1.msra.mxu0 %v55
  %1384 = vmatprep.subr.mxu0 %v59
  %1385 = vmatpush1.msra.mxu0 %v58
  %1386 = vmatprep.subr.mxu0 %v62
  %1387 = vmatpush1.msra.mxu0 %v61
  %1388 = vmatprep.subr.mxu0 %v65
  %1389 = vmatpush1.msra.mxu0 %v64
  %1390 = vmatprep.subr.mxu0 %v68
  %1391 = vmatpush1.msra.mxu0 %v67
  %1392 = vmatprep.subr.mxu0 %v71
  %1393 = vmatpush1.msra.mxu0 %v70
  %1394 = vmatprep.subr.mxu0 0.0
  %1395 = vmatpush1.msra.mxu0 0.0
  %1396 = vmatprep.subr.mxu0 0.0
  %1397 = vmatpush1.msra.mxu0 0.0
  %1398 = vmatprep.subr.mxu0 0.0
  %1399 = vmatpush1.msra.mxu0 0.0
  %1400 = vmatprep.subr.mxu0 0.0
  %1401 = vmatpush1.msra.mxu0 0.0
  %1402 = vmatprep.subr.mxu0 0.0
  %1403 = vmatpush1.msra.mxu0 0.0
  %1404 = vmatprep.subr.mxu0 0.0
  %1405 = vmatpush1.msra.mxu0 0.0
  %1406 = vmatprep.subr.mxu0 0.0
  %1407 = vmatpush1.msra.mxu0 0.0
  %1408 = vmatprep.subr.mxu0 0.0
  %1409 = vmatpush1.msra.mxu0 0.0
  %1410 = vmatprep.subr.mxu0 0.0
  %1411 = vmatpush1.msra.mxu0 0.0
  %1412 = vmatprep.subr.mxu0 0.0
  %1413 = vmatpush1.msra.mxu0 0.0
  %1414 = vmatprep.subr.mxu0 0.0
  %1415 = vmatpush1.msra.mxu0 0.0
  %1416 = vmatprep.subr.mxu0 0.0
  %1417 = vmatpush1.msra.mxu0 0.0
  %1418 = vmatprep.subr.mxu0 0.0
  %1419 = vmatpush1.msra.mxu0 0.0
  %1420 = vmatprep.subr.mxu0 0.0
  %1421 = vmatpush1.msra.mxu0 0.0
  %1422 = vmatprep.subr.mxu0 0.0
  %1423 = vmatpush1.msra.mxu0 0.0
  %1424 = vmatprep.subr.mxu0 0.0
  %1425 = vmatpush1.msra.mxu0 0.0
  %1426 = vmatprep.mubr.f32.mxu0 0.0
  %1427 = vmatmul.mubr.f32.gmra.mrb[0].mxu0 %v1361
  %v1428 = vpop.f32.mrb[0].mxu0
  %v1429 = vadd.f32 %v126, %v1428
  %v1430 = vpop.f32.mrb[0].mxu0
  %v1431 = vadd.f32 %v130, %v1430
  %1432 = vdwg.mxu0
  %1433 = vmatprep.subr.mxu0 0.0
  %1434 = vmatpush1.msra.mxu0 %v27
  %1435 = vmatprep.subr.mxu0 0.0
  %1436 = vmatpush1.msra.mxu0 %v30
  %1437 = vmatprep.subr.mxu0 0.0
  %1438 = vmatpush1.msra.mxu0 %v33
  %1439 = vmatprep.subr.mxu0 0.0
  %1440 = vmatpush1.msra.mxu0 %v36
  %1441 = vmatprep.subr.mxu0 0.0
  %1442 = vmatpush1.msra.mxu0 %v39
  %1443 = vmatprep.subr.mxu0 0.0
  %1444 = vmatpush1.msra.mxu0 %v42
  %1445 = vmatprep.subr.mxu0 0.0
  %1446 = vmatpush1.msra.mxu0 %v45
  %1447 = vmatprep.subr.mxu0 0.0
  %1448 = vmatpush1.msra.mxu0 %v48
  %1449 = vmatprep.subr.mxu0 0.0
  %1450 = vmatpush1.msra.mxu0 %v51
  %1451 = vmatprep.subr.mxu0 0.0
  %1452 = vmatpush1.msra.mxu0 %v54
  %1453 = vmatprep.subr.mxu0 0.0
  %1454 = vmatpush1.msra.mxu0 %v57
  %1455 = vmatprep.subr.mxu0 0.0
  %1456 = vmatpush1.msra.mxu0 %v60
  %1457 = vmatprep.subr.mxu0 0.0
  %1458 = vmatpush1.msra.mxu0 %v63
  %1459 = vmatprep.subr.mxu0 0.0
  %1460 = vmatpush1.msra.mxu0 %v66
  %1461 = vmatprep.subr.mxu0 0.0
  %1462 = vmatpush1.msra.mxu0 %v69
  %1463 = vmatprep.subr.mxu0 0.0
  %1464 = vmatpush1.msra.mxu0 %v72
  %1465 = vmatprep.subr.mxu0 0.0
  %1466 = vmatpush1.msra.mxu0 0.0
  %1467 = vmatprep.subr.mxu0 0.0
  %1468 = vmatpush1.msra.mxu0 0.0
  %1469 = vmatprep.subr.mxu0 0.0
  %1470 = vmatpush1.msra.mxu0 0.0
  %1471 = vmatprep.subr.mxu0 0.0
  %1472 = vmatpush1.msra.mxu0 0.0
  %1473 = vmatprep.subr.mxu0 0.0
  %1474 = vmatpush1.msra.mxu0 0.0
  %1475 = vmatprep.subr.mxu0 0.0
  %1476 = vmatpush1.msra.mxu0 0.0
  %1477 = vmatprep.subr.mxu0 0.0
  %1478 = vmatpush1.msra.mxu0 0.0
  %1479 = vmatprep.subr.mxu0 0.0
  %1480 = vmatpush1.msra.mxu0 0.0
  %1481 = vmatprep.subr.mxu0 0.0
  %1482 = vmatpush1.msra.mxu0 0.0
  %1483 = vmatprep.subr.mxu0 0.0
  %1484 = vmatpush1.msra.mxu0 0.0
  %1485 = vmatprep.subr.mxu0 0.0
  %1486 = vmatpush1.msra.mxu0 0.0
  %1487 = vmatprep.subr.mxu0 0.0
  %1488 = vmatpush1.msra.mxu0 0.0
  %1489 = vmatprep.subr.mxu0 0.0
  %1490 = vmatpush1.msra.mxu0 0.0
  %1491 = vmatprep.subr.mxu0 0.0
  %1492 = vmatpush1.msra.mxu0 0.0
  %1493 = vmatprep.subr.mxu0 0.0
  %1494 = vmatpush1.msra.mxu0 0.0
  %1495 = vmatprep.subr.mxu0 0.0
  %1496 = vmatpush1.msra.mxu0 0.0
  %1497 = vmatprep.mubr.f32.mxu0 0.0
  %1498 = vmatmul.mubr.f32.gmra.mrb[0].mxu0 %v1361
  %v1499 = vpop.f32.mrb[0].mxu0
  %v1500 = vadd.f32 %v134, %v1499
  %v1501 = vpop.f32.mrb[0].mxu0
  %1502 = vdwg.mxu0
  %1503 = vmatprep.subr.mxu0 %v74
  %1504 = vmatpush1.msra.mxu0 %v73
  %1505 = vmatprep.subr.mxu0 %v77
  %1506 = vmatpush1.msra.mxu0 %v76
  %1507 = vmatprep.subr.mxu0 %v80
  %1508 = vmatpush1.msra.mxu0 %v79
  %1509 = vmatprep.subr.mxu0 %v83
  %1510 = vmatpush1.msra.mxu0 %v82
  %1511 = vmatprep.subr.mxu0 %v86
  %1512 = vmatpush1.msra.mxu0 %v85
  %1513 = vmatprep.subr.mxu0 %v89
  %1514 = vmatpush1.msra.mxu0 %v88
  %1515 = vmatprep.subr.mxu0 %v92
  %1516 = vmatpush1.msra.mxu0 %v91
  %1517 = vmatprep.subr.mxu0 %v95
  %1518 = vmatpush1.msra.mxu0 %v94
  %1519 = vmatprep.subr.mxu0 %v98
  %1520 = vmatpush1.msra.mxu0 %v97
  %1521 = vmatprep.subr.mxu0 %v101
  %1522 = vmatpush1.msra.mxu0 %v100
  %1523 = vmatprep.subr.mxu0 %v104
  %1524 = vmatpush1.msra.mxu0 %v103
  %1525 = vmatprep.subr.mxu0 %v107
  %1526 = vmatpush1.msra.mxu0 %v106
  %1527 = vmatprep.subr.mxu0 %v110
  %1528 = vmatpush1.msra.mxu0 %v109
  %1529 = vmatprep.subr.mxu0 %v113
  %1530 = vmatpush1.msra.mxu0 %v112
  %1531 = vmatprep.subr.mxu0 %v116
  %1532 = vmatpush1.msra.mxu0 %v115
  %1533 = vmatprep.subr.mxu0 %v119
  %1534 = vmatpush1.msra.mxu0 %v118
  %1535 = vmatprep.subr.mxu0 0.0
  %1536 = vmatpush1.msra.mxu0 0.0
  %1537 = vmatprep.subr.mxu0 0.0
  %1538 = vmatpush1.msra.mxu0 0.0
  %1539 = vmatprep.subr.mxu0 0.0
  %1540 = vmatpush1.msra.mxu0 0.0
  %1541 = vmatprep.subr.mxu0 0.0
  %1542 = vmatpush1.msra.mxu0 0.0
  %1543 = vmatprep.subr.mxu0 0.0
  %1544 = vmatpush1.msra.mxu0 0.0
  %1545 = vmatprep.subr.mxu0 0.0
  %1546 = vmatpush1.msra.mxu0 0.0
  %1547 = vmatprep.subr.mxu0 0.0
  %1548 = vmatpush1.msra.mxu0 0.0
  %1549 = vmatprep.subr.mxu0 0.0
  %1550 = vmatpush1.msra.mxu0 0.0
  %1551 = vmatprep.subr.mxu0 0.0
  %1552 = vmatpush1.msra.mxu0 0.0
  %1553 = vmatprep.subr.mxu0 0.0
  %1554 = vmatpush1.msra.mxu0 0.0
  %1555 = vmatprep.subr.mxu0 0.0
  %1556 = vmatpush1.msra.mxu0 0.0
  %1557 = vmatprep.subr.mxu0 0.0
  %1558 = vmatpush1.msra.mxu0 0.0
  %1559 = vmatprep.subr.mxu0 0.0
  %1560 = vmatpush1.msra.mxu0 0.0
  %1561 = vmatprep.subr.mxu0 0.0
  %1562 = vmatpush1.msra.mxu0 0.0
  %1563 = vmatprep.subr.mxu0 0.0
  %1564 = vmatpush1.msra.mxu0 0.0
  %1565 = vmatprep.subr.mxu0 0.0
  %1566 = vmatpush1.msra.mxu0 0.0
  %1567 = vmatprep.mubr.f32.mxu0 0.0
  %1568 = vmatmul.mubr.f32.gmra.mrb[0].mxu0 %v1357
  %v1569 = vpop.f32.mrb[0].mxu0
  %v1570 = vadd.f32 0.0, %v1569
  %v1571 = vpop.f32.mrb[0].mxu0
  %v1572 = vadd.f32 0.0, %v1571
  %1573 = vdwg.mxu0
  %1574 = vmatprep.subr.mxu0 0.0
  %1575 = vmatpush1.msra.mxu0 %v75
  %1576 = vmatprep.subr.mxu0 0.0
  %1577 = vmatpush1.msra.mxu0 %v78
  %1578 = vmatprep.subr.mxu0 0.0
  %1579 = vmatpush1.msra.mxu0 %v81
  %1580 = vmatprep.subr.mxu0 0.0
  %1581 = vmatpush1.msra.mxu0 %v84
  %1582 = vmatprep.subr.mxu0 0.0
  %1583 = vmatpush1.msra.mxu0 %v87
  %1584 = vmatprep.subr.mxu0 0.0
  %1585 = vmatpush1.msra.mxu0 %v90
  %1586 = vmatprep.subr.mxu0 0.0
  %1587 = vmatpush1.msra.mxu0 %v93
  %1588 = vmatprep.subr.mxu0 0.0
  %1589 = vmatpush1.msra.mxu0 %v96
  %1590 = vmatprep.subr.mxu0 0.0
  %1591 = vmatpush1.msra.mxu0 %v99
  %1592 = vmatprep.subr.mxu0 0.0
  %1593 = vmatpush1.msra.mxu0 %v102
  %1594 = vmatprep.subr.mxu0 0.0
  %1595 = vmatpush1.msra.mxu0 %v105
  %1596 = vmatprep.subr.mxu0 0.0
  %1597 = vmatpush1.msra.mxu0 %v108
  %1598 = vmatprep.subr.mxu0 0.0
  %1599 = vmatpush1.msra.mxu0 %v111
  %1600 = vmatprep.subr.mxu0 0.0
  %1601 = vmatpush1.msra.mxu0 %v114
  %1602 = vmatprep.subr.mxu0 0.0
  %1603 = vmatpush1.msra.mxu0 %v117
  %1604 = vmatprep.subr.mxu0 0.0
  %1605 = vmatpush1.msra.mxu0 %v120
  %1606 = vmatprep.subr.mxu0 0.0
  %1607 = vmatpush1.msra.mxu0 0.0
  %1608 = vmatprep.subr.mxu0 0.0
  %1609 = vmatpush1.msra.mxu0 0.0
  %1610 = vmatprep.subr.mxu0 0.0
  %1611 = vmatpush1.msra.mxu0 0.0
  %1612 = vmatprep.subr.mxu0 0.0
  %1613 = vmatpush1.msra.mxu0 0.0
  %1614 = vmatprep.subr.mxu0 0.0
  %1615 = vmatpush1.msra.mxu0 0.0
  %1616 = vmatprep.subr.mxu0 0.0
  %1617 = vmatpush1.msra.mxu0 0.0
  %1618 = vmatprep.subr.mxu0 0.0
  %1619 = vmatpush1.msra.mxu0 0.0
  %1620 = vmatprep.subr.mxu0 0.0
  %1621 = vmatpush1.msra.mxu0 0.0
  %1622 = vmatprep.subr.mxu0 0.0
  %1623 = vmatpush1.msra.mxu0 0.0
  %1624 = vmatprep.subr.mxu0 0.0
  %1625 = vmatpush1.msra.mxu0 0.0
  %1626 = vmatprep.subr.mxu0 0.0
  %1627 = vmatpush1.msra.mxu0 0.0
  %1628 = vmatprep.subr.mxu0 0.0
  %1629 = vmatpush1.msra.mxu0 0.0
  %1630 = vmatprep.subr.mxu0 0.0
  %1631 = vmatpush1.msra.mxu0 0.0
  %1632 = vmatprep.subr.mxu0 0.0
  %1633 = vmatpush1.msra.mxu0 0.0
  %1634 = vmatprep.subr.mxu0 0.0
  %1635 = vmatpush1.msra.mxu0 0.0
  %1636 = vmatprep.subr.mxu0 0.0
  %1637 = vmatpush1.msra.mxu0 0.0
  %1638 = vmatprep.mubr.f32.mxu0 0.0
  %1639 = vmatmul.mubr.f32.gmra.mrb[0].mxu0 %v1357
  %v1640 = vpop.f32.mrb[0].mxu0
  %v1641 = vadd.f32 0.0, %v1640
  %v1642 = vpop.f32.mrb[0].mxu0
  %1643 = vdwg.mxu0
  %v1644 = vadd.f32 %v1429, %v1570
  %v1645 = vmul.f32 %v1644, 0.5
  %v1646 = vtanh.pop %v1645
  %v1647 = vmul.f32 %v1646, 0.5
  %v1648 = vadd.f32 %v1647, 0.5
  %v1649 = vadd.f32 %v1431, %v1572
  %v1650 = vmul.f32 %v1649, 0.5
  %v1651 = vtanh.pop %v1650
  %v1652 = vmul.f32 %v1651, 0.5
  %v1653 = vadd.f32 %v1652, 0.5
  %v1654 = vadd.f32 %v1641, %v143
  %v1655 = vmul.f32 %v1648, %v1654
  %v1656 = vadd.f32 %v1500, %v1655
  %v1657 = vtanh.pop %v1656
  %v1658 = vsub.f32 1.0, %v1653
  %v1659 = vmul.f32 %v1658, %v1657
  %v1660 = vmul.f32 %v1653, %v1357
  %v1661 = vadd.f32 %v1659, %v1660
  %s1662 = scalar_lea.vmem %s5, 32
  %1663 = vst [vmem:[%s1662] sm:$0xff] %v1661
  %s1664 = scalar_lea.vmem %s0, 40
  %v1665 = vld [vmem:[%s1664] sm:$0xff]
  %1666 = vmatprep.subr.mxu0 %v26
  %1667 = vmatpush1.msra.mxu0 %v25
  %1668 = vmatprep.subr.mxu0 %v29
  %1669 = vmatpush1.msra.mxu0 %v28
  %1670 = vmatprep.subr.mxu0 %v32
  %1671 = vmatpush1.msra.mxu0 %v31
  %1672 = vmatprep.subr.mxu0 %v35
  %1673 = vmatpush1.msra.mxu0 %v34
  %1674 = vmatprep.subr.mxu0 %v38
  %1675 = vmatpush1.msra.mxu0 %v37
  %1676 = vmatprep.subr.mxu0 %v41
  %1677 = vmatpush1.msra.mxu0 %v40
  %1678 = vmatprep.subr.mxu0 %v44
  %1679 = vmatpush1.msra.mxu0 %v43
  %1680 = vmatprep.subr.mxu0 %v47
  %1681 = vmatpush1.msra.mxu0 %v46
  %1682 = vmatprep.subr.mxu0 %v50
  %1683 = vmatpush1.msra.mxu0 %v49
  %1684 = vmatprep.subr.mxu0 %v53
  %1685 = vmatpush1.msra.mxu0 %v52
  %1686 = vmatprep.subr.mxu0 %v56
  %1687 = vmatpush1.msra.mxu0 %v55
  %1688 = vmatprep.subr.mxu0 %v59
  %1689 = vmatpush1.msra.mxu0 %v58
  %1690 = vmatprep.subr.mxu0 %v62
  %1691 = vmatpush1.msra.mxu0 %v61
  %1692 = vmatprep.subr.mxu0 %v65
  %1693 = vmatpush1.msra.mxu0 %v64
  %1694 = vmatprep.subr.mxu0 %v68
  %1695 = vmatpush1.msra.mxu0 %v67
  %1696 = vmatprep.subr.mxu0 %v71
  %1697 = vmatpush1.msra.mxu0 %v70
  %1698 = vmatprep.subr.mxu0 0.0
  %1699 = vmatpush1.msra.mxu0 0.0
  %1700 = vmatprep.subr.mxu0 0.0
  %1701 = vmatpush1.msra.mxu0 0.0
  %1702 = vmatprep.subr.mxu0 0.0
  %1703 = vmatpush1.msra.mxu0 0.0
  %1704 = vmatprep.subr.mxu0 0.0
  %1705 = vmatpush1.msra.mxu0 0.0
  %1706 = vmatprep.subr.mxu0 0.0
  %1707 = vmatpush1.msra.mxu0 0.0
  %1708 = vmatprep.subr.mxu0 0.0
  %1709 = vmatpush1.msra.mxu0 0.0
  %1710 = vmatprep.subr.mxu0 0.0
  %1711 = vmatpush1.msra.mxu0 0.0
  %1712 = vmatprep.subr.mxu0 0.0
  %1713 = vmatpush1.msra.mxu0 0.0
  %1714 = vmatprep.subr.mxu0 0.0
  %1715 = vmatpush1.msra.mxu0 0.0
  %1716 = vmatprep.subr.mxu0 0.0
  %1717 = vmatpush1.msra.mxu0 0.0
  %1718 = vmatprep.subr.mxu0 0.0
  %1719 = vmatpush1.msra.mxu0 0.0
  %1720 = vmatprep.subr.mxu0 0.0
  %1721 = vmatpush1.msra.mxu0 0.0
  %1722 = vmatprep.subr.mxu0 0.0
  %1723 = vmatpush1.msra.mxu0 0.0
  %1724 = vmatprep.subr.mxu0 0.0
  %1725 = vmatpush1.msra.mxu0 0.0
  %1726 = vmatprep.subr.mxu0 0.0
  %1727 = vmatpush1.msra.mxu0 0.0
  %1728 = vmatprep.subr.mxu0 0.0
  %1729 = vmatpush1.msra.mxu0 0.0
  %1730 = vmatprep.mubr.f32.mxu0 0.0
  %1731 = vmatmul.mubr.f32.gmra.mrb[0].mxu0 %v1665
  %v1732 = vpop.f32.mrb[0].mxu0
  %v1733 = vadd.f32 %v126, %v1732
  %v1734 = vpop.f32.mrb[0].mxu0
  %v1735 = vadd.f32 %v130, %v1734
  %1736 = vdwg.mxu0
  %1737 = vmatprep.subr.mxu0 0.0
  %1738 = vmatpush1.msra.mxu0 %v27
  %1739 = vmatprep.subr.mxu0 0.0
  %1740 = vmatpush1.msra.mxu0 %v30
  %1741 = vmatprep.subr.mxu0 0.0
  %1742 = vmatpush1.msra.mxu0 %v33
  %1743 = vmatprep.subr.mxu0 0.0
  %1744 = vmatpush1.msra.mxu0 %v36
  %1745 = vmatprep.subr.mxu0 0.0
  %1746 = vmatpush1.msra.mxu0 %v39
  %1747 = vmatprep.subr.mxu0 0.0
  %1748 = vmatpush1.msra.mxu0 %v42
  %1749 = vmatprep.subr.mxu0 0.0
  %1750 = vmatpush1.msra.mxu0 %v45
  %1751 = vmatprep.subr.mxu0 0.0
  %1752 = vmatpush1.msra.mxu0 %v48
  %1753 = vmatprep.subr.mxu0 0.0
  %1754 = vmatpush1.msra.mxu0 %v51
  %1755 = vmatprep.subr.mxu0 0.0
  %1756 = vmatpush1.msra.mxu0 %v54
  %1757 = vmatprep.subr.mxu0 0.0
  %1758 = vmatpush1.msra.mxu0 %v57
  %1759 = vmatprep.subr.mxu0 0.0
  %1760 = vmatpush1.msra.mxu0 %v60
  %1761 = vmatprep.subr.mxu0 0.0
  %1762 = vmatpush1.msra.mxu0 %v63
  %1763 = vmatprep.subr.mxu0 0.0
  %1764 = vmatpush1.msra.mxu0 %v66
  %1765 = vmatprep.subr.mxu0 0.0
  %1766 = vmatpush1.msra.mxu0 %v69
  %1767 = vmatprep.subr.mxu0 0.0
  %1768 = vmatpush1.msra.mxu0 %v72
  %1769 = vmatprep.subr.mxu0 0.0
  %1770 = vmatpush1.msra.mxu0 0.0
  %1771 = vmatprep.subr.mxu0 0.0
  %1772 = vmatpush1.msra.mxu0 0.0
  %1773 = vmatprep.subr.mxu0 0.0
  %1774 = vmatpush1.msra.mxu0 0.0
  %1775 = vmatprep.subr.mxu0 0.0
  %1776 = vmatpush1.msra.mxu0 0.0
  %1777 = vmatprep.subr.mxu0 0.0
  %1778 = vmatpush1.msra.mxu0 0.0
  %1779 = vmatprep.subr.mxu0 0.0
  %1780 = vmatpush1.msra.mxu0 0.0
  %1781 = vmatprep.subr.mxu0 0.0
  %1782 = vmatpush1.msra.mxu0 0.0
  %1783 = vmatprep.subr.mxu0 0.0
  %1784 = vmatpush1.msra.mxu0 0.0
  %1785 = vmatprep.subr.mxu0 0.0
  %1786 = vmatpush1.msra.mxu0 0.0
  %1787 = vmatprep.subr.mxu0 0.0
  %1788 = vmatpush1.msra.mxu0 0.0
  %1789 = vmatprep.subr.mxu0 0.0
  %1790 = vmatpush1.msra.mxu0 0.0
  %1791 = vmatprep.subr.mxu0 0.0
  %1792 = vmatpush1.msra.mxu0 0.0
  %1793 = vmatprep.subr.mxu0 0.0
  %1794 = vmatpush1.msra.mxu0 0.0
  %1795 = vmatprep.subr.mxu0 0.0
  %1796 = vmatpush1.msra.mxu0 0.0
  %1797 = vmatprep.subr.mxu0 0.0
  %1798 = vmatpush1.msra.mxu0 0.0
  %1799 = vmatprep.subr.mxu0 0.0
  %1800 = vmatpush1.msra.mxu0 0.0
  %1801 = vmatprep.mubr.f32.mxu0 0.0
  %1802 = vmatmul.mubr.f32.gmra.mrb[0].mxu0 %v1665
  %v1803 = vpop.f32.mrb[0].mxu0
  %v1804 = vadd.f32 %v134, %v1803
  %v1805 = vpop.f32.mrb[0].mxu0
  %1806 = vdwg.mxu0
  %1807 = vmatprep.subr.mxu0 %v74
  %1808 = vmatpush1.msra.mxu0 %v73
  %1809 = vmatprep.subr.mxu0 %v77
  %1810 = vmatpush1.msra.mxu0 %v76
  %1811 = vmatprep.subr.mxu0 %v80
  %1812 = vmatpush1.msra.mxu0 %v79
  %1813 = vmatprep.subr.mxu0 %v83
  %1814 = vmatpush1.msra.mxu0 %v82
  %1815 = vmatprep.subr.mxu0 %v86
  %1816 = vmatpush1.msra.mxu0 %v85
  %1817 = vmatprep.subr.mxu0 %v89
  %1818 = vmatpush1.msra.mxu0 %v88
  %1819 = vmatprep.subr.mxu0 %v92
  %1820 = vmatpush1.msra.mxu0 %v91
  %1821 = vmatprep.subr.mxu0 %v95
  %1822 = vmatpush1.msra.mxu0 %v94
  %1823 = vmatprep.subr.mxu0 %v98
  %1824 = vmatpush1.msra.mxu0 %v97
  %1825 = vmatprep.subr.mxu0 %v101
  %1826 = vmatpush1.msra.mxu0 %v100
  %1827 = vmatprep.subr.mxu0 %v104
  %1828 = vmatpush1.msra.mxu0 %v103
  %1829 = vmatprep.subr.mxu0 %v107
  %1830 = vmatpush1.msra.mxu0 %v106
  %1831 = vmatprep.subr.mxu0 %v110
  %1832 = vmatpush1.msra.mxu0 %v109
  %1833 = vmatprep.subr.mxu0 %v113
  %1834 = vmatpush1.msra.mxu0 %v112
  %1835 = vmatprep.subr.mxu0 %v116
  %1836 = vmatpush1.msra.mxu0 %v115
  %1837 = vmatprep.subr.mxu0 %v119
  %1838 = vmatpush1.msra.mxu0 %v118
  %1839 = vmatprep.subr.mxu0 0.0
  %1840 = vmatpush1.msra.mxu0 0.0
  %1841 = vmatprep.subr.mxu0 0.0
  %1842 = vmatpush1.msra.mxu0 0.0
  %1843 = vmatprep.subr.mxu0 0.0
  %1844 = vmatpush1.msra.mxu0 0.0
  %1845 = vmatprep.subr.mxu0 0.0
  %1846 = vmatpush1.msra.mxu0 0.0
  %1847 = vmatprep.subr.mxu0 0.0
  %1848 = vmatpush1.msra.mxu0 0.0
  %1849 = vmatprep.subr.mxu0 0.0
  %1850 = vmatpush1.msra.mxu0 0.0
  %1851 = vmatprep.subr.mxu0 0.0
  %1852 = vmatpush1.msra.mxu0 0.0
  %1853 = vmatprep.subr.mxu0 0.0
  %1854 = vmatpush1.msra.mxu0 0.0
  %1855 = vmatprep.subr.mxu0 0.0
  %1856 = vmatpush1.msra.mxu0 0.0
  %1857 = vmatprep.subr.mxu0 0.0
  %1858 = vmatpush1.msra.mxu0 0.0
  %1859 = vmatprep.subr.mxu0 0.0
  %1860 = vmatpush1.msra.mxu0 0.0
  %1861 = vmatprep.subr.mxu0 0.0
  %1862 = vmatpush1.msra.mxu0 0.0
  %1863 = vmatprep.subr.mxu0 0.0
  %1864 = vmatpush1.msra.mxu0 0.0
  %1865 = vmatprep.subr.mxu0 0.0
  %1866 = vmatpush1.msra.mxu0 0.0
  %1867 = vmatprep.subr.mxu0 0.0
  %1868 = vmatpush1.msra.mxu0 0.0
  %1869 = vmatprep.subr.mxu0 0.0
  %1870 = vmatpush1.msra.mxu0 0.0
  %1871 = vmatprep.mubr.f32.mxu0 0.0
  %1872 = vmatmul.mubr.f32.gmra.mrb[0].mxu0 %v1661
  %v1873 = vpop.f32.mrb[0].mxu0
  %v1874 = vadd.f32 0.0, %v1873
  %v1875 = vpop.f32.mrb[0].mxu0
  %v1876 = vadd.f32 0.0, %v1875
  %1877 = vdwg.mxu0
  %1878 = vmatprep.subr.mxu0 0.0
  %1879 = vmatpush1.msra.mxu0 %v75
  %1880 = vmatprep.subr.mxu0 0.0
  %1881 = vmatpush1.msra.mxu0 %v78
  %1882 = vmatprep.subr.mxu0 0.0
  %1883 = vmatpush1.msra.mxu0 %v81
  %1884 = vmatprep.subr.mxu0 0.0
  %1885 = vmatpush1.msra.mxu0 %v84
  %1886 = vmatprep.subr.mxu0 0.0
  %1887 = vmatpush1.msra.mxu0 %v87
  %1888 = vmatprep.subr.mxu0 0.0
  %1889 = vmatpush1.msra.mxu0 %v90
  %1890 = vmatprep.subr.mxu0 0.0
  %1891 = vmatpush1.msra.mxu0 %v93
  %1892 = vmatprep.subr.mxu0 0.0
  %1893 = vmatpush1.msra.mxu0 %v96
  %1894 = vmatprep.subr.mxu0 0.0
  %1895 = vmatpush1.msra.mxu0 %v99
  %1896 = vmatprep.subr.mxu0 0.0
  %1897 = vmatpush1.msra.mxu0 %v102
  %1898 = vmatprep.subr.mxu0 0.0
  %1899 = vmatpush1.msra.mxu0 %v105
  %1900 = vmatprep.subr.mxu0 0.0
  %1901 = vmatpush1.msra.mxu0 %v108
  %1902 = vmatprep.subr.mxu0 0.0
  %1903 = vmatpush1.msra.mxu0 %v111
  %1904 = vmatprep.subr.mxu0 0.0
  %1905 = vmatpush1.msra.mxu0 %v114
  %1906 = vmatprep.subr.mxu0 0.0
  %1907 = vmatpush1.msra.mxu0 %v117
  %1908 = vmatprep.subr.mxu0 0.0
  %1909 = vmatpush1.msra.mxu0 %v120
  %1910 = vmatprep.subr.mxu0 0.0
  %1911 = vmatpush1.msra.mxu0 0.0
  %1912 = vmatprep.subr.mxu0 0.0
  %1913 = vmatpush1.msra.mxu0 0.0
  %1914 = vmatprep.subr.mxu0 0.0
  %1915 = vmatpush1.msra.mxu0 0.0
  %1916 = vmatprep.subr.mxu0 0.0
  %1917 = vmatpush1.msra.mxu0 0.0
  %1918 = vmatprep.subr.mxu0 0.0
  %1919 = vmatpush1.msra.mxu0 0.0
  %1920 = vmatprep.subr.mxu0 0.0
  %1921 = vmatpush1.msra.mxu0 0.0
  %1922 = vmatprep.subr.mxu0 0.0
  %1923 = vmatpush1.msra.mxu0 0.0
  %1924 = vmatprep.subr.mxu0 0.0
  %1925 = vmatpush1.msra.mxu0 0.0
  %1926 = vmatprep.subr.mxu0 0.0
  %1927 = vmatpush1.msra.mxu0 0.0
  %1928 = vmatprep.subr.mxu0 0.0
  %1929 = vmatpush1.msra.mxu0 0.0
  %1930 = vmatprep.subr.mxu0 0.0
  %1931 = vmatpush1.msra.mxu0 0.0
  %1932 = vmatprep.subr.mxu0 0.0
  %1933 = vmatpush1.msra.mxu0 0.0
  %1934 = vmatprep.subr.mxu0 0.0
  %1935 = vmatpush1.msra.mxu0 0.0
  %1936 = vmatprep.subr.mxu0 0.0
  %1937 = vmatpush1.msra.mxu0 0.0
  %1938 = vmatprep.subr.mxu0 0.0
  %1939 = vmatpush1.msra.mxu0 0.0
  %1940 = vmatprep.subr.mxu0 0.0
  %1941 = vmatpush1.msra.mxu0 0.0
  %1942 = vmatprep.mubr.f32.mxu0 0.0
  %1943 = vmatmul.mubr.f32.gmra.mrb[0].mxu0 %v1661
  %v1944 = vpop.f32.mrb[0].mxu0
  %v1945 = vadd.f32 0.0, %v1944
  %v1946 = vpop.f32.mrb[0].mxu0
  %1947 = vdwg.mxu0
  %v1948 = vadd.f32 %v1733, %v1874
  %v1949 = vmul.f32 %v1948, 0.5
  %v1950 = vtanh.pop %v1949
  %v1951 = vmul.f32 %v1950, 0.5
  %v1952 = vadd.f32 %v1951, 0.5
  %v1953 = vadd.f32 %v1735, %v1876
  %v1954 = vmul.f32 %v1953, 0.5
  %v1955 = vtanh.pop %v1954
  %v1956 = vmul.f32 %v1955, 0.5
  %v1957 = vadd.f32 %v1956, 0.5
  %v1958 = vadd.f32 %v1945, %v143
  %v1959 = vmul.f32 %v1952, %v1958
  %v1960 = vadd.f32 %v1804, %v1959
  %v1961 = vtanh.pop %v1960
  %v1962 = vsub.f32 1.0, %v1957
  %v1963 = vmul.f32 %v1962, %v1961
  %v1964 = vmul.f32 %v1957, %v1661
  %v1965 = vadd.f32 %v1963, %v1964
  %s1966 = scalar_lea.vmem %s5, 40
  %1967 = vst [vmem:[%s1966] sm:$0xff] %v1965
  %s1968 = scalar_lea.vmem %s0, 48
  %v1969 = vld [vmem:[%s1968] sm:$0xff]
  %1970 = vmatprep.subr.mxu0 %v26
  %1971 = vmatpush1.msra.mxu0 %v25
  %1972 = vmatprep.subr.mxu0 %v29
  %1973 = vmatpush1.msra.mxu0 %v28
  %1974 = vmatprep.subr.mxu0 %v32
  %1975 = vmatpush1.msra.mxu0 %v31
  %1976 = vmatprep.subr.mxu0 %v35
  %1977 = vmatpush1.msra.mxu0 %v34
  %1978 = vmatprep.subr.mxu0 %v38
  %1979 = vmatpush1.msra.mxu0 %v37
  %1980 = vmatprep.subr.mxu0 %v41
  %1981 = vmatpush1.msra.mxu0 %v40
  %1982 = vmatprep.subr.mxu0 %v44
  %1983 = vmatpush1.msra.mxu0 %v43
  %1984 = vmatprep.subr.mxu0 %v47
  %1985 = vmatpush1.msra.mxu0 %v46
  %1986 = vmatprep.subr.mxu0 %v50
  %1987 = vmatpush1.msra.mxu0 %v49
  %1988 = vmatprep.subr.mxu0 %v53
  %1989 = vmatpush1.msra.mxu0 %v52
  %1990 = vmatprep.subr.mxu0 %v56
  %1991 = vmatpush1.msra.mxu0 %v55
  %1992 = vmatprep.subr.mxu0 %v59
  %1993 = vmatpush1.msra.mxu0 %v58
  %1994 = vmatprep.subr.mxu0 %v62
  %1995 = vmatpush1.msra.mxu0 %v61
  %1996 = vmatprep.subr.mxu0 %v65
  %1997 = vmatpush1.msra.mxu0 %v64
  %1998 = vmatprep.subr.mxu0 %v68
  %1999 = vmatpush1.msra.mxu0 %v67
  %2000 = vmatprep.subr.mxu0 %v71
  %2001 = vmatpush1.msra.mxu0 %v70
  %2002 = vmatprep.subr.mxu0 0.0
  %2003 = vmatpush1.msra.mxu0 0.0
  %2004 = vmatprep.subr.mxu0 0.0
  %2005 = vmatpush1.msra.mxu0 0.0
  %2006 = vmatprep.subr.mxu0 0.0
  %2007 = vmatpush1.msra.mxu0 0.0
  %2008 = vmatprep.subr.mxu0 0.0
  %2009 = vmatpush1.msra.mxu0 0.0
  %2010 = vmatprep.subr.mxu0 0.0
  %2011 = vmatpush1.msra.mxu0 0.0
  %2012 = vmatprep.subr.mxu0 0.0
  %2013 = vmatpush1.msra.mxu0 0.0
  %2014 = vmatprep.subr.mxu0 0.0
  %2015 = vmatpush1.msra.mxu0 0.0
  %2016 = vmatprep.subr.mxu0 0.0
  %2017 = vmatpush1.msra.mxu0 0.0
  %2018 = vmatprep.subr.mxu0 0.0
  %2019 = vmatpush1.msra.mxu0 0.0
  %2020 = vmatprep.subr.mxu0 0.0
  %2021 = vmatpush1.msra.mxu0 0.0
  %2022 = vmatprep.subr.mxu0 0.0
  %2023 = vmatpush1.msra.mxu0 0.0
  %2024 = vmatprep.subr.mxu0 0.0
  %2025 = vmatpush1.msra.mxu0 0.0
  %2026 = vmatprep.subr.mxu0 0.0
  %2027 = vmatpush1.msra.mxu0 0.0
  %2028 = vmatprep.subr.mxu0 0.0
  %2029 = vmatpush1.msra.mxu0 0.0
  %2030 = vmatprep.subr.mxu0 0.0
  %2031 = vmatpush1.msra.mxu0 0.0
  %2032 = vmatprep.subr.mxu0 0.0
  %2033 = vmatpush1.msra.mxu0 0.0
  %2034 = vmatprep.mubr.f32.mxu0 0.0
  %2035 = vmatmul.mubr.f32.gmra.mrb[0].mxu0 %v1969
  %v2036 = vpop.f32.mrb[0].mxu0
  %v2037 = vadd.f32 %v126, %v2036
  %v2038 = vpop.f32.mrb[0].mxu0
  %v2039 = vadd.f32 %v130, %v2038
  %2040 = vdwg.mxu0
  %2041 = vmatprep.subr.mxu0 0.0
  %2042 = vmatpush1.msra.mxu0 %v27
  %2043 = vmatprep.subr.mxu0 0.0
  %2044 = vmatpush1.msra.mxu0 %v30
  %2045 = vmatprep.subr.mxu0 0.0
  %2046 = vmatpush1.msra.mxu0 %v33
  %2047 = vmatprep.subr.mxu0 0.0
  %2048 = vmatpush1.msra.mxu0 %v36
  %2049 = vmatprep.subr.mxu0 0.0
  %2050 = vmatpush1.msra.mxu0 %v39
  %2051 = vmatprep.subr.mxu0 0.0
  %2052 = vmatpush1.msra.mxu0 %v42
  %2053 = vmatprep.subr.mxu0 0.0
  %2054 = vmatpush1.msra.mxu0 %v45
  %2055 = vmatprep.subr.mxu0 0.0
  %2056 = vmatpush1.msra.mxu0 %v48
  %2057 = vmatprep.subr.mxu0 0.0
  %2058 = vmatpush1.msra.mxu0 %v51
  %2059 = vmatprep.subr.mxu0 0.0
  %2060 = vmatpush1.msra.mxu0 %v54
  %2061 = vmatprep.subr.mxu0 0.0
  %2062 = vmatpush1.msra.mxu0 %v57
  %2063 = vmatprep.subr.mxu0 0.0
  %2064 = vmatpush1.msra.mxu0 %v60
  %2065 = vmatprep.subr.mxu0 0.0
  %2066 = vmatpush1.msra.mxu0 %v63
  %2067 = vmatprep.subr.mxu0 0.0
  %2068 = vmatpush1.msra.mxu0 %v66
  %2069 = vmatprep.subr.mxu0 0.0
  %2070 = vmatpush1.msra.mxu0 %v69
  %2071 = vmatprep.subr.mxu0 0.0
  %2072 = vmatpush1.msra.mxu0 %v72
  %2073 = vmatprep.subr.mxu0 0.0
  %2074 = vmatpush1.msra.mxu0 0.0
  %2075 = vmatprep.subr.mxu0 0.0
  %2076 = vmatpush1.msra.mxu0 0.0
  %2077 = vmatprep.subr.mxu0 0.0
  %2078 = vmatpush1.msra.mxu0 0.0
  %2079 = vmatprep.subr.mxu0 0.0
  %2080 = vmatpush1.msra.mxu0 0.0
  %2081 = vmatprep.subr.mxu0 0.0
  %2082 = vmatpush1.msra.mxu0 0.0
  %2083 = vmatprep.subr.mxu0 0.0
  %2084 = vmatpush1.msra.mxu0 0.0
  %2085 = vmatprep.subr.mxu0 0.0
  %2086 = vmatpush1.msra.mxu0 0.0
  %2087 = vmatprep.subr.mxu0 0.0
  %2088 = vmatpush1.msra.mxu0 0.0
  %2089 = vmatprep.subr.mxu0 0.0
  %2090 = vmatpush1.msra.mxu0 0.0
  %2091 = vmatprep.subr.mxu0 0.0
  %2092 = vmatpush1.msra.mxu0 0.0
  %2093 = vmatprep.subr.mxu0 0.0
  %2094 = vmatpush1.msra.mxu0 0.0
  %2095 = vmatprep.subr.mxu0 0.0
  %2096 = vmatpush1.msra.mxu0 0.0
  %2097 = vmatprep.subr.mxu0 0.0
  %2098 = vmatpush1.msra.mxu0 0.0
  %2099 = vmatprep.subr.mxu0 0.0
  %2100 = vmatpush1.msra.mxu0 0.0
  %2101 = vmatprep.subr.mxu0 0.0
  %2102 = vmatpush1.msra.mxu0 0.0
  %2103 = vmatprep.subr.mxu0 0.0
  %2104 = vmatpush1.msra.mxu0 0.0
  %2105 = vmatprep.mubr.f32.mxu0 0.0
  %2106 = vmatmul.mubr.f32.gmra.mrb[0].mxu0 %v1969
  %v2107 = vpop.f32.mrb[0].mxu0
  %v2108 = vadd.f32 %v134, %v2107
  %v2109 = vpop.f32.mrb[0].mxu0
  %2110 = vdwg.mxu0
  %2111 = vmatprep.subr.mxu0 %v74
  %2112 = vmatpush1.msra.mxu0 %v73
  %2113 = vmatprep.subr.mxu0 %v77
  %2114 = vmatpush1.msra.mxu0 %v76
  %2115 = vmatprep.subr.mxu0 %v80
  %2116 = vmatpush1.msra.mxu0 %v79
  %2117 = vmatprep.subr.mxu0 %v83
  %2118 = vmatpush1.msra.mxu0 %v82
  %2119 = vmatprep.subr.mxu0 %v86
  %2120 = vmatpush1.msra.mxu0 %v85
  %2121 = vmatprep.subr.mxu0 %v89
  %2122 = vmatpush1.msra.mxu0 %v88
  %2123 = vmatprep.subr.mxu0 %v92
  %2124 = vmatpush1.msra.mxu0 %v91
  %2125 = vmatprep.subr.mxu0 %v95
  %2126 = vmatpush1.msra.mxu0 %v94
  %2127 = vmatprep.subr.mxu0 %v98
  %2128 = vmatpush1.msra.mxu0 %v97
  %2129 = vmatprep.subr.mxu0 %v101
  %2130 = vmatpush1.msra.mxu0 %v100
  %2131 = vmatprep.subr.mxu0 %v104
  %2132 = vmatpush1.msra.mxu0 %v103
  %2133 = vmatprep.subr.mxu0 %v107
  %2134 = vmatpush1.msra.mxu0 %v106
  %2135 = vmatprep.subr.mxu0 %v110
  %2136 = vmatpush1.msra.mxu0 %v109
  %2137 = vmatprep.subr.mxu0 %v113
  %2138 = vmatpush1.msra.mxu0 %v112
  %2139 = vmatprep.subr.mxu0 %v116
  %2140 = vmatpush1.msra.mxu0 %v115
  %2141 = vmatprep.subr.mxu0 %v119
  %2142 = vmatpush1.msra.mxu0 %v118
  %2143 = vmatprep.subr.mxu0 0.0
  %2144 = vmatpush1.msra.mxu0 0.0
  %2145 = vmatprep.subr.mxu0 0.0
  %2146 = vmatpush1.msra.mxu0 0.0
  %2147 = vmatprep.subr.mxu0 0.0
  %2148 = vmatpush1.msra.mxu0 0.0
  %2149 = vmatprep.subr.mxu0 0.0
  %2150 = vmatpush1.msra.mxu0 0.0
  %2151 = vmatprep.subr.mxu0 0.0
  %2152 = vmatpush1.msra.mxu0 0.0
  %2153 = vmatprep.subr.mxu0 0.0
  %2154 = vmatpush1.msra.mxu0 0.0
  %2155 = vmatprep.subr.mxu0 0.0
  %2156 = vmatpush1.msra.mxu0 0.0
  %2157 = vmatprep.subr.mxu0 0.0
  %2158 = vmatpush1.msra.mxu0 0.0
  %2159 = vmatprep.subr.mxu0 0.0
  %2160 = vmatpush1.msra.mxu0 0.0
  %2161 = vmatprep.subr.mxu0 0.0
  %2162 = vmatpush1.msra.mxu0 0.0
  %2163 = vmatprep.subr.mxu0 0.0
  %2164 = vmatpush1.msra.mxu0 0.0
  %2165 = vmatprep.subr.mxu0 0.0
  %2166 = vmatpush1.msra.mxu0 0.0
  %2167 = vmatprep.subr.mxu0 0.0
  %2168 = vmatpush1.msra.mxu0 0.0
  %2169 = vmatprep.subr.mxu0 0.0
  %2170 = vmatpush1.msra.mxu0 0.0
  %2171 = vmatprep.subr.mxu0 0.0
  %2172 = vmatpush1.msra.mxu0 0.0
  %2173 = vmatprep.subr.mxu0 0.0
  %2174 = vmatpush1.msra.mxu0 0.0
  %2175 = vmatprep.mubr.f32.mxu0 0.0
  %2176 = vmatmul.mubr.f32.gmra.mrb[0].mxu0 %v1965
  %v2177 = vpop.f32.mrb[0].mxu0
  %v2178 = vadd.f32 0.0, %v2177
  %v2179 = vpop.f32.mrb[0].mxu0
  %v2180 = vadd.f32 0.0, %v2179
  %2181 = vdwg.mxu0
  %2182 = vmatprep.subr.mxu0 0.0
  %2183 = vmatpush1.msra.mxu0 %v75
  %2184 = vmatprep.subr.mxu0 0.0
  %2185 = vmatpush1.msra.mxu0 %v78
  %2186 = vmatprep.subr.mxu0 0.0
  %2187 = vmatpush1.msra.mxu0 %v81
  %2188 = vmatprep.subr.mxu0 0.0
  %2189 = vmatpush1.msra.mxu0 %v84
  %2190 = vmatprep.subr.mxu0 0.0
  %2191 = vmatpush1.msra.mxu0 %v87
  %2192 = vmatprep.subr.mxu0 0.0
  %2193 = vmatpush1.msra.mxu0 %v90
  %2194 = vmatprep.subr.mxu0 0.0
  %2195 = vmatpush1.msra.mxu0 %v93
  %2196 = vmatprep.subr.mxu0 0.0
  %2197 = vmatpush1.msra.mxu0 %v96
  %2198 = vmatprep.subr.mxu0 0.0
  %2199 = vmatpush1.msra.mxu0 %v99
  %2200 = vmatprep.subr.mxu0 0.0
  %2201 = vmatpush1.msra.mxu0 %v102
  %2202 = vmatprep.subr.mxu0 0.0
  %2203 = vmatpush1.msra.mxu0 %v105
  %2204 = vmatprep.subr.mxu0 0.0
  %2205 = vmatpush1.msra.mxu0 %v108
  %2206 = vmatprep.subr.mxu0 0.0
  %2207 = vmatpush1.msra.mxu0 %v111
  %2208 = vmatprep.subr.mxu0 0.0
  %2209 = vmatpush1.msra.mxu0 %v114
  %2210 = vmatprep.subr.mxu0 0.0
  %2211 = vmatpush1.msra.mxu0 %v117
  %2212 = vmatprep.subr.mxu0 0.0
  %2213 = vmatpush1.msra.mxu0 %v120
  %2214 = vmatprep.subr.mxu0 0.0
  %2215 = vmatpush1.msra.mxu0 0.0
  %2216 = vmatprep.subr.mxu0 0.0
  %2217 = vmatpush1.msra.mxu0 0.0
  %2218 = vmatprep.subr.mxu0 0.0
  %2219 = vmatpush1.msra.mxu0 0.0
  %2220 = vmatprep.subr.mxu0 0.0
  %2221 = vmatpush1.msra.mxu0 0.0
  %2222 = vmatprep.subr.mxu0 0.0
  %2223 = vmatpush1.msra.mxu0 0.0
  %2224 = vmatprep.subr.mxu0 0.0
  %2225 = vmatpush1.msra.mxu0 0.0
  %2226 = vmatprep.subr.mxu0 0.0
  %2227 = vmatpush1.msra.mxu0 0.0
  %2228 = vmatprep.subr.mxu0 0.0
  %2229 = vmatpush1.msra.mxu0 0.0
  %2230 = vmatprep.subr.mxu0 0.0
  %2231 = vmatpush1.msra.mxu0 0.0
  %2232 = vmatprep.subr.mxu0 0.0
  %2233 = vmatpush1.msra.mxu0 0.0
  %2234 = vmatprep.subr.mxu0 0.0
  %2235 = vmatpush1.msra.mxu0 0.0
  %2236 = vmatprep.subr.mxu0 0.0
  %2237 = vmatpush1.msra.mxu0 0.0
  %2238 = vmatprep.subr.mxu0 0.0
  %2239 = vmatpush1.msra.mxu0 0.0
  %2240 = vmatprep.subr.mxu0 0.0
  %2241 = vmatpush1.msra.mxu0 0.0
  %2242 = vmatprep.subr.mxu0 0.0
  %2243 = vmatpush1.msra.mxu0 0.0
  %2244 = vmatprep.subr.mxu0 0.0
  %2245 = vmatpush1.msra.mxu0 0.0
  %2246 = vmatprep.mubr.f32.mxu0 0.0
  %2247 = vmatmul.mubr.f32.gmra.mrb[0].mxu0 %v1965
  %v2248 = vpop.f32.mrb[0].mxu0
  %v2249 = vadd.f32 0.0, %v2248
  %v2250 = vpop.f32.mrb[0].mxu0
  %2251 = vdwg.mxu0
  %v2252 = vadd.f32 %v2037, %v2178
  %v2253 = vmul.f32 %v2252, 0.5
  %v2254 = vtanh.pop %v2253
  %v2255 = vmul.f32 %v2254, 0.5
  %v2256 = vadd.f32 %v2255, 0.5
  %v2257 = vadd.f32 %v2039, %v2180
  %v2258 = vmul.f32 %v2257, 0.5
  %v2259 = vtanh.pop %v2258
  %v2260 = vmul.f32 %v2259, 0.5
  %v2261 = vadd.f32 %v2260, 0.5
  %v2262 = vadd.f32 %v2249, %v143
  %v2263 = vmul.f32 %v2256, %v2262
  %v2264 = vadd.f32 %v2108, %v2263
  %v2265 = vtanh.pop %v2264
  %v2266 = vsub.f32 1.0, %v2261
  %v2267 = vmul.f32 %v2266, %v2265
  %v2268 = vmul.f32 %v2261, %v1965
  %v2269 = vadd.f32 %v2267, %v2268
  %s2270 = scalar_lea.vmem %s5, 48
  %2271 = vst [vmem:[%s2270] sm:$0xff] %v2269
  %s2272 = scalar_lea.vmem %s0, 56
  %v2273 = vld [vmem:[%s2272] sm:$0xff]
  %2274 = vmatprep.subr.mxu0 %v26
  %2275 = vmatpush1.msra.mxu0 %v25
  %2276 = vmatprep.subr.mxu0 %v29
  %2277 = vmatpush1.msra.mxu0 %v28
  %2278 = vmatprep.subr.mxu0 %v32
  %2279 = vmatpush1.msra.mxu0 %v31
  %2280 = vmatprep.subr.mxu0 %v35
  %2281 = vmatpush1.msra.mxu0 %v34
  %2282 = vmatprep.subr.mxu0 %v38
  %2283 = vmatpush1.msra.mxu0 %v37
  %2284 = vmatprep.subr.mxu0 %v41
  %2285 = vmatpush1.msra.mxu0 %v40
  %2286 = vmatprep.subr.mxu0 %v44
  %2287 = vmatpush1.msra.mxu0 %v43
  %2288 = vmatprep.subr.mxu0 %v47
  %2289 = vmatpush1.msra.mxu0 %v46
  %2290 = vmatprep.subr.mxu0 %v50
  %2291 = vmatpush1.msra.mxu0 %v49
  %2292 = vmatprep.subr.mxu0 %v53
  %2293 = vmatpush1.msra.mxu0 %v52
  %2294 = vmatprep.subr.mxu0 %v56
  %2295 = vmatpush1.msra.mxu0 %v55
  %2296 = vmatprep.subr.mxu0 %v59
  %2297 = vmatpush1.msra.mxu0 %v58
  %2298 = vmatprep.subr.mxu0 %v62
  %2299 = vmatpush1.msra.mxu0 %v61
  %2300 = vmatprep.subr.mxu0 %v65
  %2301 = vmatpush1.msra.mxu0 %v64
  %2302 = vmatprep.subr.mxu0 %v68
  %2303 = vmatpush1.msra.mxu0 %v67
  %2304 = vmatprep.subr.mxu0 %v71
  %2305 = vmatpush1.msra.mxu0 %v70
  %2306 = vmatprep.subr.mxu0 0.0
  %2307 = vmatpush1.msra.mxu0 0.0
  %2308 = vmatprep.subr.mxu0 0.0
  %2309 = vmatpush1.msra.mxu0 0.0
  %2310 = vmatprep.subr.mxu0 0.0
  %2311 = vmatpush1.msra.mxu0 0.0
  %2312 = vmatprep.subr.mxu0 0.0
  %2313 = vmatpush1.msra.mxu0 0.0
  %2314 = vmatprep.subr.mxu0 0.0
  %2315 = vmatpush1.msra.mxu0 0.0
  %2316 = vmatprep.subr.mxu0 0.0
  %2317 = vmatpush1.msra.mxu0 0.0
  %2318 = vmatprep.subr.mxu0 0.0
  %2319 = vmatpush1.msra.mxu0 0.0
  %2320 = vmatprep.subr.mxu0 0.0
  %2321 = vmatpush1.msra.mxu0 0.0
  %2322 = vmatprep.subr.mxu0 0.0
  %2323 = vmatpush1.msra.mxu0 0.0
  %2324 = vmatprep.subr.mxu0 0.0
  %2325 = vmatpush1.msra.mxu0 0.0
  %2326 = vmatprep.subr.mxu0 0.0
  %2327 = vmatpush1.msra.mxu0 0.0
  %2328 = vmatprep.subr.mxu0 0.0
  %2329 = vmatpush1.msra.mxu0 0.0
  %2330 = vmatprep.subr.mxu0 0.0
  %2331 = vmatpush1.msra.mxu0 0.0
  %2332 = vmatprep.subr.mxu0 0.0
  %2333 = vmatpush1.msra.mxu0 0.0
  %2334 = vmatprep.subr.mxu0 0.0
  %2335 = vmatpush1.msra.mxu0 0.0
  %2336 = vmatprep.subr.mxu0 0.0
  %2337 = vmatpush1.msra.mxu0 0.0
  %2338 = vmatprep.mubr.f32.mxu0 0.0
  %2339 = vmatmul.mubr.f32.gmra.mrb[0].mxu0 %v2273
  %v2340 = vpop.f32.mrb[0].mxu0
  %v2341 = vadd.f32 %v126, %v2340
  %v2342 = vpop.f32.mrb[0].mxu0
  %v2343 = vadd.f32 %v130, %v2342
  %2344 = vdwg.mxu0
  %2345 = vmatprep.subr.mxu0 0.0
  %2346 = vmatpush1.msra.mxu0 %v27
  %2347 = vmatprep.subr.mxu0 0.0
  %2348 = vmatpush1.msra.mxu0 %v30
  %2349 = vmatprep.subr.mxu0 0.0
  %2350 = vmatpush1.msra.mxu0 %v33
  %2351 = vmatprep.subr.mxu0 0.0
  %2352 = vmatpush1.msra.mxu0 %v36
  %2353 = vmatprep.subr.mxu0 0.0
  %2354 = vmatpush1.msra.mxu0 %v39
  %2355 = vmatprep.subr.mxu0 0.0
  %2356 = vmatpush1.msra.mxu0 %v42
  %2357 = vmatprep.subr.mxu0 0.0
  %2358 = vmatpush1.msra.mxu0 %v45
  %2359 = vmatprep.subr.mxu0 0.0
  %2360 = vmatpush1.msra.mxu0 %v48
  %2361 = vmatprep.subr.mxu0 0.0
  %2362 = vmatpush1.msra.mxu0 %v51
  %2363 = vmatprep.subr.mxu0 0.0
  %2364 = vmatpush1.msra.mxu0 %v54
  %2365 = vmatprep.subr.mxu0 0.0
  %2366 = vmatpush1.msra.mxu0 %v57
  %2367 = vmatprep.subr.mxu0 0.0
  %2368 = vmatpush1.msra.mxu0 %v60
  %2369 = vmatprep.subr.mxu0 0.0
  %2370 = vmatpush1.msra.mxu0 %v63
  %2371 = vmatprep.subr.mxu0 0.0
  %2372 = vmatpush1.msra.mxu0 %v66
  %2373 = vmatprep.subr.mxu0 0.0
  %2374 = vmatpush1.msra.mxu0 %v69
  %2375 = vmatprep.subr.mxu0 0.0
  %2376 = vmatpush1.msra.mxu0 %v72
  %2377 = vmatprep.subr.mxu0 0.0
  %2378 = vmatpush1.msra.mxu0 0.0
  %2379 = vmatprep.subr.mxu0 0.0
  %2380 = vmatpush1.msra.mxu0 0.0
  %2381 = vmatprep.subr.mxu0 0.0
  %2382 = vmatpush1.msra.mxu0 0.0
  %2383 = vmatprep.subr.mxu0 0.0
  %2384 = vmatpush1.msra.mxu0 0.0
  %2385 = vmatprep.subr.mxu0 0.0
  %2386 = vmatpush1.msra.mxu0 0.0
  %2387 = vmatprep.subr.mxu0 0.0
  %2388 = vmatpush1.msra.mxu0 0.0
  %2389 = vmatprep.subr.mxu0 0.0
  %2390 = vmatpush1.msra.mxu0 0.0
  %2391 = vmatprep.subr.mxu0 0.0
  %2392 = vmatpush1.msra.mxu0 0.0
  %2393 = vmatprep.subr.mxu0 0.0
  %2394 = vmatpush1.msra.mxu0 0.0
  %2395 = vmatprep.subr.mxu0 0.0
  %2396 = vmatpush1.msra.mxu0 0.0
  %2397 = vmatprep.subr.mxu0 0.0
  %2398 = vmatpush1.msra.mxu0 0.0
  %2399 = vmatprep.subr.mxu0 0.0
  %2400 = vmatpush1.msra.mxu0 0.0
  %2401 = vmatprep.subr.mxu0 0.0
  %2402 = vmatpush1.msra.mxu0 0.0
  %2403 = vmatprep.subr.mxu0 0.0
  %2404 = vmatpush1.msra.mxu0 0.0
  %2405 = vmatprep.subr.mxu0 0.0
  %2406 = vmatpush1.msra.mxu0 0.0
  %2407 = vmatprep.subr.mxu0 0.0
  %2408 = vmatpush1.msra.mxu0 0.0
  %2409 = vmatprep.mubr.f32.mxu0 0.0
  %2410 = vmatmul.mubr.f32.gmra.mrb[0].mxu0 %v2273
  %v2411 = vpop.f32.mrb[0].mxu0
  %v2412 = vadd.f32 %v134, %v2411
  %v2413 = vpop.f32.mrb[0].mxu0
  %2414 = vdwg.mxu0
  %2415 = vmatprep.subr.mxu0 %v74
  %2416 = vmatpush1.msra.mxu0 %v73
  %2417 = vmatprep.subr.mxu0 %v77
  %2418 = vmatpush1.msra.mxu0 %v76
  %2419 = vmatprep.subr.mxu0 %v80
  %2420 = vmatpush1.msra.mxu0 %v79
  %2421 = vmatprep.subr.mxu0 %v83
  %2422 = vmatpush1.msra.mxu0 %v82
  %2423 = vmatprep.subr.mxu0 %v86
  %2424 = vmatpush1.msra.mxu0 %v85
  %2425 = vmatprep.subr.mxu0 %v89
  %2426 = vmatpush1.msra.mxu0 %v88
  %2427 = vmatprep.subr.mxu0 %v92
  %2428 = vmatpush1.msra.mxu0 %v91
  %2429 = vmatprep.subr.mxu0 %v95
  %2430 = vmatpush1.msra.mxu0 %v94
  %2431 = vmatprep.subr.mxu0 %v98
  %2432 = vmatpush1.msra.mxu0 %v97
  %2433 = vmatprep.subr.mxu0 %v101
  %2434 = vmatpush1.msra.mxu0 %v100
  %2435 = vmatprep.subr.mxu0 %v104
  %2436 = vmatpush1.msra.mxu0 %v103
  %2437 = vmatprep.subr.mxu0 %v107
  %2438 = vmatpush1.msra.mxu0 %v106
  %2439 = vmatprep.subr.mxu0 %v110
  %2440 = vmatpush1.msra.mxu0 %v109
  %2441 = vmatprep.subr.mxu0 %v113
  %2442 = vmatpush1.msra.mxu0 %v112
  %2443 = vmatprep.subr.mxu0 %v116
  %2444 = vmatpush1.msra.mxu0 %v115
  %2445 = vmatprep.subr.mxu0 %v119
  %2446 = vmatpush1.msra.mxu0 %v118
  %2447 = vmatprep.subr.mxu0 0.0
  %2448 = vmatpush1.msra.mxu0 0.0
  %2449 = vmatprep.subr.mxu0 0.0
  %2450 = vmatpush1.msra.mxu0 0.0
  %2451 = vmatprep.subr.mxu0 0.0
  %2452 = vmatpush1.msra.mxu0 0.0
  %2453 = vmatprep.subr.mxu0 0.0
  %2454 = vmatpush1.msra.mxu0 0.0
  %2455 = vmatprep.subr.mxu0 0.0
  %2456 = vmatpush1.msra.mxu0 0.0
  %2457 = vmatprep.subr.mxu0 0.0
  %2458 = vmatpush1.msra.mxu0 0.0
  %2459 = vmatprep.subr.mxu0 0.0
  %2460 = vmatpush1.msra.mxu0 0.0
  %2461 = vmatprep.subr.mxu0 0.0
  %2462 = vmatpush1.msra.mxu0 0.0
  %2463 = vmatprep.subr.mxu0 0.0
  %2464 = vmatpush1.msra.mxu0 0.0
  %2465 = vmatprep.subr.mxu0 0.0
  %2466 = vmatpush1.msra.mxu0 0.0
  %2467 = vmatprep.subr.mxu0 0.0
  %2468 = vmatpush1.msra.mxu0 0.0
  %2469 = vmatprep.subr.mxu0 0.0
  %2470 = vmatpush1.msra.mxu0 0.0
  %2471 = vmatprep.subr.mxu0 0.0
  %2472 = vmatpush1.msra.mxu0 0.0
  %2473 = vmatprep.subr.mxu0 0.0
  %2474 = vmatpush1.msra.mxu0 0.0
  %2475 = vmatprep.subr.mxu0 0.0
  %2476 = vmatpush1.msra.mxu0 0.0
  %2477 = vmatprep.subr.mxu0 0.0
  %2478 = vmatpush1.msra.mxu0 0.0
  %2479 = vmatprep.mubr.f32.mxu0 0.0
  %2480 = vmatmul.mubr.f32.gmra.mrb[0].mxu0 %v2269
  %v2481 = vpop.f32.mrb[0].mxu0
  %v2482 = vadd.f32 0.0, %v2481
  %v2483 = vpop.f32.mrb[0].mxu0
  %v2484 = vadd.f32 0.0, %v2483
  %2485 = vdwg.mxu0
  %2486 = vmatprep.subr.mxu0 0.0
  %2487 = vmatpush1.msra.mxu0 %v75
  %2488 = vmatprep.subr.mxu0 0.0
  %2489 = vmatpush1.msra.mxu0 %v78
  %2490 = vmatprep.subr.mxu0 0.0
  %2491 = vmatpush1.msra.mxu0 %v81
  %2492 = vmatprep.subr.mxu0 0.0
  %2493 = vmatpush1.msra.mxu0 %v84
  %2494 = vmatprep.subr.mxu0 0.0
  %2495 = vmatpush1.msra.mxu0 %v87
  %2496 = vmatprep.subr.mxu0 0.0
  %2497 = vmatpush1.msra.mxu0 %v90
  %2498 = vmatprep.subr.mxu0 0.0
  %2499 = vmatpush1.msra.mxu0 %v93
  %2500 = vmatprep.subr.mxu0 0.0
  %2501 = vmatpush1.msra.mxu0 %v96
  %2502 = vmatprep.subr.mxu0 0.0
  %2503 = vmatpush1.msra.mxu0 %v99
  %2504 = vmatprep.subr.mxu0 0.0
  %2505 = vmatpush1.msra.mxu0 %v102
  %2506 = vmatprep.subr.mxu0 0.0
  %2507 = vmatpush1.msra.mxu0 %v105
  %2508 = vmatprep.subr.mxu0 0.0
  %2509 = vmatpush1.msra.mxu0 %v108
  %2510 = vmatprep.subr.mxu0 0.0
  %2511 = vmatpush1.msra.mxu0 %v111
  %2512 = vmatprep.subr.mxu0 0.0
  %2513 = vmatpush1.msra.mxu0 %v114
  %2514 = vmatprep.subr.mxu0 0.0
  %2515 = vmatpush1.msra.mxu0 %v117
  %2516 = vmatprep.subr.mxu0 0.0
  %2517 = vmatpush1.msra.mxu0 %v120
  %2518 = vmatprep.subr.mxu0 0.0
  %2519 = vmatpush1.msra.mxu0 0.0
  %2520 = vmatprep.subr.mxu0 0.0
  %2521 = vmatpush1.msra.mxu0 0.0
  %2522 = vmatprep.subr.mxu0 0.0
  %2523 = vmatpush1.msra.mxu0 0.0
  %2524 = vmatprep.subr.mxu0 0.0
  %2525 = vmatpush1.msra.mxu0 0.0
  %2526 = vmatprep.subr.mxu0 0.0
  %2527 = vmatpush1.msra.mxu0 0.0
  %2528 = vmatprep.subr.mxu0 0.0
  %2529 = vmatpush1.msra.mxu0 0.0
  %2530 = vmatprep.subr.mxu0 0.0
  %2531 = vmatpush1.msra.mxu0 0.0
  %2532 = vmatprep.subr.mxu0 0.0
  %2533 = vmatpush1.msra.mxu0 0.0
  %2534 = vmatprep.subr.mxu0 0.0
  %2535 = vmatpush1.msra.mxu0 0.0
  %2536 = vmatprep.subr.mxu0 0.0
  %2537 = vmatpush1.msra.mxu0 0.0
  %2538 = vmatprep.subr.mxu0 0.0
  %2539 = vmatpush1.msra.mxu0 0.0
  %2540 = vmatprep.subr.mxu0 0.0
  %2541 = vmatpush1.msra.mxu0 0.0
  %2542 = vmatprep.subr.mxu0 0.0
  %2543 = vmatpush1.msra.mxu0 0.0
  %2544 = vmatprep.subr.mxu0 0.0
  %2545 = vmatpush1.msra.mxu0 0.0
  %2546 = vmatprep.subr.mxu0 0.0
  %2547 = vmatpush1.msra.mxu0 0.0
  %2548 = vmatprep.subr.mxu0 0.0
  %2549 = vmatpush1.msra.mxu0 0.0
  %2550 = vmatprep.mubr.f32.mxu0 0.0
  %2551 = vmatmul.mubr.f32.gmra.mrb[0].mxu0 %v2269
  %v2552 = vpop.f32.mrb[0].mxu0
  %v2553 = vadd.f32 0.0, %v2552
  %v2554 = vpop.f32.mrb[0].mxu0
  %2555 = vdwg.mxu0
  %v2556 = vadd.f32 %v2341, %v2482
  %v2557 = vmul.f32 %v2556, 0.5
  %v2558 = vtanh.pop %v2557
  %v2559 = vmul.f32 %v2558, 0.5
  %v2560 = vadd.f32 %v2559, 0.5
  %v2561 = vadd.f32 %v2343, %v2484
  %v2562 = vmul.f32 %v2561, 0.5
  %v2563 = vtanh.pop %v2562
  %v2564 = vmul.f32 %v2563, 0.5
  %v2565 = vadd.f32 %v2564, 0.5
  %v2566 = vadd.f32 %v2553, %v143
  %v2567 = vmul.f32 %v2560, %v2566
  %v2568 = vadd.f32 %v2412, %v2567
  %v2569 = vtanh.pop %v2568
  %v2570 = vsub.f32 1.0, %v2565
  %v2571 = vmul.f32 %v2570, %v2569
  %v2572 = vmul.f32 %v2565, %v2269
  %v2573 = vadd.f32 %v2571, %v2572
  %s2574 = scalar_lea.vmem %s5, 56
  %2575 = vst [vmem:[%s2574] sm:$0xff] %v2573
  %2576 = vst [vmem:[#allocation2] sm:$0xff] %v2573
  // Predicated region
  $region26: #{encoder_forward.2} parent=0 // pred_check
    _
  $region27: #{encoder_forward.2} parent=0 // pred_check_branch
    %2578 = sbr.rel (0) target = $region29
  $region28: #{encoder_forward.2} parent=0 // pred_region
    _
  $region29: #{encoder_forward.2} parent=0 // pred_fallthru
    _
  // Predicated region
  $region30: #{encoder_forward.2} parent=0 // pred_check
    _
  $region31: #{encoder_forward.2} parent=0 // pred_check_branch
    %2580 = sbr.rel (0) target = $region33
  $region32: #{encoder_forward.2} parent=0 // pred_region
    _
  $region33: #{encoder_forward.2} parent=0 // pred_fallthru
    _

</llo_original>
